<compile_context>
chip_gen: v5e
topology: v5e:2x2
jax: 0.10.0
libtpu: 0.0.40
codegen_flags: <defaults>
</compile_context>

<pallas_src>
import math

import numpy as np
import jax
import jax.numpy as jnp
from jax.experimental import pallas as pl
from jax.experimental.pallas import tpu as pltpu

EPS = 1e-5
K1_PAD = 32  # layer-1 im2col K = 3*3*3 = 27, zero-padded to 32


# ----------------------------------------------------------------------------
# The single fused kernel (one batch element per grid step)
# ----------------------------------------------------------------------------
def _disc_kernel(p1_ref, w1_ref, s1_ref,
                 g2_ref, w2_ref, s2_ref,
                 g3_ref, pad3_ref, w3_ref, s3_ref,
                 g4_ref, w4_ref, s4_ref,
                 wfc_ref, bfc_ref, out_ref):
    f32 = jnp.float32
    bf16 = jnp.bfloat16

    def leaky(x, slope):
        return jnp.where(x >= 0, x, slope * x)

    # ---- Block 1: Conv2d(3->32, k3, s2, p1) + LeakyReLU(0.2) ----------------
    # TODO(synk): nn.Dropout(0.25) layers are stochastic; identity in eval mode.
    a1 = jnp.dot(p1_ref[0], w1_ref[...], preferred_element_type=f32)   # (256,32)
    a1 = leaky(a1 + s1_ref[...], 0.2).astype(bf16)

    # ---- Block 2: Conv2d(32->64, s2, p1) [+ZeroPad2d] + BN + LeakyReLU(0.25) -
    acc = jnp.zeros((64, 64), f32)
    for t in range(9):
        tap = jnp.dot(g2_ref[t], a1, preferred_element_type=f32)       # (64,32)
        acc = acc + jnp.dot(tap.astype(bf16), w2_ref[t],
                            preferred_element_type=f32)
    a2 = leaky(acc + s2_ref[...], 0.25).astype(bf16)                   # (64,64)

    # ---- Block 3: Conv2d(64->128, s2, p1) + BN + LeakyReLU(0.2) -------------
    # Input "image" is the 9x9 ZeroPad2d'ed grid; pad3 injects the constant
    # leaky(BN(0)) value of the padded right column / bottom row.
    acc = jnp.zeros((25, 128), f32)
    for t in range(9):
        tap = jnp.dot(g3_ref[t], a2, preferred_element_type=f32) + pad3_ref[t]
        acc = acc + jnp.dot(tap.astype(bf16), w3_ref[t],
                            preferred_element_type=f32)
    a3 = leaky(acc + s3_ref[...], 0.2).astype(bf16)                    # (25,128)

    # ---- Block 4: Conv2d(128->256, s1, p1) + BN + LeakyReLU(0.25) -----------
    acc = jnp.zeros((25, 256), f32)
    for t in range(9):
        tap = jnp.dot(g4_ref[t], a3, preferred_element_type=f32)       # (25,128)
        acc = acc + jnp.dot(tap.astype(bf16), w4_ref[t],
                            preferred_element_type=f32)
    a4 = leaky(acc + s4_ref[...], 0.25)                                # (25,256) f32

    # ---- Head: Flatten + Linear(6400 -> 1) + Sigmoid (VPU reduction) --------
    prod = a4 * wfc_ref[...]                                           # (25,256)
    logit = jnp.sum(prod, axis=1, keepdims=True)                       # lane reduce
    logit = jnp.sum(logit, axis=0, keepdims=True) + bfc_ref[...]       # (1,1)
    e = jnp.exp(-jnp.abs(logit))                                       # EUP exp
    sig = jnp.where(logit >= 0, 1.0 / (1.0 + e), e / (1.0 + e))        # stable sigmoid
    out_ref[...] = sig.reshape(1, 1, 1).astype(out_ref.dtype)


# ----------------------------------------------------------------------------
# One-time (host-side) constant construction: gather matrices per conv tap
# ----------------------------------------------------------------------------
def _build_taps(h_img, w_img, h_out, w_out, stride, src_h, src_w):
    """G[t]: (h_out*w_out, src_h*src_w) selects tap t's input rows; E[t] flags
    output positions whose tap lands on ZeroPad2d-added cells (inside the
    image but outside the top-left src_h x src_w region)."""
    g = np.zeros((9, h_out * w_out, src_h * src_w), np.float32)
    e = np.zeros((9, h_out * w_out, 1), np.float32)
    for kh in range(3):
        for kw in range(3):
            t = kh * 3 + kw
            for ho in range(h_out):
                for wo in range(w_out):
                    r = stride * ho + kh - 1
                    c = stride * wo + kw - 1
                    if 0 <= r < h_img and 0 <= c < w_img:
                        o = ho * w_out + wo
                        if r < src_h and c < src_w:
                            g[t, o, r * src_w + c] = 1.0
                        else:
                            e[t, o, 0] = 1.0
    return g, e


def _fold_bn(bn, eps=EPS):
    scale = bn["gamma"] / jnp.sqrt(bn["var"] + eps)
    shift = bn["beta"] - bn["mean"] * scale
    return scale, shift


def _taps_from_torch_weight(w_oihw):
    cout, cin, kh, kw = w_oihw.shape
    return jnp.transpose(w_oihw, (2, 3, 1, 0)).reshape(kh * kw, cin, cout)


def prepare_params(p):
    """Hoisted weight packing: BN/bias folding, bf16 casts, gather matrices."""
    bf16, f32 = jnp.bfloat16, jnp.float32

    # Layer 1: single (K1_PAD, 32) matrix in (kh, kw, cin) row order.
    w1 = _taps_from_torch_weight(p["w1"]).reshape(27, 32)
    w1 = jnp.pad(w1, ((0, K1_PAD - 27), (0, 0)))

    # Layers 2-4: per-tap (Cin, Cout) weights with BatchNorm folded in.
    scale2, shift2 = _fold_bn(p["bn2"])
    w2 = _taps_from_torch_weight(p["w2"]) * scale2[None, None, :]
    s2 = p["b2"] * scale2 + shift2

    scale3, shift3 = _fold_bn(p["bn3"])
    w3 = _taps_from_torch_weight(p["w3"]) * scale3[None, None, :]
    s3 = p["b3"] * scale3 + shift3

    scale4, shift4 = _fold_bn(p["bn4"])
    w4 = _taps_from_torch_weight(p["w4"]) * scale4[None, None, :]
    s4 = p["b4"] * scale4 + shift4

    # Constant gather matrices for convs 2-4.
    g2, _ = _build_taps(16, 16, 8, 8, 2, 16, 16)
    g3, e3 = _build_taps(9, 9, 5, 5, 2, 8, 8)   # 9x9 = 8x8 act + ZeroPad2d row/col
    g4, _ = _build_taps(5, 5, 5, 5, 1, 5, 5)

    # ZeroPad2d cells sit before BN+LeakyReLU -> value = leaky_0.25(BN(0)),
    # i.e. leaky(beta - mean*scale) (conv bias NOT included).
    padval2 = jnp.where(shift2 >= 0, shift2, 0.25 * shift2)            # (64,)
    pad3 = jnp.asarray(e3) * padval2[None, None, :]                    # (9,25,64)

    # Linear(256*5*5, 1): permute from torch (C,H,W) flatten order to (H,W,C).
    wfc = p["wfc"].reshape(256, 5, 5).transpose(1, 2, 0).reshape(25, 256)

    return {
        "w1": w1.astype(bf16), "s1": p["b1"].reshape(1, 32).astype(f32),
        "g2": jnp.asarray(g2, bf16), "w2": w2.astype(bf16),
        "s2": s2.reshape(1, 64).astype(f32),
        "g3": jnp.asarray(g3, bf16), "pad3": pad3.astype(f32),
        "w3": w3.astype(bf16), "s3": s3.reshape(1, 128).astype(f32),
        "g4": jnp.asarray(g4, bf16), "w4": w4.astype(bf16),
        "s4": s4.reshape(1, 256).astype(f32),
        "wfc": wfc.astype(f32), "bfc": p["bfc"].reshape(1, 1).astype(f32),
    }


# ----------------------------------------------------------------------------
# Forward: layer-1 im2col in XLA (input prep only) + one fused pallas_call
# ----------------------------------------------------------------------------
def _const_spec(shape):
    return pl.BlockSpec(shape, lambda i: (0,) * len(shape))


def discriminator_forward(img_nchw, prep):
    n = img_nchw.shape[0]
    x = jnp.transpose(img_nchw, (0, 2, 3, 1)).astype(jnp.float32)      # NHWC
    xp = jnp.pad(x, ((0, 0), (1, 1), (1, 1), (0, 0)))                  # (n,34,34,3)
    cols = [xp[:, kh:kh + 32:2, kw:kw + 32:2, :]
            for kh in range(3) for kw in range(3)]
    p1 = jnp.concatenate(cols, axis=-1).reshape(n, 256, 27)            # (n,256,27)
    p1 = jnp.pad(p1, ((0, 0), (0, 0), (0, K1_PAD - 27))).astype(jnp.bfloat16)

    out = pl.pallas_call(
        _disc_kernel,
        out_shape=jax.ShapeDtypeStruct((n, 1, 1), jnp.float32),
        grid=(n,),
        in_specs=[
            pl.BlockSpec((1, 256, K1_PAD), lambda i: (i, 0, 0)),
            _const_spec(prep["w1"].shape), _const_spec(prep["s1"].shape),
            _const_spec(prep["g2"].shape), _const_spec(prep["w2"].shape),
            _const_spec(prep["s2"].shape),
            _const_spec(prep["g3"].shape), _const_spec(prep["pad3"].shape),
            _const_spec(prep["w3"].shape), _const_spec(prep["s3"].shape),
            _const_spec(prep["g4"].shape), _const_spec(prep["w4"].shape),
            _const_spec(prep["s4"].shape),
            _const_spec(prep["wfc"].shape), _const_spec(prep["bfc"].shape),
        ],
        out_specs=pl.BlockSpec((1, 1, 1), lambda i: (i, 0, 0)),
        compiler_params=pltpu.CompilerParams(
            dimension_semantics=("parallel",)),
    )(p1, prep["w1"], prep["s1"],
      prep["g2"], prep["w2"], prep["s2"],
      prep["g3"], prep["pad3"], prep["w3"], prep["s3"],
      prep["g4"], prep["w4"], prep["s4"],
      prep["wfc"], prep["bfc"])
    return out.reshape(n, 1)


# ----------------------------------------------------------------------------
# Deterministic parameter construction (fan-in uniform like torch defaults)
# ----------------------------------------------------------------------------
def make_params(key):
    def conv_init(key, cout, cin, k):
        k1, k2 = jax.random.split(key)
        bound = 1.0 / math.sqrt(cin * k * k)
        w = jax.random.uniform(k1, (cout, cin, k, k), jnp.float32, -bound, bound)
        b = jax.random.uniform(k2, (cout,), jnp.float32, -bound, bound)
        return w, b

    def bn_init(key, c):
        k1, k2 = jax.random.split(key)
        return {
            "gamma": jax.random.uniform(k1, (c,), jnp.float32, 0.9, 1.1),
            "beta": 0.01 * jax.random.normal(k2, (c,), jnp.float32),
            "mean": jnp.zeros((c,), jnp.float32),
            "var": jnp.ones((c,), jnp.float32),
        }

    keys = jax.random.split(key, 10)
    w1, b1 = conv_init(keys[0], 32, 3, 3)
    w2, b2 = conv_init(keys[1], 64, 32, 3)
    w3, b3 = conv_init(keys[2], 128, 64, 3)
    w4, b4 = conv_init(keys[3], 256, 128, 3)
    bound_fc = 1.0 / math.sqrt(256 * 5 * 5)
    wfc = jax.random.uniform(keys[4], (256 * 5 * 5, 1), jnp.float32,
                             -bound_fc, bound_fc)
    bfc = jax.random.uniform(keys[5], (1,), jnp.float32, -bound_fc, bound_fc)
    return {
        "w1": w1, "b1": b1,
        "w2": w2, "b2": b2, "bn2": bn_init(keys[6], 64),
        "w3": w3, "b3": b3, "bn3": bn_init(keys[7], 128),
        "w4": w4, "b4": b4, "bn4": bn_init(keys[8], 256),
        "wfc": wfc, "bfc": bfc,
    }


if __name__ == "__main__":
    key = jax.random.PRNGKey(0)
    k_img, k_par = jax.random.split(key)
    # Linear(256*5*5, 1) forces 32x32x3 inputs; batch kept small.
    img = jax.random.normal(k_img, (2, 3, 32, 32), jnp.float32)
    params = make_params(k_par)
    prep = prepare_params(params)          # one-time weight packing (hoisted)

    fwd = jax.jit(discriminator_forward)
    out = jax.block_until_ready(fwd(img, prep))

    assert out.shape == (2, 1), out.shape
    assert bool(jnp.all(jnp.isfinite(out)))
    assert bool(jnp.all((out >= 0.0) & (out <= 1.0)))
    print("KERNEL_OK")
</pallas_src>

<mosaic_0001>
module attributes {stable_mosaic.version = 11 : i64} {
  func.func @_disc_kernel(%arg0: i32, %arg1: memref<1x256x32xbf16, #tpu.memory_space<vmem>>, %arg2: memref<32x32xbf16, #tpu.memory_space<vmem>>, %arg3: memref<1x32xf32, #tpu.memory_space<vmem>>, %arg4: memref<9x64x256xbf16, #tpu.memory_space<vmem>>, %arg5: memref<9x32x64xbf16, #tpu.memory_space<vmem>>, %arg6: memref<1x64xf32, #tpu.memory_space<vmem>>, %arg7: memref<9x25x64xbf16, #tpu.memory_space<vmem>>, %arg8: memref<9x25x64xf32, #tpu.memory_space<vmem>>, %arg9: memref<9x64x128xbf16, #tpu.memory_space<vmem>>, %arg10: memref<1x128xf32, #tpu.memory_space<vmem>>, %arg11: memref<9x25x25xbf16, #tpu.memory_space<vmem>>, %arg12: memref<9x128x256xbf16, #tpu.memory_space<vmem>>, %arg13: memref<1x256xf32, #tpu.memory_space<vmem>>, %arg14: memref<25x256xf32, #tpu.memory_space<vmem>>, %arg15: memref<1x1xf32, #tpu.memory_space<vmem>>, %arg16: memref<1x1x1xf32, #tpu.memory_space<vmem>>) attributes {dimension_semantics = [#tpu.dimension_semantics<parallel>], iteration_bounds = array<i64: 2>, scalar_prefetch = 0 : i64, scratch_operands = 0 : i64, tpu.core_type = #tpu.core_type<tc>, window_params = [{transform_indices = @transform_0, window_bounds = array<i64: 1, 256, 32>}, {pipeline_mode = #tpu.pipeline_mode<synchronous>, transform_indices = @transform_1, window_bounds = array<i64: 32, 32>}, {pipeline_mode = #tpu.pipeline_mode<synchronous>, transform_indices = @transform_2, window_bounds = array<i64: 1, 32>}, {pipeline_mode = #tpu.pipeline_mode<synchronous>, transform_indices = @transform_3, window_bounds = array<i64: 9, 64, 256>}, {pipeline_mode = #tpu.pipeline_mode<synchronous>, transform_indices = @transform_4, window_bounds = array<i64: 9, 32, 64>}, {pipeline_mode = #tpu.pipeline_mode<synchronous>, transform_indices = @transform_5, window_bounds = array<i64: 1, 64>}, {pipeline_mode = #tpu.pipeline_mode<synchronous>, transform_indices = @transform_6, window_bounds = array<i64: 9, 25, 64>}, {pipeline_mode = #tpu.pipeline_mode<synchronous>, transform_indices = @transform_7, window_bounds = array<i64: 9, 25, 64>}, {pipeline_mode = #tpu.pipeline_mode<synchronous>, transform_indices = @transform_8, window_bounds = array<i64: 9, 64, 128>}, {pipeline_mode = #tpu.pipeline_mode<synchronous>, transform_indices = @transform_9, window_bounds = array<i64: 1, 128>}, {pipeline_mode = #tpu.pipeline_mode<synchronous>, transform_indices = @transform_10, window_bounds = array<i64: 9, 25, 25>}, {pipeline_mode = #tpu.pipeline_mode<synchronous>, transform_indices = @transform_11, window_bounds = array<i64: 9, 128, 256>}, {pipeline_mode = #tpu.pipeline_mode<synchronous>, transform_indices = @transform_12, window_bounds = array<i64: 1, 256>}, {pipeline_mode = #tpu.pipeline_mode<synchronous>, transform_indices = @transform_13, window_bounds = array<i64: 25, 256>}, {pipeline_mode = #tpu.pipeline_mode<synchronous>, transform_indices = @transform_14, window_bounds = array<i64: 1, 1>}, {transform_indices = @transform_15, window_bounds = array<i64: 1, 1, 1>}]} {
    %c0 = arith.constant 0 : index
    %c0_0 = arith.constant 0 : index
    %c0_1 = arith.constant 0 : index
    %0 = vector.load %arg1[%c0, %c0_0, %c0_1] : memref<1x256x32xbf16, #tpu.memory_space<vmem>>, vector<1x256x32xbf16>
    %1 = vector.shape_cast %0 : vector<1x256x32xbf16> to vector<256x32xbf16>
    %c0_2 = arith.constant 0 : index
    %c0_3 = arith.constant 0 : index
    %2 = vector.load %arg2[%c0_2, %c0_3] : memref<32x32xbf16, #tpu.memory_space<vmem>>, vector<32x32xbf16>
    %cst = arith.constant dense<0.000000e+00> : vector<256x32xf32>
    %3 = tpu.matmul %1, %2, %cst {dimension_numbers = #tpu.dot_dimension_numbers<[1], [0], [0], [1], [0, 0, 1, 1], [], []>} : vector<256x32xbf16>, vector<32x32xbf16>, vector<256x32xf32> -> vector<256x32xf32>
    %c0_4 = arith.constant 0 : index
    %c0_5 = arith.constant 0 : index
    %4 = vector.load %arg3[%c0_4, %c0_5] : memref<1x32xf32, #tpu.memory_space<vmem>>, vector<1x32xf32>
    %5 = vector.broadcast %4 : vector<1x32xf32> to vector<256x32xf32>
    %6 = arith.addf %3, %5 : vector<256x32xf32>
    %cst_6 = arith.constant 0.000000e+00 : f32
    %7 = vector.broadcast %cst_6 : f32 to vector<256x32xf32>
    %8 = arith.cmpf oge, %6, %7 : vector<256x32xf32>
    %cst_7 = arith.constant 2.000000e-01 : f32
    %9 = vector.broadcast %cst_7 : f32 to vector<256x32xf32>
    %10 = arith.mulf %9, %6 : vector<256x32xf32>
    %11 = arith.select %8, %6, %10 : vector<256x32xi1>, vector<256x32xf32>
    %12 = arith.truncf %11 : vector<256x32xf32> to vector<256x32xbf16>
    %cst_8 = arith.constant 0.000000e+00 : f32
    %13 = vector.broadcast %cst_8 : f32 to vector<64x64xf32>
    %c0_9 = arith.constant 0 : index
    %c0_10 = arith.constant 0 : index
    %c0_11 = arith.constant 0 : index
    %14 = vector.load %arg4[%c0_9, %c0_10, %c0_11] : memref<9x64x256xbf16, #tpu.memory_space<vmem>>, vector<1x64x256xbf16>
    %15 = vector.shape_cast %14 : vector<1x64x256xbf16> to vector<64x256xbf16>
    %cst_12 = arith.constant dense<0.000000e+00> : vector<64x32xf32>
    %16 = tpu.matmul %15, %12, %cst_12 {dimension_numbers = #tpu.dot_dimension_numbers<[1], [0], [0], [1], [0, 0, 1, 1], [], []>} : vector<64x256xbf16>, vector<256x32xbf16>, vector<64x32xf32> -> vector<64x32xf32>
    %17 = arith.truncf %16 : vector<64x32xf32> to vector<64x32xbf16>
    %c0_13 = arith.constant 0 : index
    %c0_14 = arith.constant 0 : index
    %c0_15 = arith.constant 0 : index
    %18 = vector.load %arg5[%c0_13, %c0_14, %c0_15] : memref<9x32x64xbf16, #tpu.memory_space<vmem>>, vector<1x32x64xbf16>
    %19 = vector.shape_cast %18 : vector<1x32x64xbf16> to vector<32x64xbf16>
    %cst_16 = arith.constant dense<0.000000e+00> : vector<64x64xf32>
    %20 = tpu.matmul %17, %19, %cst_16 {dimension_numbers = #tpu.dot_dimension_numbers<[1], [0], [0], [1], [0, 0, 1, 1], [], []>} : vector<64x32xbf16>, vector<32x64xbf16>, vector<64x64xf32> -> vector<64x64xf32>
    %21 = arith.addf %13, %20 : vector<64x64xf32>
    %c1 = arith.constant 1 : index
    %c0_17 = arith.constant 0 : index
    %c0_18 = arith.constant 0 : index
    %22 = vector.load %arg4[%c1, %c0_17, %c0_18] : memref<9x64x256xbf16, #tpu.memory_space<vmem>>, vector<1x64x256xbf16>
    %23 = vector.shape_cast %22 : vector<1x64x256xbf16> to vector<64x256xbf16>
    %cst_19 = arith.constant dense<0.000000e+00> : vector<64x32xf32>
    %24 = tpu.matmul %23, %12, %cst_19 {dimension_numbers = #tpu.dot_dimension_numbers<[1], [0], [0], [1], [0, 0, 1, 1], [], []>} : vector<64x256xbf16>, vector<256x32xbf16>, vector<64x32xf32> -> vector<64x32xf32>
    %25 = arith.truncf %24 : vector<64x32xf32> to vector<64x32xbf16>
    %c1_20 = arith.constant 1 : index
    %c0_21 = arith.constant 0 : index
    %c0_22 = arith.constant 0 : index
    %26 = vector.load %arg5[%c1_20, %c0_21, %c0_22] : memref<9x32x64xbf16, #tpu.memory_space<vmem>>, vector<1x32x64xbf16>
    %27 = vector.shape_cast %26 : vector<1x32x64xbf16> to vector<32x64xbf16>
    %cst_23 = arith.constant dense<0.000000e+00> : vector<64x64xf32>
    %28 = tpu.matmul %25, %27, %cst_23 {dimension_numbers = #tpu.dot_dimension_numbers<[1], [0], [0], [1], [0, 0, 1, 1], [], []>} : vector<64x32xbf16>, vector<32x64xbf16>, vector<64x64xf32> -> vector<64x64xf32>
    %29 = arith.addf %21, %28 : vector<64x64xf32>
    %c2 = arith.constant 2 : index
    %c0_24 = arith.constant 0 : index
    %c0_25 = arith.constant 0 : index
    %30 = vector.load %arg4[%c2, %c0_24, %c0_25] : memref<9x64x256xbf16, #tpu.memory_space<vmem>>, vector<1x64x256xbf16>
    %31 = vector.shape_cast %30 : vector<1x64x256xbf16> to vector<64x256xbf16>
    %cst_26 = arith.constant dense<0.000000e+00> : vector<64x32xf32>
    %32 = tpu.matmul %31, %12, %cst_26 {dimension_numbers = #tpu.dot_dimension_numbers<[1], [0], [0], [1], [0, 0, 1, 1], [], []>} : vector<64x256xbf16>, vector<256x32xbf16>, vector<64x32xf32> -> vector<64x32xf32>
    %33 = arith.truncf %32 : vector<64x32xf32> to vector<64x32xbf16>
    %c2_27 = arith.constant 2 : index
    %c0_28 = arith.constant 0 : index
    %c0_29 = arith.constant 0 : index
    %34 = vector.load %arg5[%c2_27, %c0_28, %c0_29] : memref<9x32x64xbf16, #tpu.memory_space<vmem>>, vector<1x32x64xbf16>
    %35 = vector.shape_cast %34 : vector<1x32x64xbf16> to vector<32x64xbf16>
    %cst_30 = arith.constant dense<0.000000e+00> : vector<64x64xf32>
    %36 = tpu.matmul %33, %35, %cst_30 {dimension_numbers = #tpu.dot_dimension_numbers<[1], [0], [0], [1], [0, 0, 1, 1], [], []>} : vector<64x32xbf16>, vector<32x64xbf16>, vector<64x64xf32> -> vector<64x64xf32>
    %37 = arith.addf %29, %36 : vector<64x64xf32>
    %c3 = arith.constant 3 : index
    %c0_31 = arith.constant 0 : index
    %c0_32 = arith.constant 0 : index
    %38 = vector.load %arg4[%c3, %c0_31, %c0_32] : memref<9x64x256xbf16, #tpu.memory_space<vmem>>, vector<1x64x256xbf16>
    %39 = vector.shape_cast %38 : vector<1x64x256xbf16> to vector<64x256xbf16>
    %cst_33 = arith.constant dense<0.000000e+00> : vector<64x32xf32>
    %40 = tpu.matmul %39, %12, %cst_33 {dimension_numbers = #tpu.dot_dimension_numbers<[1], [0], [0], [1], [0, 0, 1, 1], [], []>} : vector<64x256xbf16>, vector<256x32xbf16>, vector<64x32xf32> -> vector<64x32xf32>
    %41 = arith.truncf %40 : vector<64x32xf32> to vector<64x32xbf16>
    %c3_34 = arith.constant 3 : index
    %c0_35 = arith.constant 0 : index
    %c0_36 = arith.constant 0 : index
    %42 = vector.load %arg5[%c3_34, %c0_35, %c0_36] : memref<9x32x64xbf16, #tpu.memory_space<vmem>>, vector<1x32x64xbf16>
    %43 = vector.shape_cast %42 : vector<1x32x64xbf16> to vector<32x64xbf16>
    %cst_37 = arith.constant dense<0.000000e+00> : vector<64x64xf32>
    %44 = tpu.matmul %41, %43, %cst_37 {dimension_numbers = #tpu.dot_dimension_numbers<[1], [0], [0], [1], [0, 0, 1, 1], [], []>} : vector<64x32xbf16>, vector<32x64xbf16>, vector<64x64xf32> -> vector<64x64xf32>
    %45 = arith.addf %37, %44 : vector<64x64xf32>
    %c4 = arith.constant 4 : index
    %c0_38 = arith.constant 0 : index
    %c0_39 = arith.constant 0 : index
    %46 = vector.load %arg4[%c4, %c0_38, %c0_39] : memref<9x64x256xbf16, #tpu.memory_space<vmem>>, vector<1x64x256xbf16>
    %47 = vector.shape_cast %46 : vector<1x64x256xbf16> to vector<64x256xbf16>
    %cst_40 = arith.constant dense<0.000000e+00> : vector<64x32xf32>
    %48 = tpu.matmul %47, %12, %cst_40 {dimension_numbers = #tpu.dot_dimension_numbers<[1], [0], [0], [1], [0, 0, 1, 1], [], []>} : vector<64x256xbf16>, vector<256x32xbf16>, vector<64x32xf32> -> vector<64x32xf32>
    %49 = arith.truncf %48 : vector<64x32xf32> to vector<64x32xbf16>
    %c4_41 = arith.constant 4 : index
    %c0_42 = arith.constant 0 : index
    %c0_43 = arith.constant 0 : index
    %50 = vector.load %arg5[%c4_41, %c0_42, %c0_43] : memref<9x32x64xbf16, #tpu.memory_space<vmem>>, vector<1x32x64xbf16>
    %51 = vector.shape_cast %50 : vector<1x32x64xbf16> to vector<32x64xbf16>
    %cst_44 = arith.constant dense<0.000000e+00> : vector<64x64xf32>
    %52 = tpu.matmul %49, %51, %cst_44 {dimension_numbers = #tpu.dot_dimension_numbers<[1], [0], [0], [1], [0, 0, 1, 1], [], []>} : vector<64x32xbf16>, vector<32x64xbf16>, vector<64x64xf32> -> vector<64x64xf32>
    %53 = arith.addf %45, %52 : vector<64x64xf32>
    %c5 = arith.constant 5 : index
    %c0_45 = arith.constant 0 : index
    %c0_46 = arith.constant 0 : index
    %54 = vector.load %arg4[%c5, %c0_45, %c0_46] : memref<9x64x256xbf16, #tpu.memory_space<vmem>>, vector<1x64x256xbf16>
    %55 = vector.shape_cast %54 : vector<1x64x256xbf16> to vector<64x256xbf16>
    %cst_47 = arith.constant dense<0.000000e+00> : vector<64x32xf32>
    %56 = tpu.matmul %55, %12, %cst_47 {dimension_numbers = #tpu.dot_dimension_numbers<[1], [0], [0], [1], [0, 0, 1, 1], [], []>} : vector<64x256xbf16>, vector<256x32xbf16>, vector<64x32xf32> -> vector<64x32xf32>
    %57 = arith.truncf %56 : vector<64x32xf32> to vector<64x32xbf16>
    %c5_48 = arith.constant 5 : index
    %c0_49 = arith.constant 0 : index
    %c0_50 = arith.constant 0 : index
    %58 = vector.load %arg5[%c5_48, %c0_49, %c0_50] : memref<9x32x64xbf16, #tpu.memory_space<vmem>>, vector<1x32x64xbf16>
    %59 = vector.shape_cast %58 : vector<1x32x64xbf16> to vector<32x64xbf16>
    %cst_51 = arith.constant dense<0.000000e+00> : vector<64x64xf32>
    %60 = tpu.matmul %57, %59, %cst_51 {dimension_numbers = #tpu.dot_dimension_numbers<[1], [0], [0], [1], [0, 0, 1, 1], [], []>} : vector<64x32xbf16>, vector<32x64xbf16>, vector<64x64xf32> -> vector<64x64xf32>
    %61 = arith.addf %53, %60 : vector<64x64xf32>
    %c6 = arith.constant 6 : index
    %c0_52 = arith.constant 0 : index
    %c0_53 = arith.constant 0 : index
    %62 = vector.load %arg4[%c6, %c0_52, %c0_53] : memref<9x64x256xbf16, #tpu.memory_space<vmem>>, vector<1x64x256xbf16>
    %63 = vector.shape_cast %62 : vector<1x64x256xbf16> to vector<64x256xbf16>
    %cst_54 = arith.constant dense<0.000000e+00> : vector<64x32xf32>
    %64 = tpu.matmul %63, %12, %cst_54 {dimension_numbers = #tpu.dot_dimension_numbers<[1], [0], [0], [1], [0, 0, 1, 1], [], []>} : vector<64x256xbf16>, vector<256x32xbf16>, vector<64x32xf32> -> vector<64x32xf32>
    %65 = arith.truncf %64 : vector<64x32xf32> to vector<64x32xbf16>
    %c6_55 = arith.constant 6 : index
    %c0_56 = arith.constant 0 : index
    %c0_57 = arith.constant 0 : index
    %66 = vector.load %arg5[%c6_55, %c0_56, %c0_57] : memref<9x32x64xbf16, #tpu.memory_space<vmem>>, vector<1x32x64xbf16>
    %67 = vector.shape_cast %66 : vector<1x32x64xbf16> to vector<32x64xbf16>
    %cst_58 = arith.constant dense<0.000000e+00> : vector<64x64xf32>
    %68 = tpu.matmul %65, %67, %cst_58 {dimension_numbers = #tpu.dot_dimension_numbers<[1], [0], [0], [1], [0, 0, 1, 1], [], []>} : vector<64x32xbf16>, vector<32x64xbf16>, vector<64x64xf32> -> vector<64x64xf32>
    %69 = arith.addf %61, %68 : vector<64x64xf32>
    %c7 = arith.constant 7 : index
    %c0_59 = arith.constant 0 : index
    %c0_60 = arith.constant 0 : index
    %70 = vector.load %arg4[%c7, %c0_59, %c0_60] : memref<9x64x256xbf16, #tpu.memory_space<vmem>>, vector<1x64x256xbf16>
    %71 = vector.shape_cast %70 : vector<1x64x256xbf16> to vector<64x256xbf16>
    %cst_61 = arith.constant dense<0.000000e+00> : vector<64x32xf32>
    %72 = tpu.matmul %71, %12, %cst_61 {dimension_numbers = #tpu.dot_dimension_numbers<[1], [0], [0], [1], [0, 0, 1, 1], [], []>} : vector<64x256xbf16>, vector<256x32xbf16>, vector<64x32xf32> -> vector<64x32xf32>
    %73 = arith.truncf %72 : vector<64x32xf32> to vector<64x32xbf16>
    %c7_62 = arith.constant 7 : index
    %c0_63 = arith.constant 0 : index
    %c0_64 = arith.constant 0 : index
    %74 = vector.load %arg5[%c7_62, %c0_63, %c0_64] : memref<9x32x64xbf16, #tpu.memory_space<vmem>>, vector<1x32x64xbf16>
    %75 = vector.shape_cast %74 : vector<1x32x64xbf16> to vector<32x64xbf16>
    %cst_65 = arith.constant dense<0.000000e+00> : vector<64x64xf32>
    %76 = tpu.matmul %73, %75, %cst_65 {dimension_numbers = #tpu.dot_dimension_numbers<[1], [0], [0], [1], [0, 0, 1, 1], [], []>} : vector<64x32xbf16>, vector<32x64xbf16>, vector<64x64xf32> -> vector<64x64xf32>
    %77 = arith.addf %69, %76 : vector<64x64xf32>
    %c8 = arith.constant 8 : index
    %c0_66 = arith.constant 0 : index
    %c0_67 = arith.constant 0 : index
    %78 = vector.load %arg4[%c8, %c0_66, %c0_67] : memref<9x64x256xbf16, #tpu.memory_space<vmem>>, vector<1x64x256xbf16>
    %79 = vector.shape_cast %78 : vector<1x64x256xbf16> to vector<64x256xbf16>
    %cst_68 = arith.constant dense<0.000000e+00> : vector<64x32xf32>
    %80 = tpu.matmul %79, %12, %cst_68 {dimension_numbers = #tpu.dot_dimension_numbers<[1], [0], [0], [1], [0, 0, 1, 1], [], []>} : vector<64x256xbf16>, vector<256x32xbf16>, vector<64x32xf32> -> vector<64x32xf32>
    %81 = arith.truncf %80 : vector<64x32xf32> to vector<64x32xbf16>
    %c8_69 = arith.constant 8 : index
    %c0_70 = arith.constant 0 : index
    %c0_71 = arith.constant 0 : index
    %82 = vector.load %arg5[%c8_69, %c0_70, %c0_71] : memref<9x32x64xbf16, #tpu.memory_space<vmem>>, vector<1x32x64xbf16>
    %83 = vector.shape_cast %82 : vector<1x32x64xbf16> to vector<32x64xbf16>
    %cst_72 = arith.constant dense<0.000000e+00> : vector<64x64xf32>
    %84 = tpu.matmul %81, %83, %cst_72 {dimension_numbers = #tpu.dot_dimension_numbers<[1], [0], [0], [1], [0, 0, 1, 1], [], []>} : vector<64x32xbf16>, vector<32x64xbf16>, vector<64x64xf32> -> vector<64x64xf32>
    %85 = arith.addf %77, %84 : vector<64x64xf32>
    %c0_73 = arith.constant 0 : index
    %c0_74 = arith.constant 0 : index
    %86 = vector.load %arg6[%c0_73, %c0_74] : memref<1x64xf32, #tpu.memory_space<vmem>>, vector<1x64xf32>
    %87 = vector.broadcast %86 : vector<1x64xf32> to vector<64x64xf32>
    %88 = arith.addf %85, %87 : vector<64x64xf32>
    %cst_75 = arith.constant 0.000000e+00 : f32
    %89 = vector.broadcast %cst_75 : f32 to vector<64x64xf32>
    %90 = arith.cmpf oge, %88, %89 : vector<64x64xf32>
    %cst_76 = arith.constant 2.500000e-01 : f32
    %91 = vector.broadcast %cst_76 : f32 to vector<64x64xf32>
    %92 = arith.mulf %91, %88 : vector<64x64xf32>
    %93 = arith.select %90, %88, %92 : vector<64x64xi1>, vector<64x64xf32>
    %94 = arith.truncf %93 : vector<64x64xf32> to vector<64x64xbf16>
    %cst_77 = arith.constant 0.000000e+00 : f32
    %95 = vector.broadcast %cst_77 : f32 to vector<25x128xf32>
    %c0_78 = arith.constant 0 : index
    %c0_79 = arith.constant 0 : index
    %c0_80 = arith.constant 0 : index
    %96 = vector.load %arg7[%c0_78, %c0_79, %c0_80] : memref<9x25x64xbf16, #tpu.memory_space<vmem>>, vector<1x25x64xbf16>
    %97 = vector.shape_cast %96 : vector<1x25x64xbf16> to vector<25x64xbf16>
    %cst_81 = arith.constant dense<0.000000e+00> : vector<25x64xf32>
    %98 = tpu.matmul %97, %94, %cst_81 {dimension_numbers = #tpu.dot_dimension_numbers<[1], [0], [0], [1], [0, 0, 1, 1], [], []>} : vector<25x64xbf16>, vector<64x64xbf16>, vector<25x64xf32> -> vector<25x64xf32>
    %c0_82 = arith.constant 0 : index
    %c0_83 = arith.constant 0 : index
    %c0_84 = arith.constant 0 : index
    %99 = vector.load %arg8[%c0_82, %c0_83, %c0_84] : memref<9x25x64xf32, #tpu.memory_space<vmem>>, vector<1x25x64xf32>
    %100 = vector.shape_cast %99 : vector<1x25x64xf32> to vector<25x64xf32>
    %101 = arith.addf %98, %100 : vector<25x64xf32>
    %102 = arith.truncf %101 : vector<25x64xf32> to vector<25x64xbf16>
    %c0_85 = arith.constant 0 : index
    %c0_86 = arith.constant 0 : index
    %c0_87 = arith.constant 0 : index
    %103 = vector.load %arg9[%c0_85, %c0_86, %c0_87] : memref<9x64x128xbf16, #tpu.memory_space<vmem>>, vector<1x64x128xbf16>
    %104 = vector.shape_cast %103 : vector<1x64x128xbf16> to vector<64x128xbf16>
    %cst_88 = arith.constant dense<0.000000e+00> : vector<25x128xf32>
    %105 = tpu.matmul %102, %104, %cst_88 {dimension_numbers = #tpu.dot_dimension_numbers<[1], [0], [0], [1], [0, 0, 1, 1], [], []>} : vector<25x64xbf16>, vector<64x128xbf16>, vector<25x128xf32> -> vector<25x128xf32>
    %106 = arith.addf %95, %105 : vector<25x128xf32>
    %c1_89 = arith.constant 1 : index
    %c0_90 = arith.constant 0 : index
    %c0_91 = arith.constant 0 : index
    %107 = vector.load %arg7[%c1_89, %c0_90, %c0_91] : memref<9x25x64xbf16, #tpu.memory_space<vmem>>, vector<1x25x64xbf16>
    %108 = vector.shape_cast %107 : vector<1x25x64xbf16> to vector<25x64xbf16>
    %cst_92 = arith.constant dense<0.000000e+00> : vector<25x64xf32>
    %109 = tpu.matmul %108, %94, %cst_92 {dimension_numbers = #tpu.dot_dimension_numbers<[1], [0], [0], [1], [0, 0, 1, 1], [], []>} : vector<25x64xbf16>, vector<64x64xbf16>, vector<25x64xf32> -> vector<25x64xf32>
    %c1_93 = arith.constant 1 : index
    %c0_94 = arith.constant 0 : index
    %c0_95 = arith.constant 0 : index
    %110 = vector.load %arg8[%c1_93, %c0_94, %c0_95] : memref<9x25x64xf32, #tpu.memory_space<vmem>>, vector<1x25x64xf32>
    %111 = vector.shape_cast %110 : vector<1x25x64xf32> to vector<25x64xf32>
    %112 = arith.addf %109, %111 : vector<25x64xf32>
    %113 = arith.truncf %112 : vector<25x64xf32> to vector<25x64xbf16>
    %c1_96 = arith.constant 1 : index
    %c0_97 = arith.constant 0 : index
    %c0_98 = arith.constant 0 : index
    %114 = vector.load %arg9[%c1_96, %c0_97, %c0_98] : memref<9x64x128xbf16, #tpu.memory_space<vmem>>, vector<1x64x128xbf16>
    %115 = vector.shape_cast %114 : vector<1x64x128xbf16> to vector<64x128xbf16>
    %cst_99 = arith.constant dense<0.000000e+00> : vector<25x128xf32>
    %116 = tpu.matmul %113, %115, %cst_99 {dimension_numbers = #tpu.dot_dimension_numbers<[1], [0], [0], [1], [0, 0, 1, 1], [], []>} : vector<25x64xbf16>, vector<64x128xbf16>, vector<25x128xf32> -> vector<25x128xf32>
    %117 = arith.addf %106, %116 : vector<25x128xf32>
    %c2_100 = arith.constant 2 : index
    %c0_101 = arith.constant 0 : index
    %c0_102 = arith.constant 0 : index
    %118 = vector.load %arg7[%c2_100, %c0_101, %c0_102] : memref<9x25x64xbf16, #tpu.memory_space<vmem>>, vector<1x25x64xbf16>
    %119 = vector.shape_cast %118 : vector<1x25x64xbf16> to vector<25x64xbf16>
    %cst_103 = arith.constant dense<0.000000e+00> : vector<25x64xf32>
    %120 = tpu.matmul %119, %94, %cst_103 {dimension_numbers = #tpu.dot_dimension_numbers<[1], [0], [0], [1], [0, 0, 1, 1], [], []>} : vector<25x64xbf16>, vector<64x64xbf16>, vector<25x64xf32> -> vector<25x64xf32>
    %c2_104 = arith.constant 2 : index
    %c0_105 = arith.constant 0 : index
    %c0_106 = arith.constant 0 : index
    %121 = vector.load %arg8[%c2_104, %c0_105, %c0_106] : memref<9x25x64xf32, #tpu.memory_space<vmem>>, vector<1x25x64xf32>
    %122 = vector.shape_cast %121 : vector<1x25x64xf32> to vector<25x64xf32>
    %123 = arith.addf %120, %122 : vector<25x64xf32>
    %124 = arith.truncf %123 : vector<25x64xf32> to vector<25x64xbf16>
    %c2_107 = arith.constant 2 : index
    %c0_108 = arith.constant 0 : index
    %c0_109 = arith.constant 0 : index
    %125 = vector.load %arg9[%c2_107, %c0_108, %c0_109] : memref<9x64x128xbf16, #tpu.memory_space<vmem>>, vector<1x64x128xbf16>
    %126 = vector.shape_cast %125 : vector<1x64x128xbf16> to vector<64x128xbf16>
    %cst_110 = arith.constant dense<0.000000e+00> : vector<25x128xf32>
    %127 = tpu.matmul %124, %126, %cst_110 {dimension_numbers = #tpu.dot_dimension_numbers<[1], [0], [0], [1], [0, 0, 1, 1], [], []>} : vector<25x64xbf16>, vector<64x128xbf16>, vector<25x128xf32> -> vector<25x128xf32>
    %128 = arith.addf %117, %127 : vector<25x128xf32>
    %c3_111 = arith.constant 3 : index
    %c0_112 = arith.constant 0 : index
    %c0_113 = arith.constant 0 : index
    %129 = vector.load %arg7[%c3_111, %c0_112, %c0_113] : memref<9x25x64xbf16, #tpu.memory_space<vmem>>, vector<1x25x64xbf16>
    %130 = vector.shape_cast %129 : vector<1x25x64xbf16> to vector<25x64xbf16>
    %cst_114 = arith.constant dense<0.000000e+00> : vector<25x64xf32>
    %131 = tpu.matmul %130, %94, %cst_114 {dimension_numbers = #tpu.dot_dimension_numbers<[1], [0], [0], [1], [0, 0, 1, 1], [], []>} : vector<25x64xbf16>, vector<64x64xbf16>, vector<25x64xf32> -> vector<25x64xf32>
    %c3_115 = arith.constant 3 : index
    %c0_116 = arith.constant 0 : index
    %c0_117 = arith.constant 0 : index
    %132 = vector.load %arg8[%c3_115, %c0_116, %c0_117] : memref<9x25x64xf32, #tpu.memory_space<vmem>>, vector<1x25x64xf32>
    %133 = vector.shape_cast %132 : vector<1x25x64xf32> to vector<25x64xf32>
    %134 = arith.addf %131, %133 : vector<25x64xf32>
    %135 = arith.truncf %134 : vector<25x64xf32> to vector<25x64xbf16>
    %c3_118 = arith.constant 3 : index
    %c0_119 = arith.constant 0 : index
    %c0_120 = arith.constant 0 : index
    %136 = vector.load %arg9[%c3_118, %c0_119, %c0_120] : memref<9x64x128xbf16, #tpu.memory_space<vmem>>, vector<1x64x128xbf16>
    %137 = vector.shape_cast %136 : vector<1x64x128xbf16> to vector<64x128xbf16>
    %cst_121 = arith.constant dense<0.000000e+00> : vector<25x128xf32>
    %138 = tpu.matmul %135, %137, %cst_121 {dimension_numbers = #tpu.dot_dimension_numbers<[1], [0], [0], [1], [0, 0, 1, 1], [], []>} : vector<25x64xbf16>, vector<64x128xbf16>, vector<25x128xf32> -> vector<25x128xf32>
    %139 = arith.addf %128, %138 : vector<25x128xf32>
    %c4_122 = arith.constant 4 : index
    %c0_123 = arith.constant 0 : index
    %c0_124 = arith.constant 0 : index
    %140 = vector.load %arg7[%c4_122, %c0_123, %c0_124] : memref<9x25x64xbf16, #tpu.memory_space<vmem>>, vector<1x25x64xbf16>
    %141 = vector.shape_cast %140 : vector<1x25x64xbf16> to vector<25x64xbf16>
    %cst_125 = arith.constant dense<0.000000e+00> : vector<25x64xf32>
    %142 = tpu.matmul %141, %94, %cst_125 {dimension_numbers = #tpu.dot_dimension_numbers<[1], [0], [0], [1], [0, 0, 1, 1], [], []>} : vector<25x64xbf16>, vector<64x64xbf16>, vector<25x64xf32> -> vector<25x64xf32>
    %c4_126 = arith.constant 4 : index
    %c0_127 = arith.constant 0 : index
    %c0_128 = arith.constant 0 : index
    %143 = vector.load %arg8[%c4_126, %c0_127, %c0_128] : memref<9x25x64xf32, #tpu.memory_space<vmem>>, vector<1x25x64xf32>
    %144 = vector.shape_cast %143 : vector<1x25x64xf32> to vector<25x64xf32>
    %145 = arith.addf %142, %144 : vector<25x64xf32>
    %146 = arith.truncf %145 : vector<25x64xf32> to vector<25x64xbf16>
    %c4_129 = arith.constant 4 : index
    %c0_130 = arith.constant 0 : index
    %c0_131 = arith.constant 0 : index
    %147 = vector.load %arg9[%c4_129, %c0_130, %c0_131] : memref<9x64x128xbf16, #tpu.memory_space<vmem>>, vector<1x64x128xbf16>
    %148 = vector.shape_cast %147 : vector<1x64x128xbf16> to vector<64x128xbf16>
    %cst_132 = arith.constant dense<0.000000e+00> : vector<25x128xf32>
    %149 = tpu.matmul %146, %148, %cst_132 {dimension_numbers = #tpu.dot_dimension_numbers<[1], [0], [0], [1], [0, 0, 1, 1], [], []>} : vector<25x64xbf16>, vector<64x128xbf16>, vector<25x128xf32> -> vector<25x128xf32>
    %150 = arith.addf %139, %149 : vector<25x128xf32>
    %c5_133 = arith.constant 5 : index
    %c0_134 = arith.constant 0 : index
    %c0_135 = arith.constant 0 : index
    %151 = vector.load %arg7[%c5_133, %c0_134, %c0_135] : memref<9x25x64xbf16, #tpu.memory_space<vmem>>, vector<1x25x64xbf16>
    %152 = vector.shape_cast %151 : vector<1x25x64xbf16> to vector<25x64xbf16>
    %cst_136 = arith.constant dense<0.000000e+00> : vector<25x64xf32>
    %153 = tpu.matmul %152, %94, %cst_136 {dimension_numbers = #tpu.dot_dimension_numbers<[1], [0], [0], [1], [0, 0, 1, 1], [], []>} : vector<25x64xbf16>, vector<64x64xbf16>, vector<25x64xf32> -> vector<25x64xf32>
    %c5_137 = arith.constant 5 : index
    %c0_138 = arith.constant 0 : index
    %c0_139 = arith.constant 0 : index
    %154 = vector.load %arg8[%c5_137, %c0_138, %c0_139] : memref<9x25x64xf32, #tpu.memory_space<vmem>>, vector<1x25x64xf32>
    %155 = vector.shape_cast %154 : vector<1x25x64xf32> to vector<25x64xf32>
    %156 = arith.addf %153, %155 : vector<25x64xf32>
    %157 = arith.truncf %156 : vector<25x64xf32> to vector<25x64xbf16>
    %c5_140 = arith.constant 5 : index
    %c0_141 = arith.constant 0 : index
    %c0_142 = arith.constant 0 : index
    %158 = vector.load %arg9[%c5_140, %c0_141, %c0_142] : memref<9x64x128xbf16, #tpu.memory_space<vmem>>, vector<1x64x128xbf16>
    %159 = vector.shape_cast %158 : vector<1x64x128xbf16> to vector<64x128xbf16>
    %cst_143 = arith.constant dense<0.000000e+00> : vector<25x128xf32>
    %160 = tpu.matmul %157, %159, %cst_143 {dimension_numbers = #tpu.dot_dimension_numbers<[1], [0], [0], [1], [0, 0, 1, 1], [], []>} : vector<25x64xbf16>, vector<64x128xbf16>, vector<25x128xf32> -> vector<25x128xf32>
    %161 = arith.addf %150, %160 : vector<25x128xf32>
    %c6_144 = arith.constant 6 : index
    %c0_145 = arith.constant 0 : index
    %c0_146 = arith.constant 0 : index
    %162 = vector.load %arg7[%c6_144, %c0_145, %c0_146] : memref<9x25x64xbf16, #tpu.memory_space<vmem>>, vector<1x25x64xbf16>
    %163 = vector.shape_cast %162 : vector<1x25x64xbf16> to vector<25x64xbf16>
    %cst_147 = arith.constant dense<0.000000e+00> : vector<25x64xf32>
    %164 = tpu.matmul %163, %94, %cst_147 {dimension_numbers = #tpu.dot_dimension_numbers<[1], [0], [0], [1], [0, 0, 1, 1], [], []>} : vector<25x64xbf16>, vector<64x64xbf16>, vector<25x64xf32> -> vector<25x64xf32>
    %c6_148 = arith.constant 6 : index
    %c0_149 = arith.constant 0 : index
    %c0_150 = arith.constant 0 : index
    %165 = vector.load %arg8[%c6_148, %c0_149, %c0_150] : memref<9x25x64xf32, #tpu.memory_space<vmem>>, vector<1x25x64xf32>
    %166 = vector.shape_cast %165 : vector<1x25x64xf32> to vector<25x64xf32>
    %167 = arith.addf %164, %166 : vector<25x64xf32>
    %168 = arith.truncf %167 : vector<25x64xf32> to vector<25x64xbf16>
    %c6_151 = arith.constant 6 : index
    %c0_152 = arith.constant 0 : index
    %c0_153 = arith.constant 0 : index
    %169 = vector.load %arg9[%c6_151, %c0_152, %c0_153] : memref<9x64x128xbf16, #tpu.memory_space<vmem>>, vector<1x64x128xbf16>
    %170 = vector.shape_cast %169 : vector<1x64x128xbf16> to vector<64x128xbf16>
    %cst_154 = arith.constant dense<0.000000e+00> : vector<25x128xf32>
    %171 = tpu.matmul %168, %170, %cst_154 {dimension_numbers = #tpu.dot_dimension_numbers<[1], [0], [0], [1], [0, 0, 1, 1], [], []>} : vector<25x64xbf16>, vector<64x128xbf16>, vector<25x128xf32> -> vector<25x128xf32>
    %172 = arith.addf %161, %171 : vector<25x128xf32>
    %c7_155 = arith.constant 7 : index
    %c0_156 = arith.constant 0 : index
    %c0_157 = arith.constant 0 : index
    %173 = vector.load %arg7[%c7_155, %c0_156, %c0_157] : memref<9x25x64xbf16, #tpu.memory_space<vmem>>, vector<1x25x64xbf16>
    %174 = vector.shape_cast %173 : vector<1x25x64xbf16> to vector<25x64xbf16>
    %cst_158 = arith.constant dense<0.000000e+00> : vector<25x64xf32>
    %175 = tpu.matmul %174, %94, %cst_158 {dimension_numbers = #tpu.dot_dimension_numbers<[1], [0], [0], [1], [0, 0, 1, 1], [], []>} : vector<25x64xbf16>, vector<64x64xbf16>, vector<25x64xf32> -> vector<25x64xf32>
    %c7_159 = arith.constant 7 : index
    %c0_160 = arith.constant 0 : index
    %c0_161 = arith.constant 0 : index
    %176 = vector.load %arg8[%c7_159, %c0_160, %c0_161] : memref<9x25x64xf32, #tpu.memory_space<vmem>>, vector<1x25x64xf32>
    %177 = vector.shape_cast %176 : vector<1x25x64xf32> to vector<25x64xf32>
    %178 = arith.addf %175, %177 : vector<25x64xf32>
    %179 = arith.truncf %178 : vector<25x64xf32> to vector<25x64xbf16>
    %c7_162 = arith.constant 7 : index
    %c0_163 = arith.constant 0 : index
    %c0_164 = arith.constant 0 : index
    %180 = vector.load %arg9[%c7_162, %c0_163, %c0_164] : memref<9x64x128xbf16, #tpu.memory_space<vmem>>, vector<1x64x128xbf16>
    %181 = vector.shape_cast %180 : vector<1x64x128xbf16> to vector<64x128xbf16>
    %cst_165 = arith.constant dense<0.000000e+00> : vector<25x128xf32>
    %182 = tpu.matmul %179, %181, %cst_165 {dimension_numbers = #tpu.dot_dimension_numbers<[1], [0], [0], [1], [0, 0, 1, 1], [], []>} : vector<25x64xbf16>, vector<64x128xbf16>, vector<25x128xf32> -> vector<25x128xf32>
    %183 = arith.addf %172, %182 : vector<25x128xf32>
    %c8_166 = arith.constant 8 : index
    %c0_167 = arith.constant 0 : index
    %c0_168 = arith.constant 0 : index
    %184 = vector.load %arg7[%c8_166, %c0_167, %c0_168] : memref<9x25x64xbf16, #tpu.memory_space<vmem>>, vector<1x25x64xbf16>
    %185 = vector.shape_cast %184 : vector<1x25x64xbf16> to vector<25x64xbf16>
    %cst_169 = arith.constant dense<0.000000e+00> : vector<25x64xf32>
    %186 = tpu.matmul %185, %94, %cst_169 {dimension_numbers = #tpu.dot_dimension_numbers<[1], [0], [0], [1], [0, 0, 1, 1], [], []>} : vector<25x64xbf16>, vector<64x64xbf16>, vector<25x64xf32> -> vector<25x64xf32>
    %c8_170 = arith.constant 8 : index
    %c0_171 = arith.constant 0 : index
    %c0_172 = arith.constant 0 : index
    %187 = vector.load %arg8[%c8_170, %c0_171, %c0_172] : memref<9x25x64xf32, #tpu.memory_space<vmem>>, vector<1x25x64xf32>
    %188 = vector.shape_cast %187 : vector<1x25x64xf32> to vector<25x64xf32>
    %189 = arith.addf %186, %188 : vector<25x64xf32>
    %190 = arith.truncf %189 : vector<25x64xf32> to vector<25x64xbf16>
    %c8_173 = arith.constant 8 : index
    %c0_174 = arith.constant 0 : index
    %c0_175 = arith.constant 0 : index
    %191 = vector.load %arg9[%c8_173, %c0_174, %c0_175] : memref<9x64x128xbf16, #tpu.memory_space<vmem>>, vector<1x64x128xbf16>
    %192 = vector.shape_cast %191 : vector<1x64x128xbf16> to vector<64x128xbf16>
    %cst_176 = arith.constant dense<0.000000e+00> : vector<25x128xf32>
    %193 = tpu.matmul %190, %192, %cst_176 {dimension_numbers = #tpu.dot_dimension_numbers<[1], [0], [0], [1], [0, 0, 1, 1], [], []>} : vector<25x64xbf16>, vector<64x128xbf16>, vector<25x128xf32> -> vector<25x128xf32>
    %194 = arith.addf %183, %193 : vector<25x128xf32>
    %c0_177 = arith.constant 0 : index
    %c0_178 = arith.constant 0 : index
    %195 = vector.load %arg10[%c0_177, %c0_178] : memref<1x128xf32, #tpu.memory_space<vmem>>, vector<1x128xf32>
    %196 = vector.broadcast %195 : vector<1x128xf32> to vector<25x128xf32>
    %197 = arith.addf %194, %196 : vector<25x128xf32>
    %cst_179 = arith.constant 0.000000e+00 : f32
    %198 = vector.broadcast %cst_179 : f32 to vector<25x128xf32>
    %199 = arith.cmpf oge, %197, %198 : vector<25x128xf32>
    %cst_180 = arith.constant 2.000000e-01 : f32
    %200 = vector.broadcast %cst_180 : f32 to vector<25x128xf32>
    %201 = arith.mulf %200, %197 : vector<25x128xf32>
    %202 = arith.select %199, %197, %201 : vector<25x128xi1>, vector<25x128xf32>
    %203 = arith.truncf %202 : vector<25x128xf32> to vector<25x128xbf16>
    %cst_181 = arith.constant 0.000000e+00 : f32
    %204 = vector.broadcast %cst_181 : f32 to vector<25x256xf32>
    %c0_182 = arith.constant 0 : index
    %c0_183 = arith.constant 0 : index
    %c0_184 = arith.constant 0 : index
    %205 = vector.load %arg11[%c0_182, %c0_183, %c0_184] : memref<9x25x25xbf16, #tpu.memory_space<vmem>>, vector<1x25x25xbf16>
    %206 = vector.shape_cast %205 : vector<1x25x25xbf16> to vector<25x25xbf16>
    %cst_185 = arith.constant dense<0.000000e+00> : vector<25x128xf32>
    %207 = tpu.matmul %206, %203, %cst_185 {dimension_numbers = #tpu.dot_dimension_numbers<[1], [0], [0], [1], [0, 0, 1, 1], [], []>} : vector<25x25xbf16>, vector<25x128xbf16>, vector<25x128xf32> -> vector<25x128xf32>
    %208 = arith.truncf %207 : vector<25x128xf32> to vector<25x128xbf16>
    %c0_186 = arith.constant 0 : index
    %c0_187 = arith.constant 0 : index
    %c0_188 = arith.constant 0 : index
    %209 = vector.load %arg12[%c0_186, %c0_187, %c0_188] : memref<9x128x256xbf16, #tpu.memory_space<vmem>>, vector<1x128x256xbf16>
    %210 = vector.shape_cast %209 : vector<1x128x256xbf16> to vector<128x256xbf16>
    %cst_189 = arith.constant dense<0.000000e+00> : vector<25x256xf32>
    %211 = tpu.matmul %208, %210, %cst_189 {dimension_numbers = #tpu.dot_dimension_numbers<[1], [0], [0], [1], [0, 0, 1, 1], [], []>} : vector<25x128xbf16>, vector<128x256xbf16>, vector<25x256xf32> -> vector<25x256xf32>
    %212 = arith.addf %204, %211 : vector<25x256xf32>
    %c1_190 = arith.constant 1 : index
    %c0_191 = arith.constant 0 : index
    %c0_192 = arith.constant 0 : index
    %213 = vector.load %arg11[%c1_190, %c0_191, %c0_192] : memref<9x25x25xbf16, #tpu.memory_space<vmem>>, vector<1x25x25xbf16>
    %214 = vector.shape_cast %213 : vector<1x25x25xbf16> to vector<25x25xbf16>
    %cst_193 = arith.constant dense<0.000000e+00> : vector<25x128xf32>
    %215 = tpu.matmul %214, %203, %cst_193 {dimension_numbers = #tpu.dot_dimension_numbers<[1], [0], [0], [1], [0, 0, 1, 1], [], []>} : vector<25x25xbf16>, vector<25x128xbf16>, vector<25x128xf32> -> vector<25x128xf32>
    %216 = arith.truncf %215 : vector<25x128xf32> to vector<25x128xbf16>
    %c1_194 = arith.constant 1 : index
    %c0_195 = arith.constant 0 : index
    %c0_196 = arith.constant 0 : index
    %217 = vector.load %arg12[%c1_194, %c0_195, %c0_196] : memref<9x128x256xbf16, #tpu.memory_space<vmem>>, vector<1x128x256xbf16>
    %218 = vector.shape_cast %217 : vector<1x128x256xbf16> to vector<128x256xbf16>
    %cst_197 = arith.constant dense<0.000000e+00> : vector<25x256xf32>
    %219 = tpu.matmul %216, %218, %cst_197 {dimension_numbers = #tpu.dot_dimension_numbers<[1], [0], [0], [1], [0, 0, 1, 1], [], []>} : vector<25x128xbf16>, vector<128x256xbf16>, vector<25x256xf32> -> vector<25x256xf32>
    %220 = arith.addf %212, %219 : vector<25x256xf32>
    %c2_198 = arith.constant 2 : index
    %c0_199 = arith.constant 0 : index
    %c0_200 = arith.constant 0 : index
    %221 = vector.load %arg11[%c2_198, %c0_199, %c0_200] : memref<9x25x25xbf16, #tpu.memory_space<vmem>>, vector<1x25x25xbf16>
    %222 = vector.shape_cast %221 : vector<1x25x25xbf16> to vector<25x25xbf16>
    %cst_201 = arith.constant dense<0.000000e+00> : vector<25x128xf32>
    %223 = tpu.matmul %222, %203, %cst_201 {dimension_numbers = #tpu.dot_dimension_numbers<[1], [0], [0], [1], [0, 0, 1, 1], [], []>} : vector<25x25xbf16>, vector<25x128xbf16>, vector<25x128xf32> -> vector<25x128xf32>
    %224 = arith.truncf %223 : vector<25x128xf32> to vector<25x128xbf16>
    %c2_202 = arith.constant 2 : index
    %c0_203 = arith.constant 0 : index
    %c0_204 = arith.constant 0 : index
    %225 = vector.load %arg12[%c2_202, %c0_203, %c0_204] : memref<9x128x256xbf16, #tpu.memory_space<vmem>>, vector<1x128x256xbf16>
    %226 = vector.shape_cast %225 : vector<1x128x256xbf16> to vector<128x256xbf16>
    %cst_205 = arith.constant dense<0.000000e+00> : vector<25x256xf32>
    %227 = tpu.matmul %224, %226, %cst_205 {dimension_numbers = #tpu.dot_dimension_numbers<[1], [0], [0], [1], [0, 0, 1, 1], [], []>} : vector<25x128xbf16>, vector<128x256xbf16>, vector<25x256xf32> -> vector<25x256xf32>
    %228 = arith.addf %220, %227 : vector<25x256xf32>
    %c3_206 = arith.constant 3 : index
    %c0_207 = arith.constant 0 : index
    %c0_208 = arith.constant 0 : index
    %229 = vector.load %arg11[%c3_206, %c0_207, %c0_208] : memref<9x25x25xbf16, #tpu.memory_space<vmem>>, vector<1x25x25xbf16>
    %230 = vector.shape_cast %229 : vector<1x25x25xbf16> to vector<25x25xbf16>
    %cst_209 = arith.constant dense<0.000000e+00> : vector<25x128xf32>
    %231 = tpu.matmul %230, %203, %cst_209 {dimension_numbers = #tpu.dot_dimension_numbers<[1], [0], [0], [1], [0, 0, 1, 1], [], []>} : vector<25x25xbf16>, vector<25x128xbf16>, vector<25x128xf32> -> vector<25x128xf32>
    %232 = arith.truncf %231 : vector<25x128xf32> to vector<25x128xbf16>
    %c3_210 = arith.constant 3 : index
    %c0_211 = arith.constant 0 : index
    %c0_212 = arith.constant 0 : index
    %233 = vector.load %arg12[%c3_210, %c0_211, %c0_212] : memref<9x128x256xbf16, #tpu.memory_space<vmem>>, vector<1x128x256xbf16>
    %234 = vector.shape_cast %233 : vector<1x128x256xbf16> to vector<128x256xbf16>
    %cst_213 = arith.constant dense<0.000000e+00> : vector<25x256xf32>
    %235 = tpu.matmul %232, %234, %cst_213 {dimension_numbers = #tpu.dot_dimension_numbers<[1], [0], [0], [1], [0, 0, 1, 1], [], []>} : vector<25x128xbf16>, vector<128x256xbf16>, vector<25x256xf32> -> vector<25x256xf32>
    %236 = arith.addf %228, %235 : vector<25x256xf32>
    %c4_214 = arith.constant 4 : index
    %c0_215 = arith.constant 0 : index
    %c0_216 = arith.constant 0 : index
    %237 = vector.load %arg11[%c4_214, %c0_215, %c0_216] : memref<9x25x25xbf16, #tpu.memory_space<vmem>>, vector<1x25x25xbf16>
    %238 = vector.shape_cast %237 : vector<1x25x25xbf16> to vector<25x25xbf16>
    %cst_217 = arith.constant dense<0.000000e+00> : vector<25x128xf32>
    %239 = tpu.matmul %238, %203, %cst_217 {dimension_numbers = #tpu.dot_dimension_numbers<[1], [0], [0], [1], [0, 0, 1, 1], [], []>} : vector<25x25xbf16>, vector<25x128xbf16>, vector<25x128xf32> -> vector<25x128xf32>
    %240 = arith.truncf %239 : vector<25x128xf32> to vector<25x128xbf16>
    %c4_218 = arith.constant 4 : index
    %c0_219 = arith.constant 0 : index
    %c0_220 = arith.constant 0 : index
    %241 = vector.load %arg12[%c4_218, %c0_219, %c0_220] : memref<9x128x256xbf16, #tpu.memory_space<vmem>>, vector<1x128x256xbf16>
    %242 = vector.shape_cast %241 : vector<1x128x256xbf16> to vector<128x256xbf16>
    %cst_221 = arith.constant dense<0.000000e+00> : vector<25x256xf32>
    %243 = tpu.matmul %240, %242, %cst_221 {dimension_numbers = #tpu.dot_dimension_numbers<[1], [0], [0], [1], [0, 0, 1, 1], [], []>} : vector<25x128xbf16>, vector<128x256xbf16>, vector<25x256xf32> -> vector<25x256xf32>
    %244 = arith.addf %236, %243 : vector<25x256xf32>
    %c5_222 = arith.constant 5 : index
    %c0_223 = arith.constant 0 : index
    %c0_224 = arith.constant 0 : index
    %245 = vector.load %arg11[%c5_222, %c0_223, %c0_224] : memref<9x25x25xbf16, #tpu.memory_space<vmem>>, vector<1x25x25xbf16>
    %246 = vector.shape_cast %245 : vector<1x25x25xbf16> to vector<25x25xbf16>
    %cst_225 = arith.constant dense<0.000000e+00> : vector<25x128xf32>
    %247 = tpu.matmul %246, %203, %cst_225 {dimension_numbers = #tpu.dot_dimension_numbers<[1], [0], [0], [1], [0, 0, 1, 1], [], []>} : vector<25x25xbf16>, vector<25x128xbf16>, vector<25x128xf32> -> vector<25x128xf32>
    %248 = arith.truncf %247 : vector<25x128xf32> to vector<25x128xbf16>
    %c5_226 = arith.constant 5 : index
    %c0_227 = arith.constant 0 : index
    %c0_228 = arith.constant 0 : index
    %249 = vector.load %arg12[%c5_226, %c0_227, %c0_228] : memref<9x128x256xbf16, #tpu.memory_space<vmem>>, vector<1x128x256xbf16>
    %250 = vector.shape_cast %249 : vector<1x128x256xbf16> to vector<128x256xbf16>
    %cst_229 = arith.constant dense<0.000000e+00> : vector<25x256xf32>
    %251 = tpu.matmul %248, %250, %cst_229 {dimension_numbers = #tpu.dot_dimension_numbers<[1], [0], [0], [1], [0, 0, 1, 1], [], []>} : vector<25x128xbf16>, vector<128x256xbf16>, vector<25x256xf32> -> vector<25x256xf32>
    %252 = arith.addf %244, %251 : vector<25x256xf32>
    %c6_230 = arith.constant 6 : index
    %c0_231 = arith.constant 0 : index
    %c0_232 = arith.constant 0 : index
    %253 = vector.load %arg11[%c6_230, %c0_231, %c0_232] : memref<9x25x25xbf16, #tpu.memory_space<vmem>>, vector<1x25x25xbf16>
    %254 = vector.shape_cast %253 : vector<1x25x25xbf16> to vector<25x25xbf16>
    %cst_233 = arith.constant dense<0.000000e+00> : vector<25x128xf32>
    %255 = tpu.matmul %254, %203, %cst_233 {dimension_numbers = #tpu.dot_dimension_numbers<[1], [0], [0], [1], [0, 0, 1, 1], [], []>} : vector<25x25xbf16>, vector<25x128xbf16>, vector<25x128xf32> -> vector<25x128xf32>
    %256 = arith.truncf %255 : vector<25x128xf32> to vector<25x128xbf16>
    %c6_234 = arith.constant 6 : index
    %c0_235 = arith.constant 0 : index
    %c0_236 = arith.constant 0 : index
    %257 = vector.load %arg12[%c6_234, %c0_235, %c0_236] : memref<9x128x256xbf16, #tpu.memory_space<vmem>>, vector<1x128x256xbf16>
    %258 = vector.shape_cast %257 : vector<1x128x256xbf16> to vector<128x256xbf16>
    %cst_237 = arith.constant dense<0.000000e+00> : vector<25x256xf32>
    %259 = tpu.matmul %256, %258, %cst_237 {dimension_numbers = #tpu.dot_dimension_numbers<[1], [0], [0], [1], [0, 0, 1, 1], [], []>} : vector<25x128xbf16>, vector<128x256xbf16>, vector<25x256xf32> -> vector<25x256xf32>
    %260 = arith.addf %252, %259 : vector<25x256xf32>
    %c7_238 = arith.constant 7 : index
    %c0_239 = arith.constant 0 : index
    %c0_240 = arith.constant 0 : index
    %261 = vector.load %arg11[%c7_238, %c0_239, %c0_240] : memref<9x25x25xbf16, #tpu.memory_space<vmem>>, vector<1x25x25xbf16>
    %262 = vector.shape_cast %261 : vector<1x25x25xbf16> to vector<25x25xbf16>
    %cst_241 = arith.constant dense<0.000000e+00> : vector<25x128xf32>
    %263 = tpu.matmul %262, %203, %cst_241 {dimension_numbers = #tpu.dot_dimension_numbers<[1], [0], [0], [1], [0, 0, 1, 1], [], []>} : vector<25x25xbf16>, vector<25x128xbf16>, vector<25x128xf32> -> vector<25x128xf32>
    %264 = arith.truncf %263 : vector<25x128xf32> to vector<25x128xbf16>
    %c7_242 = arith.constant 7 : index
    %c0_243 = arith.constant 0 : index
    %c0_244 = arith.constant 0 : index
    %265 = vector.load %arg12[%c7_242, %c0_243, %c0_244] : memref<9x128x256xbf16, #tpu.memory_space<vmem>>, vector<1x128x256xbf16>
    %266 = vector.shape_cast %265 : vector<1x128x256xbf16> to vector<128x256xbf16>
    %cst_245 = arith.constant dense<0.000000e+00> : vector<25x256xf32>
    %267 = tpu.matmul %264, %266, %cst_245 {dimension_numbers = #tpu.dot_dimension_numbers<[1], [0], [0], [1], [0, 0, 1, 1], [], []>} : vector<25x128xbf16>, vector<128x256xbf16>, vector<25x256xf32> -> vector<25x256xf32>
    %268 = arith.addf %260, %267 : vector<25x256xf32>
    %c8_246 = arith.constant 8 : index
    %c0_247 = arith.constant 0 : index
    %c0_248 = arith.constant 0 : index
    %269 = vector.load %arg11[%c8_246, %c0_247, %c0_248] : memref<9x25x25xbf16, #tpu.memory_space<vmem>>, vector<1x25x25xbf16>
    %270 = vector.shape_cast %269 : vector<1x25x25xbf16> to vector<25x25xbf16>
    %cst_249 = arith.constant dense<0.000000e+00> : vector<25x128xf32>
    %271 = tpu.matmul %270, %203, %cst_249 {dimension_numbers = #tpu.dot_dimension_numbers<[1], [0], [0], [1], [0, 0, 1, 1], [], []>} : vector<25x25xbf16>, vector<25x128xbf16>, vector<25x128xf32> -> vector<25x128xf32>
    %272 = arith.truncf %271 : vector<25x128xf32> to vector<25x128xbf16>
    %c8_250 = arith.constant 8 : index
    %c0_251 = arith.constant 0 : index
    %c0_252 = arith.constant 0 : index
    %273 = vector.load %arg12[%c8_250, %c0_251, %c0_252] : memref<9x128x256xbf16, #tpu.memory_space<vmem>>, vector<1x128x256xbf16>
    %274 = vector.shape_cast %273 : vector<1x128x256xbf16> to vector<128x256xbf16>
    %cst_253 = arith.constant dense<0.000000e+00> : vector<25x256xf32>
    %275 = tpu.matmul %272, %274, %cst_253 {dimension_numbers = #tpu.dot_dimension_numbers<[1], [0], [0], [1], [0, 0, 1, 1], [], []>} : vector<25x128xbf16>, vector<128x256xbf16>, vector<25x256xf32> -> vector<25x256xf32>
    %276 = arith.addf %268, %275 : vector<25x256xf32>
    %c0_254 = arith.constant 0 : index
    %c0_255 = arith.constant 0 : index
    %277 = vector.load %arg13[%c0_254, %c0_255] : memref<1x256xf32, #tpu.memory_space<vmem>>, vector<1x256xf32>
    %278 = vector.broadcast %277 : vector<1x256xf32> to vector<25x256xf32>
    %279 = arith.addf %276, %278 : vector<25x256xf32>
    %cst_256 = arith.constant 0.000000e+00 : f32
    %280 = vector.broadcast %cst_256 : f32 to vector<25x256xf32>
    %281 = arith.cmpf oge, %279, %280 : vector<25x256xf32>
    %cst_257 = arith.constant 2.500000e-01 : f32
    %282 = vector.broadcast %cst_257 : f32 to vector<25x256xf32>
    %283 = arith.mulf %282, %279 : vector<25x256xf32>
    %284 = arith.select %281, %279, %283 : vector<25x256xi1>, vector<25x256xf32>
    %c0_258 = arith.constant 0 : index
    %c0_259 = arith.constant 0 : index
    %285 = vector.load %arg14[%c0_258, %c0_259] : memref<25x256xf32, #tpu.memory_space<vmem>>, vector<25x256xf32>
    %286 = arith.mulf %284, %285 : vector<25x256xf32>
    %cst_260 = arith.constant dense<0.000000e+00> : vector<25xf32>
    %287 = vector.multi_reduction <add>, %286, %cst_260 [1] : vector<25x256xf32> to vector<25xf32>
    %288 = vector.shape_cast %287 : vector<25xf32> to vector<25x1xf32>
    %cst_261 = arith.constant dense<0.000000e+00> : vector<1xf32>
    %289 = vector.multi_reduction <add>, %288, %cst_261 [0] : vector<25x1xf32> to vector<1xf32>
    %290 = vector.shape_cast %289 : vector<1xf32> to vector<1x1xf32>
    %c0_262 = arith.constant 0 : index
    %c0_263 = arith.constant 0 : index
    %291 = vector.load %arg15[%c0_262, %c0_263] : memref<1x1xf32, #tpu.memory_space<vmem>>, vector<1x1xf32>
    %292 = arith.addf %290, %291 : vector<1x1xf32>
    %293 = math.absf %292 : vector<1x1xf32>
    %cst_264 = arith.constant 0.000000e+00 : f32
    %294 = vector.broadcast %cst_264 : f32 to vector<1x1xf32>
    %295 = arith.subf %294, %293 : vector<1x1xf32>
    %296 = math.exp %295 : vector<1x1xf32>
    %cst_265 = arith.constant 0.000000e+00 : f32
    %297 = vector.broadcast %cst_265 : f32 to vector<1x1xf32>
    %298 = arith.cmpf oge, %292, %297 : vector<1x1xf32>
    %cst_266 = arith.constant 1.000000e+00 : f32
    %299 = vector.broadcast %cst_266 : f32 to vector<1x1xf32>
    %300 = arith.addf %299, %296 : vector<1x1xf32>
    %cst_267 = arith.constant 1.000000e+00 : f32
    %301 = vector.broadcast %cst_267 : f32 to vector<1x1xf32>
    %302 = arith.divf %301, %300 : vector<1x1xf32>
    %cst_268 = arith.constant 1.000000e+00 : f32
    %303 = vector.broadcast %cst_268 : f32 to vector<1x1xf32>
    %304 = arith.addf %303, %296 : vector<1x1xf32>
    %305 = arith.divf %296, %304 : vector<1x1xf32>
    %306 = arith.select %298, %302, %305 : vector<1x1xi1>, vector<1x1xf32>
    %307 = vector.shape_cast %306 : vector<1x1xf32> to vector<1x1x1xf32>
    %c0_269 = arith.constant 0 : index
    %c0_270 = arith.constant 0 : index
    %c0_271 = arith.constant 0 : index
    %308 = vector.load %arg16[%c0_269, %c0_270, %c0_271] : memref<1x1x1xf32, #tpu.memory_space<vmem>>, vector<1x1x1xf32>
    tpu.vector_store %arg16[%c0_269, %c0_270, %c0_271], %307 {strides = array<i32>} : memref<1x1x1xf32, #tpu.memory_space<vmem>>, vector<1x1x1xf32>,
    return
  }
  func.func @transform_0(%arg0: i32) -> (i32, i32, i32) {
    %c0_i32 = arith.constant 0 : i32
    %c0_i32_0 = arith.constant 0 : i32
    %c0_i32_1 = arith.constant 0 : i32
    return %arg0, %c0_i32, %c0_i32_0 : i32, i32, i32
  }
  func.func @transform_1(%arg0: i32) -> (i32, i32) {
    %c0_i32 = arith.constant 0 : i32
    %c0_i32_0 = arith.constant 0 : i32
    %c0_i32_1 = arith.constant 0 : i32
    return %c0_i32, %c0_i32_0 : i32, i32
  }
  func.func @transform_2(%arg0: i32) -> (i32, i32) {
    %c0_i32 = arith.constant 0 : i32
    %c0_i32_0 = arith.constant 0 : i32
    %c0_i32_1 = arith.constant 0 : i32
    return %c0_i32, %c0_i32_0 : i32, i32
  }
  func.func @transform_3(%arg0: i32) -> (i32, i32, i32) {
    %c0_i32 = arith.constant 0 : i32
    %c0_i32_0 = arith.constant 0 : i32
    %c0_i32_1 = arith.constant 0 : i32
    %c0_i32_2 = arith.constant 0 : i32
    return %c0_i32, %c0_i32_0, %c0_i32_1 : i32, i32, i32
  }
  func.func @transform_4(%arg0: i32) -> (i32, i32, i32) {
    %c0_i32 = arith.constant 0 : i32
    %c0_i32_0 = arith.constant 0 : i32
    %c0_i32_1 = arith.constant 0 : i32
    %c0_i32_2 = arith.constant 0 : i32
    return %c0_i32, %c0_i32_0, %c0_i32_1 : i32, i32, i32
  }
  func.func @transform_5(%arg0: i32) -> (i32, i32) {
    %c0_i32 = arith.constant 0 : i32
    %c0_i32_0 = arith.constant 0 : i32
    %c0_i32_1 = arith.constant 0 : i32
    return %c0_i32, %c0_i32_0 : i32, i32
  }
  func.func @transform_6(%arg0: i32) -> (i32, i32, i32) {
    %c0_i32 = arith.constant 0 : i32
    %c0_i32_0 = arith.constant 0 : i32
    %c0_i32_1 = arith.constant 0 : i32
    %c0_i32_2 = arith.constant 0 : i32
    return %c0_i32, %c0_i32_0, %c0_i32_1 : i32, i32, i32
  }
  func.func @transform_7(%arg0: i32) -> (i32, i32, i32) {
    %c0_i32 = arith.constant 0 : i32
    %c0_i32_0 = arith.constant 0 : i32
    %c0_i32_1 = arith.constant 0 : i32
    %c0_i32_2 = arith.constant 0 : i32
    return %c0_i32, %c0_i32_0, %c0_i32_1 : i32, i32, i32
  }
  func.func @transform_8(%arg0: i32) -> (i32, i32, i32) {
    %c0_i32 = arith.constant 0 : i32
    %c0_i32_0 = arith.constant 0 : i32
    %c0_i32_1 = arith.constant 0 : i32
    %c0_i32_2 = arith.constant 0 : i32
    return %c0_i32, %c0_i32_0, %c0_i32_1 : i32, i32, i32
  }
  func.func @transform_9(%arg0: i32) -> (i32, i32) {
    %c0_i32 = arith.constant 0 : i32
    %c0_i32_0 = arith.constant 0 : i32
    %c0_i32_1 = arith.constant 0 : i32
    return %c0_i32, %c0_i32_0 : i32, i32
  }
  func.func @transform_10(%arg0: i32) -> (i32, i32, i32) {
    %c0_i32 = arith.constant 0 : i32
    %c0_i32_0 = arith.constant 0 : i32
    %c0_i32_1 = arith.constant 0 : i32
    %c0_i32_2 = arith.constant 0 : i32
    return %c0_i32, %c0_i32_0, %c0_i32_1 : i32, i32, i32
  }
  func.func @transform_11(%arg0: i32) -> (i32, i32, i32) {
    %c0_i32 = arith.constant 0 : i32
    %c0_i32_0 = arith.constant 0 : i32
    %c0_i32_1 = arith.constant 0 : i32
    %c0_i32_2 = arith.constant 0 : i32
    return %c0_i32, %c0_i32_0, %c0_i32_1 : i32, i32, i32
  }
  func.func @transform_12(%arg0: i32) -> (i32, i32) {
    %c0_i32 = arith.constant 0 : i32
    %c0_i32_0 = arith.constant 0 : i32
    %c0_i32_1 = arith.constant 0 : i32
    return %c0_i32, %c0_i32_0 : i32, i32
  }
  func.func @transform_13(%arg0: i32) -> (i32, i32) {
    %c0_i32 = arith.constant 0 : i32
    %c0_i32_0 = arith.constant 0 : i32
    %c0_i32_1 = arith.constant 0 : i32
    return %c0_i32, %c0_i32_0 : i32, i32
  }
  func.func @transform_14(%arg0: i32) -> (i32, i32) {
    %c0_i32 = arith.constant 0 : i32
    %c0_i32_0 = arith.constant 0 : i32
    %c0_i32_1 = arith.constant 0 : i32
    return %c0_i32, %c0_i32_0 : i32, i32
  }
  func.func @transform_15(%arg0: i32) -> (i32, i32, i32) {
    %c0_i32 = arith.constant 0 : i32
    %c0_i32_0 = arith.constant 0 : i32
    %c0_i32_1 = arith.constant 0 : i32
    return %arg0, %c0_i32, %c0_i32_0 : i32, i32, i32
  }
}

</mosaic_0001>

<llo_original>
// kernel: discriminator_forward.1
$region0: #{discriminator_forward.1}
  #allocation0 [shape = 'u32[]', space=smem, size = 0x4, offset = 0x4, fixed_abs, tag = 'smem constant byte address 0x4 - core index']
  #allocation1 [shape = 'u32[72,128]{1,0:T(1,128)}', space=vmem, size = 0x9000, scoped, tag = 'internal scratch']
  #allocation2 [shape = 'f32[1,1]{1,0:T(1,128)S(1)}', space=vmem, size = 0x200, scoped, tag = 'scoped memory for discriminator_forward.1']
  %s0 = inlined_call_operand.vmem [shape: bf16[2,256,32], index: 0, kind: input, shape index: {}]
  %s1 = inlined_call_operand.vmem [shape: bf16[32,32], index: 1, kind: input, shape index: {}]
  %s2 = inlined_call_operand.vmem [shape: f32[1,32], index: 2, kind: input, shape index: {}]
  %s3 = inlined_call_operand.vmem [shape: bf16[9,64,256], index: 3, kind: input, shape index: {}]
  %s4 = inlined_call_operand.vmem [shape: bf16[9,32,64], index: 4, kind: input, shape index: {}]
  %s5 = inlined_call_operand.vmem [shape: f32[1,64], index: 5, kind: input, shape index: {}]
  %s6 = inlined_call_operand.vmem [shape: bf16[9,25,64], index: 6, kind: input, shape index: {}]
  %s7 = inlined_call_operand.vmem [shape: f32[9,25,64], index: 7, kind: input, shape index: {}]
  %s8 = inlined_call_operand.vmem [shape: bf16[9,64,128], index: 8, kind: input, shape index: {}]
  %s9 = inlined_call_operand.vmem [shape: f32[1,128], index: 9, kind: input, shape index: {}]
  %s10 = inlined_call_operand.vmem [shape: bf16[9,25,25], index: 10, kind: input, shape index: {}]
  %s11 = inlined_call_operand.vmem [shape: bf16[9,128,256], index: 11, kind: input, shape index: {}]
  %s12 = inlined_call_operand.vmem [shape: f32[1,256], index: 12, kind: input, shape index: {}]
  %s13 = inlined_call_operand.vmem [shape: f32[25,256], index: 13, kind: input, shape index: {}]
  %s14 = inlined_call_operand.<no memory space> [shape: f32[1,1], index: 14, kind: input, shape index: {}]
  %s15 = inlined_call_operand.vmem [shape: f32[2,1,1], index: 15, kind: output, shape index: {}]
  %s16 = sld [smem:[#allocation0]]
  $region93: #{discriminator_forward.1} parent=0
    _
  %s18 = ssub.s32 1, %s16
  %s19 = scalar_select 0, %s18, %s16
  %v20 = vstv %s14
  %21 = vst [vmem:[#allocation2] sm:$0x1] %v20
  loop: start=0, step=1, limit=4
  $region2: #{discriminator_forward.1} parent=0 // loop_pre_header
    _
  $region3: #{discriminator_forward.1} parent=0 // loop_header
    %s23 = sphi 0, %s27
    %p24 = scmp.ge.s32.totalorder %s23, 4
    %s33 = sphi 0, %s35
    %s36 = sphi 0, %s33
    %s37 = sphi 0, %s36
    %s53 = sphi 0, %s37
    %s57 = sphi 0, %s57
    %s59 = sphi 0, %s57
    %s60 = sphi 0, %s59
    %s74 = sphi 0, %s60
    %s78 = sphi 0, %s78
    %s80 = sphi 0, %s78
    %s81 = sphi 0, %s80
    %s95 = sphi 0, %s81
    %s99 = sphi 0, %s99
    %s101 = sphi 0, %s99
    %s102 = sphi 0, %s101
    %s116 = sphi 0, %s102
    %s120 = sphi 0, %s120
    %s122 = sphi 0, %s120
    %s123 = sphi 0, %s122
    %s137 = sphi 0, %s123
    %s141 = sphi 0, %s141
    %s143 = sphi 0, %s141
    %s144 = sphi 0, %s143
    %s158 = sphi 0, %s144
    %s162 = sphi 0, %s162
    %s164 = sphi 0, %s162
    %s165 = sphi 0, %s164
    %s179 = sphi 0, %s165
    %s183 = sphi 0, %s183
    %s185 = sphi 0, %s183
    %s186 = sphi 0, %s185
    %s200 = sphi 0, %s186
    %s204 = sphi 0, %s204
    %s206 = sphi 0, %s204
    %s207 = sphi 0, %s206
    %s221 = sphi 0, %s207
    %s225 = sphi 0, %s225
    %s227 = sphi 0, %s225
    %s228 = sphi 0, %s227
    %s242 = sphi 0, %s228
    %s246 = sphi 0, %s246
    %s248 = sphi 0, %s246
    %s249 = sphi 0, %s248
    %s263 = sphi 0, %s249
    %s267 = sphi 0, %s267
    %s269 = sphi 0, %s267
    %s270 = sphi 0, %s269
    %s284 = sphi 0, %s270
    %s288 = sphi 0, %s288
    %s290 = sphi 0, %s288
    %s291 = sphi 0, %s290
    %s305 = sphi 0, %s291
    %s309 = sphi 0, %s309
    %s311 = sphi 0, %s309
    %s312 = sphi 0, %s311
    %s326 = sphi 0, %s312
    %s330 = sphi 0, %s330
    %s332 = sphi 0, %s330
    %s333 = sphi 0, %s332
    %s347 = sphi 0, %s333
    %s353 = sphi 0, %s355
    %s356 = sphi 0, %s353
    %s357 = sphi 0, %s356
    %s373 = sphi 0, %s357
  $region4: #{discriminator_forward.1} parent=0 // loop_header_branch
    %26 = sbr.rel (%p24) target = $region8
  $region5: #{discriminator_forward.1} parent=0 // loop_body
    %s28 = ssub.s32 %s23, 1
    %s29 = ssub.s32 %s23, 2
    %s30 = sadd.s32 %s23, 1
    %s31 = ssub.s32 %s23, %s30
    %p32 = scmp.eq.s32.totalorder %s31, 0
    %s34 = sadd.s32 %s33, 1
    %s35 = scalar_select %p32, %s33, %s34
    %p38 = pneg %p32
    %p39 = scmp.eq.s32.totalorder %s23, 1
    %p40 = por %p38, %p39
    %p41 = scmp.ne.s32.totalorder %s33, %s36
    %p42 = scmp.eq.s32.totalorder %s23, 0
    %p43 = por %p41, %p42
    %p44 = scmp.ne.s32.totalorder %s33, %s36
    %p45 = scmp.eq.s32.totalorder %s28, 1
    %p46 = por %p44, %p45
    %p47 = scmp.ne.s32.totalorder %s36, %s37
    %p48 = scmp.eq.s32.totalorder %s28, 0
    %p49 = por %p47, %p48
    %p50 = scmp.ne.s32.totalorder %s36, %s37
    %p51 = scmp.eq.s32.totalorder %s29, 1
    %p52 = por %p50, %p51
    %p54 = scmp.ne.s32.totalorder %s37, %s53
    %p55 = scmp.eq.s32.totalorder %s29, 0
    %p56 = por %p54, %p55
    %s58 = sadd.s32 %s57, 1
    %p61 = scmp.eq.s32.totalorder %s23, 1
    %p62 = scmp.ne.s32.totalorder %s57, %s59
    %p63 = scmp.eq.s32.totalorder %s23, 0
    %p64 = por %p62, %p63
    %p65 = scmp.ne.s32.totalorder %s57, %s59
    %p66 = scmp.eq.s32.totalorder %s28, 1
    %p67 = por %p65, %p66
    %p68 = scmp.ne.s32.totalorder %s59, %s60
    %p69 = scmp.eq.s32.totalorder %s28, 0
    %p70 = por %p68, %p69
    %p71 = scmp.ne.s32.totalorder %s59, %s60
    %p72 = scmp.eq.s32.totalorder %s29, 1
    %p73 = por %p71, %p72
    %p75 = scmp.ne.s32.totalorder %s60, %s74
    %p76 = scmp.eq.s32.totalorder %s29, 0
    %p77 = por %p75, %p76
    %s79 = sadd.s32 %s78, 1
    %p82 = scmp.eq.s32.totalorder %s23, 1
    %p83 = scmp.ne.s32.totalorder %s78, %s80
    %p84 = scmp.eq.s32.totalorder %s23, 0
    %p85 = por %p83, %p84
    %p86 = scmp.ne.s32.totalorder %s78, %s80
    %p87 = scmp.eq.s32.totalorder %s28, 1
    %p88 = por %p86, %p87
    %p89 = scmp.ne.s32.totalorder %s80, %s81
    %p90 = scmp.eq.s32.totalorder %s28, 0
    %p91 = por %p89, %p90
    %p92 = scmp.ne.s32.totalorder %s80, %s81
    %p93 = scmp.eq.s32.totalorder %s29, 1
    %p94 = por %p92, %p93
    %p96 = scmp.ne.s32.totalorder %s81, %s95
    %p97 = scmp.eq.s32.totalorder %s29, 0
    %p98 = por %p96, %p97
    %s100 = sadd.s32 %s99, 1
    %p103 = scmp.eq.s32.totalorder %s23, 1
    %p104 = scmp.ne.s32.totalorder %s99, %s101
    %p105 = scmp.eq.s32.totalorder %s23, 0
    %p106 = por %p104, %p105
    %p107 = scmp.ne.s32.totalorder %s99, %s101
    %p108 = scmp.eq.s32.totalorder %s28, 1
    %p109 = por %p107, %p108
    %p110 = scmp.ne.s32.totalorder %s101, %s102
    %p111 = scmp.eq.s32.totalorder %s28, 0
    %p112 = por %p110, %p111
    %p113 = scmp.ne.s32.totalorder %s101, %s102
    %p114 = scmp.eq.s32.totalorder %s29, 1
    %p115 = por %p113, %p114
    %p117 = scmp.ne.s32.totalorder %s102, %s116
    %p118 = scmp.eq.s32.totalorder %s29, 0
    %p119 = por %p117, %p118
    %s121 = sadd.s32 %s120, 1
    %p124 = scmp.eq.s32.totalorder %s23, 1
    %p125 = scmp.ne.s32.totalorder %s120, %s122
    %p126 = scmp.eq.s32.totalorder %s23, 0
    %p127 = por %p125, %p126
    %p128 = scmp.ne.s32.totalorder %s120, %s122
    %p129 = scmp.eq.s32.totalorder %s28, 1
    %p130 = por %p128, %p129
    %p131 = scmp.ne.s32.totalorder %s122, %s123
    %p132 = scmp.eq.s32.totalorder %s28, 0
    %p133 = por %p131, %p132
    %p134 = scmp.ne.s32.totalorder %s122, %s123
    %p135 = scmp.eq.s32.totalorder %s29, 1
    %p136 = por %p134, %p135
    %p138 = scmp.ne.s32.totalorder %s123, %s137
    %p139 = scmp.eq.s32.totalorder %s29, 0
    %p140 = por %p138, %p139
    %s142 = sadd.s32 %s141, 1
    %p145 = scmp.eq.s32.totalorder %s23, 1
    %p146 = scmp.ne.s32.totalorder %s141, %s143
    %p147 = scmp.eq.s32.totalorder %s23, 0
    %p148 = por %p146, %p147
    %p149 = scmp.ne.s32.totalorder %s141, %s143
    %p150 = scmp.eq.s32.totalorder %s28, 1
    %p151 = por %p149, %p150
    %p152 = scmp.ne.s32.totalorder %s143, %s144
    %p153 = scmp.eq.s32.totalorder %s28, 0
    %p154 = por %p152, %p153
    %p155 = scmp.ne.s32.totalorder %s143, %s144
    %p156 = scmp.eq.s32.totalorder %s29, 1
    %p157 = por %p155, %p156
    %p159 = scmp.ne.s32.totalorder %s144, %s158
    %p160 = scmp.eq.s32.totalorder %s29, 0
    %p161 = por %p159, %p160
    %s163 = sadd.s32 %s162, 1
    %p166 = scmp.eq.s32.totalorder %s23, 1
    %p167 = scmp.ne.s32.totalorder %s162, %s164
    %p168 = scmp.eq.s32.totalorder %s23, 0
    %p169 = por %p167, %p168
    %p170 = scmp.ne.s32.totalorder %s162, %s164
    %p171 = scmp.eq.s32.totalorder %s28, 1
    %p172 = por %p170, %p171
    %p173 = scmp.ne.s32.totalorder %s164, %s165
    %p174 = scmp.eq.s32.totalorder %s28, 0
    %p175 = por %p173, %p174
    %p176 = scmp.ne.s32.totalorder %s164, %s165
    %p177 = scmp.eq.s32.totalorder %s29, 1
    %p178 = por %p176, %p177
    %p180 = scmp.ne.s32.totalorder %s165, %s179
    %p181 = scmp.eq.s32.totalorder %s29, 0
    %p182 = por %p180, %p181
    %s184 = sadd.s32 %s183, 1
    %p187 = scmp.eq.s32.totalorder %s23, 1
    %p188 = scmp.ne.s32.totalorder %s183, %s185
    %p189 = scmp.eq.s32.totalorder %s23, 0
    %p190 = por %p188, %p189
    %p191 = scmp.ne.s32.totalorder %s183, %s185
    %p192 = scmp.eq.s32.totalorder %s28, 1
    %p193 = por %p191, %p192
    %p194 = scmp.ne.s32.totalorder %s185, %s186
    %p195 = scmp.eq.s32.totalorder %s28, 0
    %p196 = por %p194, %p195
    %p197 = scmp.ne.s32.totalorder %s185, %s186
    %p198 = scmp.eq.s32.totalorder %s29, 1
    %p199 = por %p197, %p198
    %p201 = scmp.ne.s32.totalorder %s186, %s200
    %p202 = scmp.eq.s32.totalorder %s29, 0
    %p203 = por %p201, %p202
    %s205 = sadd.s32 %s204, 1
    %p208 = scmp.eq.s32.totalorder %s23, 1
    %p209 = scmp.ne.s32.totalorder %s204, %s206
    %p210 = scmp.eq.s32.totalorder %s23, 0
    %p211 = por %p209, %p210
    %p212 = scmp.ne.s32.totalorder %s204, %s206
    %p213 = scmp.eq.s32.totalorder %s28, 1
    %p214 = por %p212, %p213
    %p215 = scmp.ne.s32.totalorder %s206, %s207
    %p216 = scmp.eq.s32.totalorder %s28, 0
    %p217 = por %p215, %p216
    %p218 = scmp.ne.s32.totalorder %s206, %s207
    %p219 = scmp.eq.s32.totalorder %s29, 1
    %p220 = por %p218, %p219
    %p222 = scmp.ne.s32.totalorder %s207, %s221
    %p223 = scmp.eq.s32.totalorder %s29, 0
    %p224 = por %p222, %p223
    %s226 = sadd.s32 %s225, 1
    %p229 = scmp.eq.s32.totalorder %s23, 1
    %p230 = scmp.ne.s32.totalorder %s225, %s227
    %p231 = scmp.eq.s32.totalorder %s23, 0
    %p232 = por %p230, %p231
    %p233 = scmp.ne.s32.totalorder %s225, %s227
    %p234 = scmp.eq.s32.totalorder %s28, 1
    %p235 = por %p233, %p234
    %p236 = scmp.ne.s32.totalorder %s227, %s228
    %p237 = scmp.eq.s32.totalorder %s28, 0
    %p238 = por %p236, %p237
    %p239 = scmp.ne.s32.totalorder %s227, %s228
    %p240 = scmp.eq.s32.totalorder %s29, 1
    %p241 = por %p239, %p240
    %p243 = scmp.ne.s32.totalorder %s228, %s242
    %p244 = scmp.eq.s32.totalorder %s29, 0
    %p245 = por %p243, %p244
    %s247 = sadd.s32 %s246, 1
    %p250 = scmp.eq.s32.totalorder %s23, 1
    %p251 = scmp.ne.s32.totalorder %s246, %s248
    %p252 = scmp.eq.s32.totalorder %s23, 0
    %p253 = por %p251, %p252
    %p254 = scmp.ne.s32.totalorder %s246, %s248
    %p255 = scmp.eq.s32.totalorder %s28, 1
    %p256 = por %p254, %p255
    %p257 = scmp.ne.s32.totalorder %s248, %s249
    %p258 = scmp.eq.s32.totalorder %s28, 0
    %p259 = por %p257, %p258
    %p260 = scmp.ne.s32.totalorder %s248, %s249
    %p261 = scmp.eq.s32.totalorder %s29, 1
    %p262 = por %p260, %p261
    %p264 = scmp.ne.s32.totalorder %s249, %s263
    %p265 = scmp.eq.s32.totalorder %s29, 0
    %p266 = por %p264, %p265
    %s268 = sadd.s32 %s267, 1
    %p271 = scmp.eq.s32.totalorder %s23, 1
    %p272 = scmp.ne.s32.totalorder %s267, %s269
    %p273 = scmp.eq.s32.totalorder %s23, 0
    %p274 = por %p272, %p273
    %p275 = scmp.ne.s32.totalorder %s267, %s269
    %p276 = scmp.eq.s32.totalorder %s28, 1
    %p277 = por %p275, %p276
    %p278 = scmp.ne.s32.totalorder %s269, %s270
    %p279 = scmp.eq.s32.totalorder %s28, 0
    %p280 = por %p278, %p279
    %p281 = scmp.ne.s32.totalorder %s269, %s270
    %p282 = scmp.eq.s32.totalorder %s29, 1
    %p283 = por %p281, %p282
    %p285 = scmp.ne.s32.totalorder %s270, %s284
    %p286 = scmp.eq.s32.totalorder %s29, 0
    %p287 = por %p285, %p286
    %s289 = sadd.s32 %s288, 1
    %p292 = scmp.eq.s32.totalorder %s23, 1
    %p293 = scmp.ne.s32.totalorder %s288, %s290
    %p294 = scmp.eq.s32.totalorder %s23, 0
    %p295 = por %p293, %p294
    %p296 = scmp.ne.s32.totalorder %s288, %s290
    %p297 = scmp.eq.s32.totalorder %s28, 1
    %p298 = por %p296, %p297
    %p299 = scmp.ne.s32.totalorder %s290, %s291
    %p300 = scmp.eq.s32.totalorder %s28, 0
    %p301 = por %p299, %p300
    %p302 = scmp.ne.s32.totalorder %s290, %s291
    %p303 = scmp.eq.s32.totalorder %s29, 1
    %p304 = por %p302, %p303
    %p306 = scmp.ne.s32.totalorder %s291, %s305
    %p307 = scmp.eq.s32.totalorder %s29, 0
    %p308 = por %p306, %p307
    %s310 = sadd.s32 %s309, 1
    %p313 = scmp.eq.s32.totalorder %s23, 1
    %p314 = scmp.ne.s32.totalorder %s309, %s311
    %p315 = scmp.eq.s32.totalorder %s23, 0
    %p316 = por %p314, %p315
    %p317 = scmp.ne.s32.totalorder %s309, %s311
    %p318 = scmp.eq.s32.totalorder %s28, 1
    %p319 = por %p317, %p318
    %p320 = scmp.ne.s32.totalorder %s311, %s312
    %p321 = scmp.eq.s32.totalorder %s28, 0
    %p322 = por %p320, %p321
    %p323 = scmp.ne.s32.totalorder %s311, %s312
    %p324 = scmp.eq.s32.totalorder %s29, 1
    %p325 = por %p323, %p324
    %p327 = scmp.ne.s32.totalorder %s312, %s326
    %p328 = scmp.eq.s32.totalorder %s29, 0
    %p329 = por %p327, %p328
    %s331 = sadd.s32 %s330, 1
    %p334 = scmp.eq.s32.totalorder %s23, 1
    %p335 = scmp.ne.s32.totalorder %s330, %s332
    %p336 = scmp.eq.s32.totalorder %s23, 0
    %p337 = por %p335, %p336
    %p338 = scmp.ne.s32.totalorder %s330, %s332
    %p339 = scmp.eq.s32.totalorder %s28, 1
    %p340 = por %p338, %p339
    %p341 = scmp.ne.s32.totalorder %s332, %s333
    %p342 = scmp.eq.s32.totalorder %s28, 0
    %p343 = por %p341, %p342
    %p344 = scmp.ne.s32.totalorder %s332, %s333
    %p345 = scmp.eq.s32.totalorder %s29, 1
    %p346 = por %p344, %p345
    %p348 = scmp.ne.s32.totalorder %s333, %s347
    %p349 = scmp.eq.s32.totalorder %s29, 0
    %p350 = por %p348, %p349
    %s351 = ssub.s32 %s23, %s30
    %p352 = scmp.eq.s32.totalorder %s351, 0
    %s354 = sadd.s32 %s353, 1
    %s355 = scalar_select %p352, %s353, %s354
    %p358 = pneg %p352
    %p359 = scmp.eq.s32.totalorder %s23, 1
    %p360 = por %p358, %p359
    %p361 = scmp.ne.s32.totalorder %s353, %s356
    %p362 = scmp.eq.s32.totalorder %s23, 0
    %p363 = por %p361, %p362
    %p364 = scmp.ne.s32.totalorder %s353, %s356
    %p365 = scmp.eq.s32.totalorder %s28, 1
    %p366 = por %p364, %p365
    %p367 = scmp.ne.s32.totalorder %s356, %s357
    %p368 = scmp.eq.s32.totalorder %s28, 0
    %p369 = por %p367, %p368
    %p370 = scmp.ne.s32.totalorder %s356, %s357
    %p371 = scmp.eq.s32.totalorder %s29, 1
    %p372 = por %p370, %p371
    %p374 = scmp.ne.s32.totalorder %s357, %s373
    %p375 = scmp.eq.s32.totalorder %s29, 0
    %p376 = por %p374, %p375
    %p377 = scmp.le.s32.totalorder 1, %s23
    %p378 = scmp.lt.s32.totalorder %s23, 3
    %p379 = pnand %p377, %p378
    %p380 = pneg %p379
    // Predicated region
    $region9: #{discriminator_forward.1} parent=5 // pred_check
      _
    $region10: #{discriminator_forward.1} parent=5 // pred_check_branch
      %382 = sbr.rel (%p379) target = $region12
    $region11: #{discriminator_forward.1} parent=5 // pred_region
      %s383 = ssub.s32 %s23, 1
      // Predicated region
      $region13: #{discriminator_forward.1} parent=11 // pred_check
        %p384 = pneg %p70
      $region14: #{discriminator_forward.1} parent=11 // pred_check_branch
        %386 = sbr.rel (%p384) target = $region16
      $region15: #{discriminator_forward.1} parent=11 // pred_region
        _
      $region16: #{discriminator_forward.1} parent=11 // pred_fallthru
        _
      // Predicated region
      $region17: #{discriminator_forward.1} parent=11 // pred_check
        %p387 = pneg %p91
      $region18: #{discriminator_forward.1} parent=11 // pred_check_branch
        %389 = sbr.rel (%p387) target = $region20
      $region19: #{discriminator_forward.1} parent=11 // pred_region
        _
      $region20: #{discriminator_forward.1} parent=11 // pred_fallthru
        _
      // Predicated region
      $region21: #{discriminator_forward.1} parent=11 // pred_check
        %p390 = pneg %p112
      $region22: #{discriminator_forward.1} parent=11 // pred_check_branch
        %392 = sbr.rel (%p390) target = $region24
      $region23: #{discriminator_forward.1} parent=11 // pred_region
        _
      $region24: #{discriminator_forward.1} parent=11 // pred_fallthru
        _
      // Predicated region
      $region25: #{discriminator_forward.1} parent=11 // pred_check
        %p393 = pneg %p133
      $region26: #{discriminator_forward.1} parent=11 // pred_check_branch
        %395 = sbr.rel (%p393) target = $region28
      $region27: #{discriminator_forward.1} parent=11 // pred_region
        _
      $region28: #{discriminator_forward.1} parent=11 // pred_fallthru
        _
      // Predicated region
      $region29: #{discriminator_forward.1} parent=11 // pred_check
        %p396 = pneg %p154
      $region30: #{discriminator_forward.1} parent=11 // pred_check_branch
        %398 = sbr.rel (%p396) target = $region32
      $region31: #{discriminator_forward.1} parent=11 // pred_region
        _
      $region32: #{discriminator_forward.1} parent=11 // pred_fallthru
        _
      // Predicated region
      $region33: #{discriminator_forward.1} parent=11 // pred_check
        %p399 = pneg %p175
      $region34: #{discriminator_forward.1} parent=11 // pred_check_branch
        %401 = sbr.rel (%p399) target = $region36
      $region35: #{discriminator_forward.1} parent=11 // pred_region
        _
      $region36: #{discriminator_forward.1} parent=11 // pred_fallthru
        _
      // Predicated region
      $region37: #{discriminator_forward.1} parent=11 // pred_check
        %p402 = pneg %p196
      $region38: #{discriminator_forward.1} parent=11 // pred_check_branch
        %404 = sbr.rel (%p402) target = $region40
      $region39: #{discriminator_forward.1} parent=11 // pred_region
        _
      $region40: #{discriminator_forward.1} parent=11 // pred_fallthru
        _
      // Predicated region
      $region41: #{discriminator_forward.1} parent=11 // pred_check
        %p405 = pneg %p217
      $region42: #{discriminator_forward.1} parent=11 // pred_check_branch
        %407 = sbr.rel (%p405) target = $region44
      $region43: #{discriminator_forward.1} parent=11 // pred_region
        _
      $region44: #{discriminator_forward.1} parent=11 // pred_fallthru
        _
      // Predicated region
      $region45: #{discriminator_forward.1} parent=11 // pred_check
        %p408 = pneg %p238
      $region46: #{discriminator_forward.1} parent=11 // pred_check_branch
        %410 = sbr.rel (%p408) target = $region48
      $region47: #{discriminator_forward.1} parent=11 // pred_region
        _
      $region48: #{discriminator_forward.1} parent=11 // pred_fallthru
        _
      // Predicated region
      $region49: #{discriminator_forward.1} parent=11 // pred_check
        %p411 = pneg %p259
      $region50: #{discriminator_forward.1} parent=11 // pred_check_branch
        %413 = sbr.rel (%p411) target = $region52
      $region51: #{discriminator_forward.1} parent=11 // pred_region
        _
      $region52: #{discriminator_forward.1} parent=11 // pred_fallthru
        _
      // Predicated region
      $region53: #{discriminator_forward.1} parent=11 // pred_check
        %p414 = pneg %p280
      $region54: #{discriminator_forward.1} parent=11 // pred_check_branch
        %416 = sbr.rel (%p414) target = $region56
      $region55: #{discriminator_forward.1} parent=11 // pred_region
        _
      $region56: #{discriminator_forward.1} parent=11 // pred_fallthru
        _
      // Predicated region
      $region57: #{discriminator_forward.1} parent=11 // pred_check
        %p417 = pneg %p301
      $region58: #{discriminator_forward.1} parent=11 // pred_check_branch
        %419 = sbr.rel (%p417) target = $region60
      $region59: #{discriminator_forward.1} parent=11 // pred_region
        _
      $region60: #{discriminator_forward.1} parent=11 // pred_fallthru
        _
      // Predicated region
      $region61: #{discriminator_forward.1} parent=11 // pred_check
        %p420 = pneg %p322
      $region62: #{discriminator_forward.1} parent=11 // pred_check_branch
        %422 = sbr.rel (%p420) target = $region64
      $region63: #{discriminator_forward.1} parent=11 // pred_region
        _
      $region64: #{discriminator_forward.1} parent=11 // pred_fallthru
        _
      // Predicated region
      $region65: #{discriminator_forward.1} parent=11 // pred_check
        %p423 = pneg %p343
      $region66: #{discriminator_forward.1} parent=11 // pred_check_branch
        %425 = sbr.rel (%p423) target = $region68
      $region67: #{discriminator_forward.1} parent=11 // pred_region
        _
      $region68: #{discriminator_forward.1} parent=11 // pred_fallthru
        _
    $region12: #{discriminator_forward.1} parent=5 // pred_fallthru
      _
    %p426 = scmp.lt.s32.totalorder %s23, 2
    // Predicated region
    $region69: #{discriminator_forward.1} parent=5 // pred_check
      %p427 = pneg %p426
    $region70: #{discriminator_forward.1} parent=5 // pred_check_branch
      %429 = sbr.rel (%p427) target = $region72
    $region71: #{discriminator_forward.1} parent=5 // pred_region
      // Predicated region
      $region73: #{discriminator_forward.1} parent=71 // pred_check
        %p430 = pneg %p43
      $region74: #{discriminator_forward.1} parent=71 // pred_check_branch
        %432 = sbr.rel (%p430) target = $region76
      $region75: #{discriminator_forward.1} parent=71 // pred_region
        %p433 = scmp.lt.s32.totalorder %s23, 1
        %s434 = scalar_select %p433, %s23, 1
        %s435 = smul.addr %s434, 32
        %s436 = smul.addr %s435, 4
        %s437 = scalar_lea.vmem %s0, %s436
      $region76: #{discriminator_forward.1} parent=71 // pred_fallthru
        _
    $region72: #{discriminator_forward.1} parent=5 // pred_fallthru
      _
    %p438 = scmp.le.s32.totalorder 1, %s23
    %p439 = scmp.lt.s32.totalorder %s23, 3
    %p440 = pnand %p438, %p439
    %p441 = pneg %p440
    // Predicated region
    $region77: #{discriminator_forward.1} parent=5 // pred_check
      _
    $region78: #{discriminator_forward.1} parent=5 // pred_check_branch
      %443 = sbr.rel (%p440) target = $region80
    $region79: #{discriminator_forward.1} parent=5 // pred_region
      %s444 = ssub.s32 %s23, 1
      %p445 = scmp.lt.s32.totalorder %s28, 1
      %s446 = scalar_select %p445, %s28, 1
      %s447 = smul.addr %s446, 32
      %s448 = smul.addr %s447, 4
      %s449 = scalar_lea.vmem %s0, %s448
      %p450 = pneg %p49
      %p451 = pneg %p46
      %p452 = pneg %p70
      %p453 = pneg %p67
      %p454 = pneg %p91
      %p455 = pneg %p88
      %p456 = pneg %p112
      %p457 = pneg %p109
      %p458 = pneg %p133
      %p459 = pneg %p130
      %p460 = pneg %p154
      %p461 = pneg %p151
      %p462 = pneg %p175
      %p463 = pneg %p172
      %p464 = pneg %p196
      %p465 = pneg %p193
      %p466 = pneg %p217
      %p467 = pneg %p214
      %p468 = pneg %p238
      %p469 = pneg %p235
      %p470 = pneg %p259
      %p471 = pneg %p256
      %p472 = pneg %p280
      %p473 = pneg %p277
      %p474 = pneg %p301
      %p475 = pneg %p298
      %p476 = pneg %p322
      %p477 = pneg %p319
      %p478 = pneg %p343
      %p479 = pneg %p340
      %p480 = pneg %p369
      %p481 = pneg %p366
      %p482 = scmp.lt.s32.totalorder %s28, 1
      %s483 = scalar_select %p482, %s28, 1
      %s484 = scalar_lea.vmem %s15, %s483
      %p485 = scmp.lt.s32.totalorder %s28, 1
      %s486 = scalar_select %p485, %s28, 1
      %s487 = smul.addr %s486, 32
      %s488 = smul.addr %s487, 4
      %s489 = scalar_lea.vmem %s0, %s488
      %p490 = scmp.lt.s32.totalorder %s28, 1
      %s491 = scalar_select %p490, %s28, 1
      %s492 = scalar_lea.vmem %s15, %s491
      %v494 = vld [vmem:[%s489] sm:$0xf]
      %v495 = vld [vmem:[%s489 + $0x4] sm:$0xf]
      %v496 = vld [vmem:[%s489 + $0x8] sm:$0xf]
      %v497 = vld [vmem:[%s489 + $0xc] sm:$0xf]
      %v498 = vld [vmem:[%s489 + $0x10] sm:$0xf]
      %v499 = vld [vmem:[%s489 + $0x14] sm:$0xf]
      %v500 = vld [vmem:[%s489 + $0x18] sm:$0xf]
      %v501 = vld [vmem:[%s489 + $0x1c] sm:$0xf]
      %v502 = vld [vmem:[%s489 + $0x20] sm:$0xf]
      %v503 = vld [vmem:[%s489 + $0x24] sm:$0xf]
      %v504 = vld [vmem:[%s489 + $0x28] sm:$0xf]
      %v505 = vld [vmem:[%s489 + $0x2c] sm:$0xf]
      %v506 = vld [vmem:[%s489 + $0x30] sm:$0xf]
      %v507 = vld [vmem:[%s489 + $0x34] sm:$0xf]
      %v508 = vld [vmem:[%s489 + $0x38] sm:$0xf]
      %v509 = vld [vmem:[%s489 + $0x3c] sm:$0xf]
      %v510 = vld [vmem:[%s489 + $0x40] sm:$0xf]
      %v511 = vld [vmem:[%s489 + $0x44] sm:$0xf]
      %v512 = vld [vmem:[%s489 + $0x48] sm:$0xf]
      %v513 = vld [vmem:[%s489 + $0x4c] sm:$0xf]
      %v514 = vld [vmem:[%s489 + $0x50] sm:$0xf]
      %v515 = vld [vmem:[%s489 + $0x54] sm:$0xf]
      %v516 = vld [vmem:[%s489 + $0x58] sm:$0xf]
      %v517 = vld [vmem:[%s489 + $0x5c] sm:$0xf]
      %v518 = vld [vmem:[%s489 + $0x60] sm:$0xf]
      %v519 = vld [vmem:[%s489 + $0x64] sm:$0xf]
      %v520 = vld [vmem:[%s489 + $0x68] sm:$0xf]
      %v521 = vld [vmem:[%s489 + $0x6c] sm:$0xf]
      %v522 = vld [vmem:[%s489 + $0x70] sm:$0xf]
      %v523 = vld [vmem:[%s489 + $0x74] sm:$0xf]
      %v524 = vld [vmem:[%s489 + $0x78] sm:$0xf]
      %v525 = vld [vmem:[%s489 + $0x7c] sm:$0xf]
      %v526 = vld [vmem:[%s1] sm:$0xf]
      %v527 = vld [vmem:[%s1 + $0x4] sm:$0xf]
      %v528 = vld [vmem:[%s1 + $0x8] sm:$0xf]
      %v529 = vld [vmem:[%s1 + $0xc] sm:$0xf]
      %v530 = vld [vmem:[%s2] sm:$0x1]
      %v532 = vperm.slane %v530, 0
      %v566 = vunpack.c.l.b16 %v494
      %v567 = vunpack.c.l.b16 %v495
      %v568 = vunpack.c.l.b16 %v496
      %v569 = vunpack.c.l.b16 %v497
      %v570 = vunpack.c.l.b16 %v498
      %v571 = vunpack.c.l.b16 %v499
      %v572 = vunpack.c.l.b16 %v500
      %v573 = vunpack.c.l.b16 %v501
      %v574 = vunpack.c.l.b16 %v502
      %v575 = vunpack.c.l.b16 %v503
      %v576 = vunpack.c.l.b16 %v504
      %v577 = vunpack.c.l.b16 %v505
      %v578 = vunpack.c.l.b16 %v506
      %v579 = vunpack.c.l.b16 %v507
      %v580 = vunpack.c.l.b16 %v508
      %v581 = vunpack.c.l.b16 %v509
      %v582 = vunpack.c.l.b16 %v510
      %v583 = vunpack.c.l.b16 %v511
      %v584 = vunpack.c.l.b16 %v512
      %v585 = vunpack.c.l.b16 %v513
      %v586 = vunpack.c.l.b16 %v514
      %v587 = vunpack.c.l.b16 %v515
      %v588 = vunpack.c.l.b16 %v516
      %v589 = vunpack.c.l.b16 %v517
      %v590 = vunpack.c.l.b16 %v518
      %v591 = vunpack.c.l.b16 %v519
      %v592 = vunpack.c.l.b16 %v520
      %v593 = vunpack.c.l.b16 %v521
      %v594 = vunpack.c.l.b16 %v522
      %v595 = vunpack.c.l.b16 %v523
      %v596 = vunpack.c.l.b16 %v524
      %v597 = vunpack.c.l.b16 %v525
      %v598 = vpack.c.b16 %v567, %v566
      %v599 = vpack.c.b16 %v569, %v568
      %v600 = vpack.c.b16 %v571, %v570
      %v601 = vpack.c.b16 %v573, %v572
      %v602 = vpack.c.b16 %v575, %v574
      %v603 = vpack.c.b16 %v577, %v576
      %v604 = vpack.c.b16 %v579, %v578
      %v605 = vpack.c.b16 %v581, %v580
      %v606 = vpack.c.b16 %v583, %v582
      %v607 = vpack.c.b16 %v585, %v584
      %v608 = vpack.c.b16 %v587, %v586
      %v609 = vpack.c.b16 %v589, %v588
      %v610 = vpack.c.b16 %v591, %v590
      %v611 = vpack.c.b16 %v593, %v592
      %v612 = vpack.c.b16 %v595, %v594
      %v613 = vpack.c.b16 %v597, %v596
      %v618 = vunpack.c.l.b16 %v526
      %v619 = vunpack.c.l.b16 %v527
      %v620 = vunpack.c.l.b16 %v528
      %v621 = vunpack.c.l.b16 %v529
      %v622 = vpack.c.b16 %v619, %v618
      %v623 = vpack.c.b16 %v621, %v620
      %vm626 = vcmask 261120
      %v628 = vsel %vm626, %v598, 0
      %v631 = vsel %vm626, %v599, 0
      %v634 = vsel %vm626, %v600, 0
      %v637 = vsel %vm626, %v601, 0
      %v640 = vsel %vm626, %v602, 0
      %v643 = vsel %vm626, %v603, 0
      %v646 = vsel %vm626, %v604, 0
      %v649 = vsel %vm626, %v605, 0
      %v652 = vsel %vm626, %v606, 0
      %v655 = vsel %vm626, %v607, 0
      %v658 = vsel %vm626, %v608, 0
      %v661 = vsel %vm626, %v609, 0
      %v664 = vsel %vm626, %v610, 0
      %v667 = vsel %vm626, %v611, 0
      %v670 = vsel %vm626, %v612, 0
      %v673 = vsel %vm626, %v613, 0
      %675 = vmatpush.bf16.msra.mxu0 0
      %676 = vmatpush.bf16.msra.mxu0 0
      %677 = vmatpush.bf16.msra.mxu0 0
      %678 = vmatpush.bf16.msra.mxu0 0
      %679 = vmatpush.bf16.msra.mxu0 0
      %680 = vmatpush.bf16.msra.mxu0 0
      %681 = vmatpush.bf16.msra.mxu0 %v623
      %682 = vmatpush.bf16.msra.mxu0 %v622
      %683 = vmatmul.bf16.gmra.mxu0 %v628
      %v684 = vpop.f32.mrf.mxu0
      %v685 = vadd.f32 %v532, %v684
      %v686 = vpop.f32.mrf.mxu0
      %v687 = vadd.f32 %v532, %v686
      %688 = vmatmul.bf16.gmra.mxu0 %v631
      %v689 = vpop.f32.mrf.mxu0
      %v690 = vadd.f32 %v532, %v689
      %v691 = vpop.f32.mrf.mxu0
      %v692 = vadd.f32 %v532, %v691
      %693 = vmatmul.bf16.gmra.mxu0 %v634
      %v694 = vpop.f32.mrf.mxu0
      %v695 = vadd.f32 %v532, %v694
      %v696 = vpop.f32.mrf.mxu0
      %v697 = vadd.f32 %v532, %v696
      %698 = vmatmul.bf16.gmra.mxu0 %v637
      %v699 = vpop.f32.mrf.mxu0
      %v700 = vadd.f32 %v532, %v699
      %v701 = vpop.f32.mrf.mxu0
      %v702 = vadd.f32 %v532, %v701
      %703 = vmatmul.bf16.gmra.mxu0 %v640
      %v704 = vpop.f32.mrf.mxu0
      %v705 = vadd.f32 %v532, %v704
      %v706 = vpop.f32.mrf.mxu0
      %v707 = vadd.f32 %v532, %v706
      %708 = vmatmul.bf16.gmra.mxu0 %v643
      %v709 = vpop.f32.mrf.mxu0
      %v710 = vadd.f32 %v532, %v709
      %v711 = vpop.f32.mrf.mxu0
      %v712 = vadd.f32 %v532, %v711
      %713 = vmatmul.bf16.gmra.mxu0 %v646
      %v714 = vpop.f32.mrf.mxu0
      %v715 = vadd.f32 %v532, %v714
      %v716 = vpop.f32.mrf.mxu0
      %v717 = vadd.f32 %v532, %v716
      %718 = vmatmul.bf16.gmra.mxu0 %v649
      %v719 = vpop.f32.mrf.mxu0
      %v720 = vadd.f32 %v532, %v719
      %v721 = vpop.f32.mrf.mxu0
      %v722 = vadd.f32 %v532, %v721
      %723 = vmatmul.bf16.gmra.mxu0 %v652
      %v724 = vpop.f32.mrf.mxu0
      %v725 = vadd.f32 %v532, %v724
      %v726 = vpop.f32.mrf.mxu0
      %v727 = vadd.f32 %v532, %v726
      %728 = vmatmul.bf16.gmra.mxu0 %v655
      %v729 = vpop.f32.mrf.mxu0
      %v730 = vadd.f32 %v532, %v729
      %v731 = vpop.f32.mrf.mxu0
      %v732 = vadd.f32 %v532, %v731
      %733 = vmatmul.bf16.gmra.mxu0 %v658
      %v734 = vpop.f32.mrf.mxu0
      %v735 = vadd.f32 %v532, %v734
      %v736 = vpop.f32.mrf.mxu0
      %v737 = vadd.f32 %v532, %v736
      %738 = vmatmul.bf16.gmra.mxu0 %v661
      %v739 = vpop.f32.mrf.mxu0
      %v740 = vadd.f32 %v532, %v739
      %v741 = vpop.f32.mrf.mxu0
      %v742 = vadd.f32 %v532, %v741
      %743 = vmatmul.bf16.gmra.mxu0 %v664
      %v744 = vpop.f32.mrf.mxu0
      %v745 = vadd.f32 %v532, %v744
      %v746 = vpop.f32.mrf.mxu0
      %v747 = vadd.f32 %v532, %v746
      %748 = vmatmul.bf16.gmra.mxu0 %v667
      %v749 = vpop.f32.mrf.mxu0
      %v750 = vadd.f32 %v532, %v749
      %v751 = vpop.f32.mrf.mxu0
      %v752 = vadd.f32 %v532, %v751
      %753 = vmatmul.bf16.gmra.mxu0 %v670
      %v754 = vpop.f32.mrf.mxu0
      %v755 = vadd.f32 %v532, %v754
      %v756 = vpop.f32.mrf.mxu0
      %v757 = vadd.f32 %v532, %v756
      %758 = vmatmul.bf16.gmra.mxu0 %v673
      %v759 = vpop.f32.mrf.mxu0
      %v760 = vadd.f32 %v532, %v759
      %v761 = vpop.f32.mrf.mxu0
      %v762 = vadd.f32 %v532, %v761
      %763 = vdwg.mxu0
      %vm764 = vcmp.ge.f32.partialorder %v685, 0.0
      %vm765 = vcmp.ge.f32.partialorder %v687, 0.0
      %vm766 = vcmp.ge.f32.partialorder %v690, 0.0
      %vm767 = vcmp.ge.f32.partialorder %v692, 0.0
      %vm768 = vcmp.ge.f32.partialorder %v695, 0.0
      %vm769 = vcmp.ge.f32.partialorder %v697, 0.0
      %vm770 = vcmp.ge.f32.partialorder %v700, 0.0
      %vm771 = vcmp.ge.f32.partialorder %v702, 0.0
      %vm772 = vcmp.ge.f32.partialorder %v705, 0.0
      %vm773 = vcmp.ge.f32.partialorder %v707, 0.0
      %vm774 = vcmp.ge.f32.partialorder %v710, 0.0
      %vm775 = vcmp.ge.f32.partialorder %v712, 0.0
      %vm776 = vcmp.ge.f32.partialorder %v715, 0.0
      %vm777 = vcmp.ge.f32.partialorder %v717, 0.0
      %vm778 = vcmp.ge.f32.partialorder %v720, 0.0
      %vm779 = vcmp.ge.f32.partialorder %v722, 0.0
      %vm780 = vcmp.ge.f32.partialorder %v725, 0.0
      %vm781 = vcmp.ge.f32.partialorder %v727, 0.0
      %vm782 = vcmp.ge.f32.partialorder %v730, 0.0
      %vm783 = vcmp.ge.f32.partialorder %v732, 0.0
      %vm784 = vcmp.ge.f32.partialorder %v735, 0.0
      %vm785 = vcmp.ge.f32.partialorder %v737, 0.0
      %vm786 = vcmp.ge.f32.partialorder %v740, 0.0
      %vm787 = vcmp.ge.f32.partialorder %v742, 0.0
      %vm788 = vcmp.ge.f32.partialorder %v745, 0.0
      %vm789 = vcmp.ge.f32.partialorder %v747, 0.0
      %vm790 = vcmp.ge.f32.partialorder %v750, 0.0
      %vm791 = vcmp.ge.f32.partialorder %v752, 0.0
      %vm792 = vcmp.ge.f32.partialorder %v755, 0.0
      %vm793 = vcmp.ge.f32.partialorder %v757, 0.0
      %vm794 = vcmp.ge.f32.partialorder %v760, 0.0
      %vm795 = vcmp.ge.f32.partialorder %v762, 0.0
      %v796 = vmul.f32 %v685, 0.2
      %v797 = vmul.f32 %v687, 0.2
      %v798 = vmul.f32 %v690, 0.2
      %v799 = vmul.f32 %v692, 0.2
      %v800 = vmul.f32 %v695, 0.2
      %v801 = vmul.f32 %v697, 0.2
      %v802 = vmul.f32 %v700, 0.2
      %v803 = vmul.f32 %v702, 0.2
      %v804 = vmul.f32 %v705, 0.2
      %v805 = vmul.f32 %v707, 0.2
      %v806 = vmul.f32 %v710, 0.2
      %v807 = vmul.f32 %v712, 0.2
      %v808 = vmul.f32 %v715, 0.2
      %v809 = vmul.f32 %v717, 0.2
      %v810 = vmul.f32 %v720, 0.2
      %v811 = vmul.f32 %v722, 0.2
      %v812 = vmul.f32 %v725, 0.2
      %v813 = vmul.f32 %v727, 0.2
      %v814 = vmul.f32 %v730, 0.2
      %v815 = vmul.f32 %v732, 0.2
      %v816 = vmul.f32 %v735, 0.2
      %v817 = vmul.f32 %v737, 0.2
      %v818 = vmul.f32 %v740, 0.2
      %v819 = vmul.f32 %v742, 0.2
      %v820 = vmul.f32 %v745, 0.2
      %v821 = vmul.f32 %v747, 0.2
      %v822 = vmul.f32 %v750, 0.2
      %v823 = vmul.f32 %v752, 0.2
      %v824 = vmul.f32 %v755, 0.2
      %v825 = vmul.f32 %v757, 0.2
      %v826 = vmul.f32 %v760, 0.2
      %v827 = vmul.f32 %v762, 0.2
      %v828 = vsel %vm764, %v685, %v796
      %v829 = vsel %vm765, %v687, %v797
      %v830 = vsel %vm766, %v690, %v798
      %v831 = vsel %vm767, %v692, %v799
      %v832 = vsel %vm768, %v695, %v800
      %v833 = vsel %vm769, %v697, %v801
      %v834 = vsel %vm770, %v700, %v802
      %v835 = vsel %vm771, %v702, %v803
      %v836 = vsel %vm772, %v705, %v804
      %v837 = vsel %vm773, %v707, %v805
      %v838 = vsel %vm774, %v710, %v806
      %v839 = vsel %vm775, %v712, %v807
      %v840 = vsel %vm776, %v715, %v808
      %v841 = vsel %vm777, %v717, %v809
      %v842 = vsel %vm778, %v720, %v810
      %v843 = vsel %vm779, %v722, %v811
      %v844 = vsel %vm780, %v725, %v812
      %v845 = vsel %vm781, %v727, %v813
      %v846 = vsel %vm782, %v730, %v814
      %v847 = vsel %vm783, %v732, %v815
      %v848 = vsel %vm784, %v735, %v816
      %v849 = vsel %vm785, %v737, %v817
      %v850 = vsel %vm786, %v740, %v818
      %v851 = vsel %vm787, %v742, %v819
      %v852 = vsel %vm788, %v745, %v820
      %v853 = vsel %vm789, %v747, %v821
      %v854 = vsel %vm790, %v750, %v822
      %v855 = vsel %vm791, %v752, %v823
      %v856 = vsel %vm792, %v755, %v824
      %v857 = vsel %vm793, %v757, %v825
      %v858 = vsel %vm794, %v760, %v826
      %v859 = vsel %vm795, %v762, %v827
      %v860 = vpack.c.bf16 %v829, %v828
      %v861 = vpack.c.bf16 %v831, %v830
      %v862 = vpack.c.bf16 %v833, %v832
      %v863 = vpack.c.bf16 %v835, %v834
      %v864 = vpack.c.bf16 %v837, %v836
      %v865 = vpack.c.bf16 %v839, %v838
      %v866 = vpack.c.bf16 %v841, %v840
      %v867 = vpack.c.bf16 %v843, %v842
      %v868 = vpack.c.bf16 %v845, %v844
      %v869 = vpack.c.bf16 %v847, %v846
      %v870 = vpack.c.bf16 %v849, %v848
      %v871 = vpack.c.bf16 %v851, %v850
      %v872 = vpack.c.bf16 %v853, %v852
      %v873 = vpack.c.bf16 %v855, %v854
      %v874 = vpack.c.bf16 %v857, %v856
      %v875 = vpack.c.bf16 %v859, %v858
      %v876 = vld [vmem:[%s3] sm:$0xff]
      %v877 = vld [vmem:[%s3 + $0x8] sm:$0xff]
      %v878 = vld [vmem:[%s3 + $0x10] sm:$0xff]
      %v879 = vld [vmem:[%s3 + $0x18] sm:$0xff]
      %v880 = vld [vmem:[%s3 + $0x20] sm:$0xff]
      %v881 = vld [vmem:[%s3 + $0x28] sm:$0xff]
      %v882 = vld [vmem:[%s3 + $0x30] sm:$0xff]
      %v883 = vld [vmem:[%s3 + $0x38] sm:$0xff]
      %v892 = vunpack.c.l.b16 %v876
      %v893 = vunpack.c.h.b16 %v876
      %v894 = vunpack.c.l.b16 %v877
      %v895 = vunpack.c.h.b16 %v877
      %v896 = vunpack.c.l.b16 %v878
      %v897 = vunpack.c.h.b16 %v878
      %v898 = vunpack.c.l.b16 %v879
      %v899 = vunpack.c.h.b16 %v879
      %v900 = vunpack.c.l.b16 %v880
      %v901 = vunpack.c.h.b16 %v880
      %v902 = vunpack.c.l.b16 %v881
      %v903 = vunpack.c.h.b16 %v881
      %v904 = vunpack.c.l.b16 %v882
      %v905 = vunpack.c.h.b16 %v882
      %v906 = vunpack.c.l.b16 %v883
      %v907 = vunpack.c.h.b16 %v883
      %v908 = vpack.c.b16 %v894, %v892
      %v909 = vpack.c.b16 %v895, %v893
      %v910 = vpack.c.b16 %v898, %v896
      %v911 = vpack.c.b16 %v899, %v897
      %v912 = vpack.c.b16 %v902, %v900
      %v913 = vpack.c.b16 %v903, %v901
      %v914 = vpack.c.b16 %v906, %v904
      %v915 = vpack.c.b16 %v907, %v905
      %924 = vmatpush.bf16.msra.mxu0 %v867
      %925 = vmatpush.bf16.msra.mxu0 %v866
      %926 = vmatpush.bf16.msra.mxu0 %v865
      %927 = vmatpush.bf16.msra.mxu0 %v864
      %928 = vmatpush.bf16.msra.mxu0 %v863
      %929 = vmatpush.bf16.msra.mxu0 %v862
      %930 = vmatpush.bf16.msra.mxu0 %v861
      %931 = vmatpush.bf16.msra.mxu0 %v860
      %932 = vmatmul.bf16.gmra.mxu0 %v908
      %v933 = vpop.f32.mrf.mxu0
      %v934 = vadd.f32 0.0, %v933
      %v935 = vpop.f32.mrf.mxu0
      %v936 = vadd.f32 0.0, %v935
      %937 = vmatmul.bf16.gmra.mxu0 %v910
      %v938 = vpop.f32.mrf.mxu0
      %v939 = vadd.f32 0.0, %v938
      %v940 = vpop.f32.mrf.mxu0
      %v941 = vadd.f32 0.0, %v940
      %942 = vmatmul.bf16.gmra.mxu0 %v912
      %v943 = vpop.f32.mrf.mxu0
      %v944 = vadd.f32 0.0, %v943
      %v945 = vpop.f32.mrf.mxu0
      %v946 = vadd.f32 0.0, %v945
      %947 = vmatmul.bf16.gmra.mxu0 %v914
      %v948 = vpop.f32.mrf.mxu0
      %v949 = vadd.f32 0.0, %v948
      %v950 = vpop.f32.mrf.mxu0
      %v951 = vadd.f32 0.0, %v950
      %952 = vdwg.mxu0
      %953 = vmatpush.bf16.msra.mxu0 %v875
      %954 = vmatpush.bf16.msra.mxu0 %v874
      %955 = vmatpush.bf16.msra.mxu0 %v873
      %956 = vmatpush.bf16.msra.mxu0 %v872
      %957 = vmatpush.bf16.msra.mxu0 %v871
      %958 = vmatpush.bf16.msra.mxu0 %v870
      %959 = vmatpush.bf16.msra.mxu0 %v869
      %960 = vmatpush.bf16.msra.mxu0 %v868
      %961 = vmatmul.bf16.gmra.mxu0 %v909
      %v962 = vpop.f32.mrf.mxu0
      %v963 = vadd.f32 %v934, %v962
      %v964 = vpop.f32.mrf.mxu0
      %v965 = vadd.f32 %v936, %v964
      %966 = vmatmul.bf16.gmra.mxu0 %v911
      %v967 = vpop.f32.mrf.mxu0
      %v968 = vadd.f32 %v939, %v967
      %v969 = vpop.f32.mrf.mxu0
      %v970 = vadd.f32 %v941, %v969
      %971 = vmatmul.bf16.gmra.mxu0 %v913
      %v972 = vpop.f32.mrf.mxu0
      %v973 = vadd.f32 %v944, %v972
      %v974 = vpop.f32.mrf.mxu0
      %v975 = vadd.f32 %v946, %v974
      %976 = vmatmul.bf16.gmra.mxu0 %v915
      %v977 = vpop.f32.mrf.mxu0
      %v978 = vadd.f32 %v949, %v977
      %v979 = vpop.f32.mrf.mxu0
      %v980 = vadd.f32 %v951, %v979
      %981 = vdwg.mxu0
      %v982 = vpack.c.bf16 %v965, %v963
      %v983 = vpack.c.bf16 %v970, %v968
      %v984 = vpack.c.bf16 %v975, %v973
      %v985 = vpack.c.bf16 %v980, %v978
      %v986 = vld [vmem:[%s4] sm:$0xf]
      %v987 = vld [vmem:[%s4 + $0x4] sm:$0xf]
      %v988 = vld [vmem:[%s4 + $0x8] sm:$0xf]
      %v989 = vld [vmem:[%s4 + $0xc] sm:$0xf]
      %s990 = scalar_lea.vmem %s3, 64
      %v991 = vld [vmem:[%s990] sm:$0xff]
      %v992 = vld [vmem:[%s990 + $0x8] sm:$0xff]
      %v993 = vld [vmem:[%s990 + $0x10] sm:$0xff]
      %v994 = vld [vmem:[%s990 + $0x18] sm:$0xff]
      %v995 = vld [vmem:[%s990 + $0x20] sm:$0xff]
      %v996 = vld [vmem:[%s990 + $0x28] sm:$0xff]
      %v997 = vld [vmem:[%s990 + $0x30] sm:$0xff]
      %v998 = vld [vmem:[%s990 + $0x38] sm:$0xff]
      %v1007 = vunpack.c.l.b16 %v991
      %v1008 = vunpack.c.h.b16 %v991
      %v1009 = vunpack.c.l.b16 %v992
      %v1010 = vunpack.c.h.b16 %v992
      %v1011 = vunpack.c.l.b16 %v993
      %v1012 = vunpack.c.h.b16 %v993
      %v1013 = vunpack.c.l.b16 %v994
      %v1014 = vunpack.c.h.b16 %v994
      %v1015 = vunpack.c.l.b16 %v995
      %v1016 = vunpack.c.h.b16 %v995
      %v1017 = vunpack.c.l.b16 %v996
      %v1018 = vunpack.c.h.b16 %v996
      %v1019 = vunpack.c.l.b16 %v997
      %v1020 = vunpack.c.h.b16 %v997
      %v1021 = vunpack.c.l.b16 %v998
      %v1022 = vunpack.c.h.b16 %v998
      %v1023 = vpack.c.b16 %v1009, %v1007
      %v1024 = vpack.c.b16 %v1010, %v1008
      %v1025 = vpack.c.b16 %v1013, %v1011
      %v1026 = vpack.c.b16 %v1014, %v1012
      %v1027 = vpack.c.b16 %v1017, %v1015
      %v1028 = vpack.c.b16 %v1018, %v1016
      %v1029 = vpack.c.b16 %v1021, %v1019
      %v1030 = vpack.c.b16 %v1022, %v1020
      %1039 = vmatpush.bf16.msra.mxu0 %v867
      %1040 = vmatpush.bf16.msra.mxu0 %v866
      %1041 = vmatpush.bf16.msra.mxu0 %v865
      %1042 = vmatpush.bf16.msra.mxu0 %v864
      %1043 = vmatpush.bf16.msra.mxu0 %v863
      %1044 = vmatpush.bf16.msra.mxu0 %v862
      %1045 = vmatpush.bf16.msra.mxu0 %v861
      %1046 = vmatpush.bf16.msra.mxu0 %v860
      %1047 = vmatmul.bf16.gmra.mxu0 %v1023
      %v1048 = vpop.f32.mrf.mxu0
      %v1049 = vadd.f32 0.0, %v1048
      %v1050 = vpop.f32.mrf.mxu0
      %v1051 = vadd.f32 0.0, %v1050
      %1052 = vmatmul.bf16.gmra.mxu0 %v1025
      %v1053 = vpop.f32.mrf.mxu0
      %v1054 = vadd.f32 0.0, %v1053
      %v1055 = vpop.f32.mrf.mxu0
      %v1056 = vadd.f32 0.0, %v1055
      %1057 = vmatmul.bf16.gmra.mxu0 %v1027
      %v1058 = vpop.f32.mrf.mxu0
      %v1059 = vadd.f32 0.0, %v1058
      %v1060 = vpop.f32.mrf.mxu0
      %v1061 = vadd.f32 0.0, %v1060
      %1062 = vmatmul.bf16.gmra.mxu0 %v1029
      %v1063 = vpop.f32.mrf.mxu0
      %v1064 = vadd.f32 0.0, %v1063
      %v1065 = vpop.f32.mrf.mxu0
      %v1066 = vadd.f32 0.0, %v1065
      %1067 = vdwg.mxu0
      %1068 = vmatpush.bf16.msra.mxu0 %v875
      %1069 = vmatpush.bf16.msra.mxu0 %v874
      %1070 = vmatpush.bf16.msra.mxu0 %v873
      %1071 = vmatpush.bf16.msra.mxu0 %v872
      %1072 = vmatpush.bf16.msra.mxu0 %v871
      %1073 = vmatpush.bf16.msra.mxu0 %v870
      %1074 = vmatpush.bf16.msra.mxu0 %v869
      %1075 = vmatpush.bf16.msra.mxu0 %v868
      %1076 = vmatmul.bf16.gmra.mxu0 %v1024
      %v1077 = vpop.f32.mrf.mxu0
      %v1078 = vadd.f32 %v1049, %v1077
      %v1079 = vpop.f32.mrf.mxu0
      %v1080 = vadd.f32 %v1051, %v1079
      %1081 = vmatmul.bf16.gmra.mxu0 %v1026
      %v1082 = vpop.f32.mrf.mxu0
      %v1083 = vadd.f32 %v1054, %v1082
      %v1084 = vpop.f32.mrf.mxu0
      %v1085 = vadd.f32 %v1056, %v1084
      %1086 = vmatmul.bf16.gmra.mxu0 %v1028
      %v1087 = vpop.f32.mrf.mxu0
      %v1088 = vadd.f32 %v1059, %v1087
      %v1089 = vpop.f32.mrf.mxu0
      %v1090 = vadd.f32 %v1061, %v1089
      %1091 = vmatmul.bf16.gmra.mxu0 %v1030
      %v1092 = vpop.f32.mrf.mxu0
      %v1093 = vadd.f32 %v1064, %v1092
      %v1094 = vpop.f32.mrf.mxu0
      %v1095 = vadd.f32 %v1066, %v1094
      %1096 = vdwg.mxu0
      %v1097 = vpack.c.bf16 %v1080, %v1078
      %v1098 = vpack.c.bf16 %v1085, %v1083
      %v1099 = vpack.c.bf16 %v1090, %v1088
      %v1100 = vpack.c.bf16 %v1095, %v1093
      %s1101 = scalar_lea.vmem %s4, 16
      %v1102 = vld [vmem:[%s1101] sm:$0xf]
      %v1103 = vld [vmem:[%s1101 + $0x4] sm:$0xf]
      %v1104 = vld [vmem:[%s1101 + $0x8] sm:$0xf]
      %v1105 = vld [vmem:[%s1101 + $0xc] sm:$0xf]
      %v1110 = vunpack.c.l.b16 %v1102
      %v1111 = vunpack.c.l.b16 %v1103
      %v1112 = vunpack.c.l.b16 %v1104
      %v1113 = vunpack.c.l.b16 %v1105
      %v1114 = vpack.c.b16 %v1111, %v1110
      %v1115 = vpack.c.b16 %v1113, %v1112
      %v1119 = vsel %vm626, %v1097, 0
      %v1122 = vsel %vm626, %v1098, 0
      %v1125 = vsel %vm626, %v1099, 0
      %v1128 = vsel %vm626, %v1100, 0
      %1130 = vmatpush.bf16.msra.mxu0 0
      %1131 = vmatpush.bf16.msra.mxu0 0
      %1132 = vmatpush.bf16.msra.mxu0 0
      %1133 = vmatpush.bf16.msra.mxu0 0
      %1134 = vmatpush.bf16.msra.mxu0 0
      %1135 = vmatpush.bf16.msra.mxu0 0
      %1136 = vmatpush.bf16.msra.mxu0 %v1115
      %1137 = vmatpush.bf16.msra.mxu0 %v1114
      %1138 = vmatmul.bf16.gmra.mxu0 %v1119
      %v1139 = vpop.f32.mrf.mxu0
      %v1140 = vadd.f32 0.0, %v1139
      %v1141 = vpop.f32.mrf.mxu0
      %v1142 = vadd.f32 0.0, %v1141
      %1143 = vmatmul.bf16.gmra.mxu0 %v1122
      %v1144 = vpop.f32.mrf.mxu0
      %v1145 = vadd.f32 0.0, %v1144
      %v1146 = vpop.f32.mrf.mxu0
      %v1147 = vadd.f32 0.0, %v1146
      %1148 = vmatmul.bf16.gmra.mxu0 %v1125
      %v1149 = vpop.f32.mrf.mxu0
      %v1150 = vadd.f32 0.0, %v1149
      %v1151 = vpop.f32.mrf.mxu0
      %v1152 = vadd.f32 0.0, %v1151
      %1153 = vmatmul.bf16.gmra.mxu0 %v1128
      %v1154 = vpop.f32.mrf.mxu0
      %v1155 = vadd.f32 0.0, %v1154
      %v1156 = vpop.f32.mrf.mxu0
      %v1157 = vadd.f32 0.0, %v1156
      %1158 = vdwg.mxu0
      %v1163 = vunpack.c.l.b16 %v986
      %v1164 = vunpack.c.l.b16 %v987
      %v1165 = vunpack.c.l.b16 %v988
      %v1166 = vunpack.c.l.b16 %v989
      %v1167 = vpack.c.b16 %v1164, %v1163
      %v1168 = vpack.c.b16 %v1166, %v1165
      %v1172 = vsel %vm626, %v982, 0
      %v1175 = vsel %vm626, %v983, 0
      %v1178 = vsel %vm626, %v984, 0
      %v1181 = vsel %vm626, %v985, 0
      %1183 = vmatpush.bf16.msra.mxu0 0
      %1184 = vmatpush.bf16.msra.mxu0 0
      %1185 = vmatpush.bf16.msra.mxu0 0
      %1186 = vmatpush.bf16.msra.mxu0 0
      %1187 = vmatpush.bf16.msra.mxu0 0
      %1188 = vmatpush.bf16.msra.mxu0 0
      %1189 = vmatpush.bf16.msra.mxu0 %v1168
      %1190 = vmatpush.bf16.msra.mxu0 %v1167
      %1191 = vmatmul.bf16.gmra.mxu0 %v1172
      %v1192 = vpop.f32.mrf.mxu0
      %v1193 = vadd.f32 %v1140, %v1192
      %v1194 = vpop.f32.mrf.mxu0
      %v1195 = vadd.f32 %v1142, %v1194
      %1196 = vmatmul.bf16.gmra.mxu0 %v1175
      %v1197 = vpop.f32.mrf.mxu0
      %v1198 = vadd.f32 %v1145, %v1197
      %v1199 = vpop.f32.mrf.mxu0
      %v1200 = vadd.f32 %v1147, %v1199
      %1201 = vmatmul.bf16.gmra.mxu0 %v1178
      %v1202 = vpop.f32.mrf.mxu0
      %v1203 = vadd.f32 %v1150, %v1202
      %v1204 = vpop.f32.mrf.mxu0
      %v1205 = vadd.f32 %v1152, %v1204
      %1206 = vmatmul.bf16.gmra.mxu0 %v1181
      %v1207 = vpop.f32.mrf.mxu0
      %v1208 = vadd.f32 %v1155, %v1207
      %v1209 = vpop.f32.mrf.mxu0
      %v1210 = vadd.f32 %v1157, %v1209
      %1211 = vdwg.mxu0
      %s1212 = scalar_lea.vmem %s3, 128
      %v1213 = vld [vmem:[%s1212] sm:$0xff]
      %v1214 = vld [vmem:[%s1212 + $0x8] sm:$0xff]
      %v1215 = vld [vmem:[%s1212 + $0x10] sm:$0xff]
      %v1216 = vld [vmem:[%s1212 + $0x18] sm:$0xff]
      %v1217 = vld [vmem:[%s1212 + $0x20] sm:$0xff]
      %v1218 = vld [vmem:[%s1212 + $0x28] sm:$0xff]
      %v1219 = vld [vmem:[%s1212 + $0x30] sm:$0xff]
      %v1220 = vld [vmem:[%s1212 + $0x38] sm:$0xff]
      %v1229 = vunpack.c.l.b16 %v1213
      %v1230 = vunpack.c.h.b16 %v1213
      %v1231 = vunpack.c.l.b16 %v1214
      %v1232 = vunpack.c.h.b16 %v1214
      %v1233 = vunpack.c.l.b16 %v1215
      %v1234 = vunpack.c.h.b16 %v1215
      %v1235 = vunpack.c.l.b16 %v1216
      %v1236 = vunpack.c.h.b16 %v1216
      %v1237 = vunpack.c.l.b16 %v1217
      %v1238 = vunpack.c.h.b16 %v1217
      %v1239 = vunpack.c.l.b16 %v1218
      %v1240 = vunpack.c.h.b16 %v1218
      %v1241 = vunpack.c.l.b16 %v1219
      %v1242 = vunpack.c.h.b16 %v1219
      %v1243 = vunpack.c.l.b16 %v1220
      %v1244 = vunpack.c.h.b16 %v1220
      %v1245 = vpack.c.b16 %v1231, %v1229
      %v1246 = vpack.c.b16 %v1232, %v1230
      %v1247 = vpack.c.b16 %v1235, %v1233
      %v1248 = vpack.c.b16 %v1236, %v1234
      %v1249 = vpack.c.b16 %v1239, %v1237
      %v1250 = vpack.c.b16 %v1240, %v1238
      %v1251 = vpack.c.b16 %v1243, %v1241
      %v1252 = vpack.c.b16 %v1244, %v1242
      %1261 = vmatpush.bf16.msra.mxu0 %v867
      %1262 = vmatpush.bf16.msra.mxu0 %v866
      %1263 = vmatpush.bf16.msra.mxu0 %v865
      %1264 = vmatpush.bf16.msra.mxu0 %v864
      %1265 = vmatpush.bf16.msra.mxu0 %v863
      %1266 = vmatpush.bf16.msra.mxu0 %v862
      %1267 = vmatpush.bf16.msra.mxu0 %v861
      %1268 = vmatpush.bf16.msra.mxu0 %v860
      %1269 = vmatmul.bf16.gmra.mxu0 %v1245
      %v1270 = vpop.f32.mrf.mxu0
      %v1271 = vadd.f32 0.0, %v1270
      %v1272 = vpop.f32.mrf.mxu0
      %v1273 = vadd.f32 0.0, %v1272
      %1274 = vmatmul.bf16.gmra.mxu0 %v1247
      %v1275 = vpop.f32.mrf.mxu0
      %v1276 = vadd.f32 0.0, %v1275
      %v1277 = vpop.f32.mrf.mxu0
      %v1278 = vadd.f32 0.0, %v1277
      %1279 = vmatmul.bf16.gmra.mxu0 %v1249
      %v1280 = vpop.f32.mrf.mxu0
      %v1281 = vadd.f32 0.0, %v1280
      %v1282 = vpop.f32.mrf.mxu0
      %v1283 = vadd.f32 0.0, %v1282
      %1284 = vmatmul.bf16.gmra.mxu0 %v1251
      %v1285 = vpop.f32.mrf.mxu0
      %v1286 = vadd.f32 0.0, %v1285
      %v1287 = vpop.f32.mrf.mxu0
      %v1288 = vadd.f32 0.0, %v1287
      %1289 = vdwg.mxu0
      %1290 = vmatpush.bf16.msra.mxu0 %v875
      %1291 = vmatpush.bf16.msra.mxu0 %v874
      %1292 = vmatpush.bf16.msra.mxu0 %v873
      %1293 = vmatpush.bf16.msra.mxu0 %v872
      %1294 = vmatpush.bf16.msra.mxu0 %v871
      %1295 = vmatpush.bf16.msra.mxu0 %v870
      %1296 = vmatpush.bf16.msra.mxu0 %v869
      %1297 = vmatpush.bf16.msra.mxu0 %v868
      %1298 = vmatmul.bf16.gmra.mxu0 %v1246
      %v1299 = vpop.f32.mrf.mxu0
      %v1300 = vadd.f32 %v1271, %v1299
      %v1301 = vpop.f32.mrf.mxu0
      %v1302 = vadd.f32 %v1273, %v1301
      %1303 = vmatmul.bf16.gmra.mxu0 %v1248
      %v1304 = vpop.f32.mrf.mxu0
      %v1305 = vadd.f32 %v1276, %v1304
      %v1306 = vpop.f32.mrf.mxu0
      %v1307 = vadd.f32 %v1278, %v1306
      %1308 = vmatmul.bf16.gmra.mxu0 %v1250
      %v1309 = vpop.f32.mrf.mxu0
      %v1310 = vadd.f32 %v1281, %v1309
      %v1311 = vpop.f32.mrf.mxu0
      %v1312 = vadd.f32 %v1283, %v1311
      %1313 = vmatmul.bf16.gmra.mxu0 %v1252
      %v1314 = vpop.f32.mrf.mxu0
      %v1315 = vadd.f32 %v1286, %v1314
      %v1316 = vpop.f32.mrf.mxu0
      %v1317 = vadd.f32 %v1288, %v1316
      %1318 = vdwg.mxu0
      %v1319 = vpack.c.bf16 %v1302, %v1300
      %v1320 = vpack.c.bf16 %v1307, %v1305
      %v1321 = vpack.c.bf16 %v1312, %v1310
      %v1322 = vpack.c.bf16 %v1317, %v1315
      %s1323 = scalar_lea.vmem %s4, 32
      %v1324 = vld [vmem:[%s1323] sm:$0xf]
      %v1325 = vld [vmem:[%s1323 + $0x4] sm:$0xf]
      %v1326 = vld [vmem:[%s1323 + $0x8] sm:$0xf]
      %v1327 = vld [vmem:[%s1323 + $0xc] sm:$0xf]
      %v1332 = vunpack.c.l.b16 %v1324
      %v1333 = vunpack.c.l.b16 %v1325
      %v1334 = vunpack.c.l.b16 %v1326
      %v1335 = vunpack.c.l.b16 %v1327
      %v1336 = vpack.c.b16 %v1333, %v1332
      %v1337 = vpack.c.b16 %v1335, %v1334
      %v1341 = vsel %vm626, %v1319, 0
      %v1344 = vsel %vm626, %v1320, 0
      %v1347 = vsel %vm626, %v1321, 0
      %v1350 = vsel %vm626, %v1322, 0
      %1352 = vmatpush.bf16.msra.mxu0 0
      %1353 = vmatpush.bf16.msra.mxu0 0
      %1354 = vmatpush.bf16.msra.mxu0 0
      %1355 = vmatpush.bf16.msra.mxu0 0
      %1356 = vmatpush.bf16.msra.mxu0 0
      %1357 = vmatpush.bf16.msra.mxu0 0
      %1358 = vmatpush.bf16.msra.mxu0 %v1337
      %1359 = vmatpush.bf16.msra.mxu0 %v1336
      %1360 = vmatmul.bf16.gmra.mxu0 %v1341
      %v1361 = vpop.f32.mrf.mxu0
      %v1362 = vadd.f32 0.0, %v1361
      %v1363 = vpop.f32.mrf.mxu0
      %v1364 = vadd.f32 0.0, %v1363
      %1365 = vmatmul.bf16.gmra.mxu0 %v1344
      %v1366 = vpop.f32.mrf.mxu0
      %v1367 = vadd.f32 0.0, %v1366
      %v1368 = vpop.f32.mrf.mxu0
      %v1369 = vadd.f32 0.0, %v1368
      %1370 = vmatmul.bf16.gmra.mxu0 %v1347
      %v1371 = vpop.f32.mrf.mxu0
      %v1372 = vadd.f32 0.0, %v1371
      %v1373 = vpop.f32.mrf.mxu0
      %v1374 = vadd.f32 0.0, %v1373
      %1375 = vmatmul.bf16.gmra.mxu0 %v1350
      %v1376 = vpop.f32.mrf.mxu0
      %v1377 = vadd.f32 0.0, %v1376
      %v1378 = vpop.f32.mrf.mxu0
      %v1379 = vadd.f32 0.0, %v1378
      %1380 = vdwg.mxu0
      %v1381 = vadd.f32 %v1193, %v1362
      %v1382 = vadd.f32 %v1195, %v1364
      %v1383 = vadd.f32 %v1198, %v1367
      %v1384 = vadd.f32 %v1200, %v1369
      %v1385 = vadd.f32 %v1203, %v1372
      %v1386 = vadd.f32 %v1205, %v1374
      %v1387 = vadd.f32 %v1208, %v1377
      %v1388 = vadd.f32 %v1210, %v1379
      %s1389 = scalar_lea.vmem %s3, 192
      %v1390 = vld [vmem:[%s1389] sm:$0xff]
      %v1391 = vld [vmem:[%s1389 + $0x8] sm:$0xff]
      %v1392 = vld [vmem:[%s1389 + $0x10] sm:$0xff]
      %v1393 = vld [vmem:[%s1389 + $0x18] sm:$0xff]
      %v1394 = vld [vmem:[%s1389 + $0x20] sm:$0xff]
      %v1395 = vld [vmem:[%s1389 + $0x28] sm:$0xff]
      %v1396 = vld [vmem:[%s1389 + $0x30] sm:$0xff]
      %v1397 = vld [vmem:[%s1389 + $0x38] sm:$0xff]
      %v1406 = vunpack.c.l.b16 %v1390
      %v1407 = vunpack.c.h.b16 %v1390
      %v1408 = vunpack.c.l.b16 %v1391
      %v1409 = vunpack.c.h.b16 %v1391
      %v1410 = vunpack.c.l.b16 %v1392
      %v1411 = vunpack.c.h.b16 %v1392
      %v1412 = vunpack.c.l.b16 %v1393
      %v1413 = vunpack.c.h.b16 %v1393
      %v1414 = vunpack.c.l.b16 %v1394
      %v1415 = vunpack.c.h.b16 %v1394
      %v1416 = vunpack.c.l.b16 %v1395
      %v1417 = vunpack.c.h.b16 %v1395
      %v1418 = vunpack.c.l.b16 %v1396
      %v1419 = vunpack.c.h.b16 %v1396
      %v1420 = vunpack.c.l.b16 %v1397
      %v1421 = vunpack.c.h.b16 %v1397
      %v1422 = vpack.c.b16 %v1408, %v1406
      %v1423 = vpack.c.b16 %v1409, %v1407
      %v1424 = vpack.c.b16 %v1412, %v1410
      %v1425 = vpack.c.b16 %v1413, %v1411
      %v1426 = vpack.c.b16 %v1416, %v1414
      %v1427 = vpack.c.b16 %v1417, %v1415
      %v1428 = vpack.c.b16 %v1420, %v1418
      %v1429 = vpack.c.b16 %v1421, %v1419
      %1438 = vmatpush.bf16.msra.mxu0 %v867
      %1439 = vmatpush.bf16.msra.mxu0 %v866
      %1440 = vmatpush.bf16.msra.mxu0 %v865
      %1441 = vmatpush.bf16.msra.mxu0 %v864
      %1442 = vmatpush.bf16.msra.mxu0 %v863
      %1443 = vmatpush.bf16.msra.mxu0 %v862
      %1444 = vmatpush.bf16.msra.mxu0 %v861
      %1445 = vmatpush.bf16.msra.mxu0 %v860
      %1446 = vmatmul.bf16.gmra.mxu0 %v1422
      %v1447 = vpop.f32.mrf.mxu0
      %v1448 = vadd.f32 0.0, %v1447
      %v1449 = vpop.f32.mrf.mxu0
      %v1450 = vadd.f32 0.0, %v1449
      %1451 = vmatmul.bf16.gmra.mxu0 %v1424
      %v1452 = vpop.f32.mrf.mxu0
      %v1453 = vadd.f32 0.0, %v1452
      %v1454 = vpop.f32.mrf.mxu0
      %v1455 = vadd.f32 0.0, %v1454
      %1456 = vmatmul.bf16.gmra.mxu0 %v1426
      %v1457 = vpop.f32.mrf.mxu0
      %v1458 = vadd.f32 0.0, %v1457
      %v1459 = vpop.f32.mrf.mxu0
      %v1460 = vadd.f32 0.0, %v1459
      %1461 = vmatmul.bf16.gmra.mxu0 %v1428
      %v1462 = vpop.f32.mrf.mxu0
      %v1463 = vadd.f32 0.0, %v1462
      %v1464 = vpop.f32.mrf.mxu0
      %v1465 = vadd.f32 0.0, %v1464
      %1466 = vdwg.mxu0
      %1467 = vmatpush.bf16.msra.mxu0 %v875
      %1468 = vmatpush.bf16.msra.mxu0 %v874
      %1469 = vmatpush.bf16.msra.mxu0 %v873
      %1470 = vmatpush.bf16.msra.mxu0 %v872
      %1471 = vmatpush.bf16.msra.mxu0 %v871
      %1472 = vmatpush.bf16.msra.mxu0 %v870
      %1473 = vmatpush.bf16.msra.mxu0 %v869
      %1474 = vmatpush.bf16.msra.mxu0 %v868
      %1475 = vmatmul.bf16.gmra.mxu0 %v1423
      %v1476 = vpop.f32.mrf.mxu0
      %v1477 = vadd.f32 %v1448, %v1476
      %v1478 = vpop.f32.mrf.mxu0
      %v1479 = vadd.f32 %v1450, %v1478
      %1480 = vmatmul.bf16.gmra.mxu0 %v1425
      %v1481 = vpop.f32.mrf.mxu0
      %v1482 = vadd.f32 %v1453, %v1481
      %v1483 = vpop.f32.mrf.mxu0
      %v1484 = vadd.f32 %v1455, %v1483
      %1485 = vmatmul.bf16.gmra.mxu0 %v1427
      %v1486 = vpop.f32.mrf.mxu0
      %v1487 = vadd.f32 %v1458, %v1486
      %v1488 = vpop.f32.mrf.mxu0
      %v1489 = vadd.f32 %v1460, %v1488
      %1490 = vmatmul.bf16.gmra.mxu0 %v1429
      %v1491 = vpop.f32.mrf.mxu0
      %v1492 = vadd.f32 %v1463, %v1491
      %v1493 = vpop.f32.mrf.mxu0
      %v1494 = vadd.f32 %v1465, %v1493
      %1495 = vdwg.mxu0
      %v1496 = vpack.c.bf16 %v1479, %v1477
      %v1497 = vpack.c.bf16 %v1484, %v1482
      %v1498 = vpack.c.bf16 %v1489, %v1487
      %v1499 = vpack.c.bf16 %v1494, %v1492
      %s1500 = scalar_lea.vmem %s4, 48
      %v1501 = vld [vmem:[%s1500] sm:$0xf]
      %v1502 = vld [vmem:[%s1500 + $0x4] sm:$0xf]
      %v1503 = vld [vmem:[%s1500 + $0x8] sm:$0xf]
      %v1504 = vld [vmem:[%s1500 + $0xc] sm:$0xf]
      %v1509 = vunpack.c.l.b16 %v1501
      %v1510 = vunpack.c.l.b16 %v1502
      %v1511 = vunpack.c.l.b16 %v1503
      %v1512 = vunpack.c.l.b16 %v1504
      %v1513 = vpack.c.b16 %v1510, %v1509
      %v1514 = vpack.c.b16 %v1512, %v1511
      %v1518 = vsel %vm626, %v1496, 0
      %v1521 = vsel %vm626, %v1497, 0
      %v1524 = vsel %vm626, %v1498, 0
      %v1527 = vsel %vm626, %v1499, 0
      %1529 = vmatpush.bf16.msra.mxu0 0
      %1530 = vmatpush.bf16.msra.mxu0 0
      %1531 = vmatpush.bf16.msra.mxu0 0
      %1532 = vmatpush.bf16.msra.mxu0 0
      %1533 = vmatpush.bf16.msra.mxu0 0
      %1534 = vmatpush.bf16.msra.mxu0 0
      %1535 = vmatpush.bf16.msra.mxu0 %v1514
      %1536 = vmatpush.bf16.msra.mxu0 %v1513
      %1537 = vmatmul.bf16.gmra.mxu0 %v1518
      %v1538 = vpop.f32.mrf.mxu0
      %v1539 = vadd.f32 0.0, %v1538
      %v1540 = vpop.f32.mrf.mxu0
      %v1541 = vadd.f32 0.0, %v1540
      %1542 = vmatmul.bf16.gmra.mxu0 %v1521
      %v1543 = vpop.f32.mrf.mxu0
      %v1544 = vadd.f32 0.0, %v1543
      %v1545 = vpop.f32.mrf.mxu0
      %v1546 = vadd.f32 0.0, %v1545
      %1547 = vmatmul.bf16.gmra.mxu0 %v1524
      %v1548 = vpop.f32.mrf.mxu0
      %v1549 = vadd.f32 0.0, %v1548
      %v1550 = vpop.f32.mrf.mxu0
      %v1551 = vadd.f32 0.0, %v1550
      %1552 = vmatmul.bf16.gmra.mxu0 %v1527
      %v1553 = vpop.f32.mrf.mxu0
      %v1554 = vadd.f32 0.0, %v1553
      %v1555 = vpop.f32.mrf.mxu0
      %v1556 = vadd.f32 0.0, %v1555
      %1557 = vdwg.mxu0
      %v1558 = vadd.f32 %v1381, %v1539
      %v1559 = vadd.f32 %v1382, %v1541
      %v1560 = vadd.f32 %v1383, %v1544
      %v1561 = vadd.f32 %v1384, %v1546
      %v1562 = vadd.f32 %v1385, %v1549
      %v1563 = vadd.f32 %v1386, %v1551
      %v1564 = vadd.f32 %v1387, %v1554
      %v1565 = vadd.f32 %v1388, %v1556
      %s1566 = scalar_lea.vmem %s3, 256
      %v1567 = vld [vmem:[%s1566] sm:$0xff]
      %v1568 = vld [vmem:[%s1566 + $0x8] sm:$0xff]
      %v1569 = vld [vmem:[%s1566 + $0x10] sm:$0xff]
      %v1570 = vld [vmem:[%s1566 + $0x18] sm:$0xff]
      %v1571 = vld [vmem:[%s1566 + $0x20] sm:$0xff]
      %v1572 = vld [vmem:[%s1566 + $0x28] sm:$0xff]
      %v1573 = vld [vmem:[%s1566 + $0x30] sm:$0xff]
      %v1574 = vld [vmem:[%s1566 + $0x38] sm:$0xff]
      %v1583 = vunpack.c.l.b16 %v1567
      %v1584 = vunpack.c.h.b16 %v1567
      %v1585 = vunpack.c.l.b16 %v1568
      %v1586 = vunpack.c.h.b16 %v1568
      %v1587 = vunpack.c.l.b16 %v1569
      %v1588 = vunpack.c.h.b16 %v1569
      %v1589 = vunpack.c.l.b16 %v1570
      %v1590 = vunpack.c.h.b16 %v1570
      %v1591 = vunpack.c.l.b16 %v1571
      %v1592 = vunpack.c.h.b16 %v1571
      %v1593 = vunpack.c.l.b16 %v1572
      %v1594 = vunpack.c.h.b16 %v1572
      %v1595 = vunpack.c.l.b16 %v1573
      %v1596 = vunpack.c.h.b16 %v1573
      %v1597 = vunpack.c.l.b16 %v1574
      %v1598 = vunpack.c.h.b16 %v1574
      %v1599 = vpack.c.b16 %v1585, %v1583
      %v1600 = vpack.c.b16 %v1586, %v1584
      %v1601 = vpack.c.b16 %v1589, %v1587
      %v1602 = vpack.c.b16 %v1590, %v1588
      %v1603 = vpack.c.b16 %v1593, %v1591
      %v1604 = vpack.c.b16 %v1594, %v1592
      %v1605 = vpack.c.b16 %v1597, %v1595
      %v1606 = vpack.c.b16 %v1598, %v1596
      %1615 = vmatpush.bf16.msra.mxu0 %v867
      %1616 = vmatpush.bf16.msra.mxu0 %v866
      %1617 = vmatpush.bf16.msra.mxu0 %v865
      %1618 = vmatpush.bf16.msra.mxu0 %v864
      %1619 = vmatpush.bf16.msra.mxu0 %v863
      %1620 = vmatpush.bf16.msra.mxu0 %v862
      %1621 = vmatpush.bf16.msra.mxu0 %v861
      %1622 = vmatpush.bf16.msra.mxu0 %v860
      %1623 = vmatmul.bf16.gmra.mxu0 %v1599
      %v1624 = vpop.f32.mrf.mxu0
      %v1625 = vadd.f32 0.0, %v1624
      %v1626 = vpop.f32.mrf.mxu0
      %v1627 = vadd.f32 0.0, %v1626
      %1628 = vmatmul.bf16.gmra.mxu0 %v1601
      %v1629 = vpop.f32.mrf.mxu0
      %v1630 = vadd.f32 0.0, %v1629
      %v1631 = vpop.f32.mrf.mxu0
      %v1632 = vadd.f32 0.0, %v1631
      %1633 = vmatmul.bf16.gmra.mxu0 %v1603
      %v1634 = vpop.f32.mrf.mxu0
      %v1635 = vadd.f32 0.0, %v1634
      %v1636 = vpop.f32.mrf.mxu0
      %v1637 = vadd.f32 0.0, %v1636
      %1638 = vmatmul.bf16.gmra.mxu0 %v1605
      %v1639 = vpop.f32.mrf.mxu0
      %v1640 = vadd.f32 0.0, %v1639
      %v1641 = vpop.f32.mrf.mxu0
      %v1642 = vadd.f32 0.0, %v1641
      %1643 = vdwg.mxu0
      %1644 = vmatpush.bf16.msra.mxu0 %v875
      %1645 = vmatpush.bf16.msra.mxu0 %v874
      %1646 = vmatpush.bf16.msra.mxu0 %v873
      %1647 = vmatpush.bf16.msra.mxu0 %v872
      %1648 = vmatpush.bf16.msra.mxu0 %v871
      %1649 = vmatpush.bf16.msra.mxu0 %v870
      %1650 = vmatpush.bf16.msra.mxu0 %v869
      %1651 = vmatpush.bf16.msra.mxu0 %v868
      %1652 = vmatmul.bf16.gmra.mxu0 %v1600
      %v1653 = vpop.f32.mrf.mxu0
      %v1654 = vadd.f32 %v1625, %v1653
      %v1655 = vpop.f32.mrf.mxu0
      %v1656 = vadd.f32 %v1627, %v1655
      %1657 = vmatmul.bf16.gmra.mxu0 %v1602
      %v1658 = vpop.f32.mrf.mxu0
      %v1659 = vadd.f32 %v1630, %v1658
      %v1660 = vpop.f32.mrf.mxu0
      %v1661 = vadd.f32 %v1632, %v1660
      %1662 = vmatmul.bf16.gmra.mxu0 %v1604
      %v1663 = vpop.f32.mrf.mxu0
      %v1664 = vadd.f32 %v1635, %v1663
      %v1665 = vpop.f32.mrf.mxu0
      %v1666 = vadd.f32 %v1637, %v1665
      %1667 = vmatmul.bf16.gmra.mxu0 %v1606
      %v1668 = vpop.f32.mrf.mxu0
      %v1669 = vadd.f32 %v1640, %v1668
      %v1670 = vpop.f32.mrf.mxu0
      %v1671 = vadd.f32 %v1642, %v1670
      %1672 = vdwg.mxu0
      %v1673 = vpack.c.bf16 %v1656, %v1654
      %v1674 = vpack.c.bf16 %v1661, %v1659
      %v1675 = vpack.c.bf16 %v1666, %v1664
      %v1676 = vpack.c.bf16 %v1671, %v1669
      %s1677 = scalar_lea.vmem %s4, 64
      %v1678 = vld [vmem:[%s1677] sm:$0xf]
      %v1679 = vld [vmem:[%s1677 + $0x4] sm:$0xf]
      %v1680 = vld [vmem:[%s1677 + $0x8] sm:$0xf]
      %v1681 = vld [vmem:[%s1677 + $0xc] sm:$0xf]
      %v1686 = vunpack.c.l.b16 %v1678
      %v1687 = vunpack.c.l.b16 %v1679
      %v1688 = vunpack.c.l.b16 %v1680
      %v1689 = vunpack.c.l.b16 %v1681
      %v1690 = vpack.c.b16 %v1687, %v1686
      %v1691 = vpack.c.b16 %v1689, %v1688
      %v1695 = vsel %vm626, %v1673, 0
      %v1698 = vsel %vm626, %v1674, 0
      %v1701 = vsel %vm626, %v1675, 0
      %v1704 = vsel %vm626, %v1676, 0
      %1706 = vmatpush.bf16.msra.mxu0 0
      %1707 = vmatpush.bf16.msra.mxu0 0
      %1708 = vmatpush.bf16.msra.mxu0 0
      %1709 = vmatpush.bf16.msra.mxu0 0
      %1710 = vmatpush.bf16.msra.mxu0 0
      %1711 = vmatpush.bf16.msra.mxu0 0
      %1712 = vmatpush.bf16.msra.mxu0 %v1691
      %1713 = vmatpush.bf16.msra.mxu0 %v1690
      %1714 = vmatmul.bf16.gmra.mxu0 %v1695
      %v1715 = vpop.f32.mrf.mxu0
      %v1716 = vadd.f32 0.0, %v1715
      %v1717 = vpop.f32.mrf.mxu0
      %v1718 = vadd.f32 0.0, %v1717
      %1719 = vmatmul.bf16.gmra.mxu0 %v1698
      %v1720 = vpop.f32.mrf.mxu0
      %v1721 = vadd.f32 0.0, %v1720
      %v1722 = vpop.f32.mrf.mxu0
      %v1723 = vadd.f32 0.0, %v1722
      %1724 = vmatmul.bf16.gmra.mxu0 %v1701
      %v1725 = vpop.f32.mrf.mxu0
      %v1726 = vadd.f32 0.0, %v1725
      %v1727 = vpop.f32.mrf.mxu0
      %v1728 = vadd.f32 0.0, %v1727
      %1729 = vmatmul.bf16.gmra.mxu0 %v1704
      %v1730 = vpop.f32.mrf.mxu0
      %v1731 = vadd.f32 0.0, %v1730
      %v1732 = vpop.f32.mrf.mxu0
      %v1733 = vadd.f32 0.0, %v1732
      %1734 = vdwg.mxu0
      %v1735 = vadd.f32 %v1558, %v1716
      %v1736 = vadd.f32 %v1559, %v1718
      %v1737 = vadd.f32 %v1560, %v1721
      %v1738 = vadd.f32 %v1561, %v1723
      %v1739 = vadd.f32 %v1562, %v1726
      %v1740 = vadd.f32 %v1563, %v1728
      %v1741 = vadd.f32 %v1564, %v1731
      %v1742 = vadd.f32 %v1565, %v1733
      %s1743 = scalar_lea.vmem %s3, 320
      %v1744 = vld [vmem:[%s1743] sm:$0xff]
      %v1745 = vld [vmem:[%s1743 + $0x8] sm:$0xff]
      %v1746 = vld [vmem:[%s1743 + $0x10] sm:$0xff]
      %v1747 = vld [vmem:[%s1743 + $0x18] sm:$0xff]
      %v1748 = vld [vmem:[%s1743 + $0x20] sm:$0xff]
      %v1749 = vld [vmem:[%s1743 + $0x28] sm:$0xff]
      %v1750 = vld [vmem:[%s1743 + $0x30] sm:$0xff]
      %v1751 = vld [vmem:[%s1743 + $0x38] sm:$0xff]
      %v1760 = vunpack.c.l.b16 %v1744
      %v1761 = vunpack.c.h.b16 %v1744
      %v1762 = vunpack.c.l.b16 %v1745
      %v1763 = vunpack.c.h.b16 %v1745
      %v1764 = vunpack.c.l.b16 %v1746
      %v1765 = vunpack.c.h.b16 %v1746
      %v1766 = vunpack.c.l.b16 %v1747
      %v1767 = vunpack.c.h.b16 %v1747
      %v1768 = vunpack.c.l.b16 %v1748
      %v1769 = vunpack.c.h.b16 %v1748
      %v1770 = vunpack.c.l.b16 %v1749
      %v1771 = vunpack.c.h.b16 %v1749
      %v1772 = vunpack.c.l.b16 %v1750
      %v1773 = vunpack.c.h.b16 %v1750
      %v1774 = vunpack.c.l.b16 %v1751
      %v1775 = vunpack.c.h.b16 %v1751
      %v1776 = vpack.c.b16 %v1762, %v1760
      %v1777 = vpack.c.b16 %v1763, %v1761
      %v1778 = vpack.c.b16 %v1766, %v1764
      %v1779 = vpack.c.b16 %v1767, %v1765
      %v1780 = vpack.c.b16 %v1770, %v1768
      %v1781 = vpack.c.b16 %v1771, %v1769
      %v1782 = vpack.c.b16 %v1774, %v1772
      %v1783 = vpack.c.b16 %v1775, %v1773
      %1792 = vmatpush.bf16.msra.mxu0 %v867
      %1793 = vmatpush.bf16.msra.mxu0 %v866
      %1794 = vmatpush.bf16.msra.mxu0 %v865
      %1795 = vmatpush.bf16.msra.mxu0 %v864
      %1796 = vmatpush.bf16.msra.mxu0 %v863
      %1797 = vmatpush.bf16.msra.mxu0 %v862
      %1798 = vmatpush.bf16.msra.mxu0 %v861
      %1799 = vmatpush.bf16.msra.mxu0 %v860
      %1800 = vmatmul.bf16.gmra.mxu0 %v1776
      %v1801 = vpop.f32.mrf.mxu0
      %v1802 = vadd.f32 0.0, %v1801
      %v1803 = vpop.f32.mrf.mxu0
      %v1804 = vadd.f32 0.0, %v1803
      %1805 = vmatmul.bf16.gmra.mxu0 %v1778
      %v1806 = vpop.f32.mrf.mxu0
      %v1807 = vadd.f32 0.0, %v1806
      %v1808 = vpop.f32.mrf.mxu0
      %v1809 = vadd.f32 0.0, %v1808
      %1810 = vmatmul.bf16.gmra.mxu0 %v1780
      %v1811 = vpop.f32.mrf.mxu0
      %v1812 = vadd.f32 0.0, %v1811
      %v1813 = vpop.f32.mrf.mxu0
      %v1814 = vadd.f32 0.0, %v1813
      %1815 = vmatmul.bf16.gmra.mxu0 %v1782
      %v1816 = vpop.f32.mrf.mxu0
      %v1817 = vadd.f32 0.0, %v1816
      %v1818 = vpop.f32.mrf.mxu0
      %v1819 = vadd.f32 0.0, %v1818
      %1820 = vdwg.mxu0
      %1821 = vmatpush.bf16.msra.mxu0 %v875
      %1822 = vmatpush.bf16.msra.mxu0 %v874
      %1823 = vmatpush.bf16.msra.mxu0 %v873
      %1824 = vmatpush.bf16.msra.mxu0 %v872
      %1825 = vmatpush.bf16.msra.mxu0 %v871
      %1826 = vmatpush.bf16.msra.mxu0 %v870
      %1827 = vmatpush.bf16.msra.mxu0 %v869
      %1828 = vmatpush.bf16.msra.mxu0 %v868
      %1829 = vmatmul.bf16.gmra.mxu0 %v1777
      %v1830 = vpop.f32.mrf.mxu0
      %v1831 = vadd.f32 %v1802, %v1830
      %v1832 = vpop.f32.mrf.mxu0
      %v1833 = vadd.f32 %v1804, %v1832
      %1834 = vmatmul.bf16.gmra.mxu0 %v1779
      %v1835 = vpop.f32.mrf.mxu0
      %v1836 = vadd.f32 %v1807, %v1835
      %v1837 = vpop.f32.mrf.mxu0
      %v1838 = vadd.f32 %v1809, %v1837
      %1839 = vmatmul.bf16.gmra.mxu0 %v1781
      %v1840 = vpop.f32.mrf.mxu0
      %v1841 = vadd.f32 %v1812, %v1840
      %v1842 = vpop.f32.mrf.mxu0
      %v1843 = vadd.f32 %v1814, %v1842
      %1844 = vmatmul.bf16.gmra.mxu0 %v1783
      %v1845 = vpop.f32.mrf.mxu0
      %v1846 = vadd.f32 %v1817, %v1845
      %v1847 = vpop.f32.mrf.mxu0
      %v1848 = vadd.f32 %v1819, %v1847
      %1849 = vdwg.mxu0
      %v1850 = vpack.c.bf16 %v1833, %v1831
      %v1851 = vpack.c.bf16 %v1838, %v1836
      %v1852 = vpack.c.bf16 %v1843, %v1841
      %v1853 = vpack.c.bf16 %v1848, %v1846
      %s1854 = scalar_lea.vmem %s4, 80
      %v1855 = vld [vmem:[%s1854] sm:$0xf]
      %v1856 = vld [vmem:[%s1854 + $0x4] sm:$0xf]
      %v1857 = vld [vmem:[%s1854 + $0x8] sm:$0xf]
      %v1858 = vld [vmem:[%s1854 + $0xc] sm:$0xf]
      %v1863 = vunpack.c.l.b16 %v1855
      %v1864 = vunpack.c.l.b16 %v1856
      %v1865 = vunpack.c.l.b16 %v1857
      %v1866 = vunpack.c.l.b16 %v1858
      %v1867 = vpack.c.b16 %v1864, %v1863
      %v1868 = vpack.c.b16 %v1866, %v1865
      %v1872 = vsel %vm626, %v1850, 0
      %v1875 = vsel %vm626, %v1851, 0
      %v1878 = vsel %vm626, %v1852, 0
      %v1881 = vsel %vm626, %v1853, 0
      %1883 = vmatpush.bf16.msra.mxu0 0
      %1884 = vmatpush.bf16.msra.mxu0 0
      %1885 = vmatpush.bf16.msra.mxu0 0
      %1886 = vmatpush.bf16.msra.mxu0 0
      %1887 = vmatpush.bf16.msra.mxu0 0
      %1888 = vmatpush.bf16.msra.mxu0 0
      %1889 = vmatpush.bf16.msra.mxu0 %v1868
      %1890 = vmatpush.bf16.msra.mxu0 %v1867
      %1891 = vmatmul.bf16.gmra.mxu0 %v1872
      %v1892 = vpop.f32.mrf.mxu0
      %v1893 = vadd.f32 0.0, %v1892
      %v1894 = vpop.f32.mrf.mxu0
      %v1895 = vadd.f32 0.0, %v1894
      %1896 = vmatmul.bf16.gmra.mxu0 %v1875
      %v1897 = vpop.f32.mrf.mxu0
      %v1898 = vadd.f32 0.0, %v1897
      %v1899 = vpop.f32.mrf.mxu0
      %v1900 = vadd.f32 0.0, %v1899
      %1901 = vmatmul.bf16.gmra.mxu0 %v1878
      %v1902 = vpop.f32.mrf.mxu0
      %v1903 = vadd.f32 0.0, %v1902
      %v1904 = vpop.f32.mrf.mxu0
      %v1905 = vadd.f32 0.0, %v1904
      %1906 = vmatmul.bf16.gmra.mxu0 %v1881
      %v1907 = vpop.f32.mrf.mxu0
      %v1908 = vadd.f32 0.0, %v1907
      %v1909 = vpop.f32.mrf.mxu0
      %v1910 = vadd.f32 0.0, %v1909
      %1911 = vdwg.mxu0
      %v1912 = vadd.f32 %v1735, %v1893
      %v1913 = vadd.f32 %v1736, %v1895
      %v1914 = vadd.f32 %v1737, %v1898
      %v1915 = vadd.f32 %v1738, %v1900
      %v1916 = vadd.f32 %v1739, %v1903
      %v1917 = vadd.f32 %v1740, %v1905
      %v1918 = vadd.f32 %v1741, %v1908
      %v1919 = vadd.f32 %v1742, %v1910
      %s1920 = scalar_lea.vmem %s3, 384
      %v1921 = vld [vmem:[%s1920] sm:$0xff]
      %v1922 = vld [vmem:[%s1920 + $0x8] sm:$0xff]
      %v1923 = vld [vmem:[%s1920 + $0x10] sm:$0xff]
      %v1924 = vld [vmem:[%s1920 + $0x18] sm:$0xff]
      %v1925 = vld [vmem:[%s1920 + $0x20] sm:$0xff]
      %v1926 = vld [vmem:[%s1920 + $0x28] sm:$0xff]
      %v1927 = vld [vmem:[%s1920 + $0x30] sm:$0xff]
      %v1928 = vld [vmem:[%s1920 + $0x38] sm:$0xff]
      %v1937 = vunpack.c.l.b16 %v1921
      %v1938 = vunpack.c.h.b16 %v1921
      %v1939 = vunpack.c.l.b16 %v1922
      %v1940 = vunpack.c.h.b16 %v1922
      %v1941 = vunpack.c.l.b16 %v1923
      %v1942 = vunpack.c.h.b16 %v1923
      %v1943 = vunpack.c.l.b16 %v1924
      %v1944 = vunpack.c.h.b16 %v1924
      %v1945 = vunpack.c.l.b16 %v1925
      %v1946 = vunpack.c.h.b16 %v1925
      %v1947 = vunpack.c.l.b16 %v1926
      %v1948 = vunpack.c.h.b16 %v1926
      %v1949 = vunpack.c.l.b16 %v1927
      %v1950 = vunpack.c.h.b16 %v1927
      %v1951 = vunpack.c.l.b16 %v1928
      %v1952 = vunpack.c.h.b16 %v1928
      %v1953 = vpack.c.b16 %v1939, %v1937
      %v1954 = vpack.c.b16 %v1940, %v1938
      %v1955 = vpack.c.b16 %v1943, %v1941
      %v1956 = vpack.c.b16 %v1944, %v1942
      %v1957 = vpack.c.b16 %v1947, %v1945
      %v1958 = vpack.c.b16 %v1948, %v1946
      %v1959 = vpack.c.b16 %v1951, %v1949
      %v1960 = vpack.c.b16 %v1952, %v1950
      %1969 = vmatpush.bf16.msra.mxu0 %v867
      %1970 = vmatpush.bf16.msra.mxu0 %v866
      %1971 = vmatpush.bf16.msra.mxu0 %v865
      %1972 = vmatpush.bf16.msra.mxu0 %v864
      %1973 = vmatpush.bf16.msra.mxu0 %v863
      %1974 = vmatpush.bf16.msra.mxu0 %v862
      %1975 = vmatpush.bf16.msra.mxu0 %v861
      %1976 = vmatpush.bf16.msra.mxu0 %v860
      %1977 = vmatmul.bf16.gmra.mxu0 %v1953
      %v1978 = vpop.f32.mrf.mxu0
      %v1979 = vadd.f32 0.0, %v1978
      %v1980 = vpop.f32.mrf.mxu0
      %v1981 = vadd.f32 0.0, %v1980
      %1982 = vmatmul.bf16.gmra.mxu0 %v1955
      %v1983 = vpop.f32.mrf.mxu0
      %v1984 = vadd.f32 0.0, %v1983
      %v1985 = vpop.f32.mrf.mxu0
      %v1986 = vadd.f32 0.0, %v1985
      %1987 = vmatmul.bf16.gmra.mxu0 %v1957
      %v1988 = vpop.f32.mrf.mxu0
      %v1989 = vadd.f32 0.0, %v1988
      %v1990 = vpop.f32.mrf.mxu0
      %v1991 = vadd.f32 0.0, %v1990
      %1992 = vmatmul.bf16.gmra.mxu0 %v1959
      %v1993 = vpop.f32.mrf.mxu0
      %v1994 = vadd.f32 0.0, %v1993
      %v1995 = vpop.f32.mrf.mxu0
      %v1996 = vadd.f32 0.0, %v1995
      %1997 = vdwg.mxu0
      %1998 = vmatpush.bf16.msra.mxu0 %v875
      %1999 = vmatpush.bf16.msra.mxu0 %v874
      %2000 = vmatpush.bf16.msra.mxu0 %v873
      %2001 = vmatpush.bf16.msra.mxu0 %v872
      %2002 = vmatpush.bf16.msra.mxu0 %v871
      %2003 = vmatpush.bf16.msra.mxu0 %v870
      %2004 = vmatpush.bf16.msra.mxu0 %v869
      %2005 = vmatpush.bf16.msra.mxu0 %v868
      %2006 = vmatmul.bf16.gmra.mxu0 %v1954
      %v2007 = vpop.f32.mrf.mxu0
      %v2008 = vadd.f32 %v1979, %v2007
      %v2009 = vpop.f32.mrf.mxu0
      %v2010 = vadd.f32 %v1981, %v2009
      %2011 = vmatmul.bf16.gmra.mxu0 %v1956
      %v2012 = vpop.f32.mrf.mxu0
      %v2013 = vadd.f32 %v1984, %v2012
      %v2014 = vpop.f32.mrf.mxu0
      %v2015 = vadd.f32 %v1986, %v2014
      %2016 = vmatmul.bf16.gmra.mxu0 %v1958
      %v2017 = vpop.f32.mrf.mxu0
      %v2018 = vadd.f32 %v1989, %v2017
      %v2019 = vpop.f32.mrf.mxu0
      %v2020 = vadd.f32 %v1991, %v2019
      %2021 = vmatmul.bf16.gmra.mxu0 %v1960
      %v2022 = vpop.f32.mrf.mxu0
      %v2023 = vadd.f32 %v1994, %v2022
      %v2024 = vpop.f32.mrf.mxu0
      %v2025 = vadd.f32 %v1996, %v2024
      %2026 = vdwg.mxu0
      %v2027 = vpack.c.bf16 %v2010, %v2008
      %v2028 = vpack.c.bf16 %v2015, %v2013
      %v2029 = vpack.c.bf16 %v2020, %v2018
      %v2030 = vpack.c.bf16 %v2025, %v2023
      %s2031 = scalar_lea.vmem %s4, 96
      %v2032 = vld [vmem:[%s2031] sm:$0xf]
      %v2033 = vld [vmem:[%s2031 + $0x4] sm:$0xf]
      %v2034 = vld [vmem:[%s2031 + $0x8] sm:$0xf]
      %v2035 = vld [vmem:[%s2031 + $0xc] sm:$0xf]
      %v2040 = vunpack.c.l.b16 %v2032
      %v2041 = vunpack.c.l.b16 %v2033
      %v2042 = vunpack.c.l.b16 %v2034
      %v2043 = vunpack.c.l.b16 %v2035
      %v2044 = vpack.c.b16 %v2041, %v2040
      %v2045 = vpack.c.b16 %v2043, %v2042
      %v2049 = vsel %vm626, %v2027, 0
      %v2052 = vsel %vm626, %v2028, 0
      %v2055 = vsel %vm626, %v2029, 0
      %v2058 = vsel %vm626, %v2030, 0
      %2060 = vmatpush.bf16.msra.mxu0 0
      %2061 = vmatpush.bf16.msra.mxu0 0
      %2062 = vmatpush.bf16.msra.mxu0 0
      %2063 = vmatpush.bf16.msra.mxu0 0
      %2064 = vmatpush.bf16.msra.mxu0 0
      %2065 = vmatpush.bf16.msra.mxu0 0
      %2066 = vmatpush.bf16.msra.mxu0 %v2045
      %2067 = vmatpush.bf16.msra.mxu0 %v2044
      %2068 = vmatmul.bf16.gmra.mxu0 %v2049
      %v2069 = vpop.f32.mrf.mxu0
      %v2070 = vadd.f32 0.0, %v2069
      %v2071 = vpop.f32.mrf.mxu0
      %v2072 = vadd.f32 0.0, %v2071
      %2073 = vmatmul.bf16.gmra.mxu0 %v2052
      %v2074 = vpop.f32.mrf.mxu0
      %v2075 = vadd.f32 0.0, %v2074
      %v2076 = vpop.f32.mrf.mxu0
      %v2077 = vadd.f32 0.0, %v2076
      %2078 = vmatmul.bf16.gmra.mxu0 %v2055
      %v2079 = vpop.f32.mrf.mxu0
      %v2080 = vadd.f32 0.0, %v2079
      %v2081 = vpop.f32.mrf.mxu0
      %v2082 = vadd.f32 0.0, %v2081
      %2083 = vmatmul.bf16.gmra.mxu0 %v2058
      %v2084 = vpop.f32.mrf.mxu0
      %v2085 = vadd.f32 0.0, %v2084
      %v2086 = vpop.f32.mrf.mxu0
      %v2087 = vadd.f32 0.0, %v2086
      %2088 = vdwg.mxu0
      %v2089 = vadd.f32 %v1912, %v2070
      %v2090 = vadd.f32 %v1913, %v2072
      %v2091 = vadd.f32 %v1914, %v2075
      %v2092 = vadd.f32 %v1915, %v2077
      %v2093 = vadd.f32 %v1916, %v2080
      %v2094 = vadd.f32 %v1917, %v2082
      %v2095 = vadd.f32 %v1918, %v2085
      %v2096 = vadd.f32 %v1919, %v2087
      %s2097 = scalar_lea.vmem %s3, 448
      %v2098 = vld [vmem:[%s2097] sm:$0xff]
      %v2099 = vld [vmem:[%s2097 + $0x8] sm:$0xff]
      %v2100 = vld [vmem:[%s2097 + $0x10] sm:$0xff]
      %v2101 = vld [vmem:[%s2097 + $0x18] sm:$0xff]
      %v2102 = vld [vmem:[%s2097 + $0x20] sm:$0xff]
      %v2103 = vld [vmem:[%s2097 + $0x28] sm:$0xff]
      %v2104 = vld [vmem:[%s2097 + $0x30] sm:$0xff]
      %v2105 = vld [vmem:[%s2097 + $0x38] sm:$0xff]
      %v2114 = vunpack.c.l.b16 %v2098
      %v2115 = vunpack.c.h.b16 %v2098
      %v2116 = vunpack.c.l.b16 %v2099
      %v2117 = vunpack.c.h.b16 %v2099
      %v2118 = vunpack.c.l.b16 %v2100
      %v2119 = vunpack.c.h.b16 %v2100
      %v2120 = vunpack.c.l.b16 %v2101
      %v2121 = vunpack.c.h.b16 %v2101
      %v2122 = vunpack.c.l.b16 %v2102
      %v2123 = vunpack.c.h.b16 %v2102
      %v2124 = vunpack.c.l.b16 %v2103
      %v2125 = vunpack.c.h.b16 %v2103
      %v2126 = vunpack.c.l.b16 %v2104
      %v2127 = vunpack.c.h.b16 %v2104
      %v2128 = vunpack.c.l.b16 %v2105
      %v2129 = vunpack.c.h.b16 %v2105
      %v2130 = vpack.c.b16 %v2116, %v2114
      %v2131 = vpack.c.b16 %v2117, %v2115
      %v2132 = vpack.c.b16 %v2120, %v2118
      %v2133 = vpack.c.b16 %v2121, %v2119
      %v2134 = vpack.c.b16 %v2124, %v2122
      %v2135 = vpack.c.b16 %v2125, %v2123
      %v2136 = vpack.c.b16 %v2128, %v2126
      %v2137 = vpack.c.b16 %v2129, %v2127
      %2146 = vmatpush.bf16.msra.mxu0 %v867
      %2147 = vmatpush.bf16.msra.mxu0 %v866
      %2148 = vmatpush.bf16.msra.mxu0 %v865
      %2149 = vmatpush.bf16.msra.mxu0 %v864
      %2150 = vmatpush.bf16.msra.mxu0 %v863
      %2151 = vmatpush.bf16.msra.mxu0 %v862
      %2152 = vmatpush.bf16.msra.mxu0 %v861
      %2153 = vmatpush.bf16.msra.mxu0 %v860
      %2154 = vmatmul.bf16.gmra.mxu0 %v2130
      %v2155 = vpop.f32.mrf.mxu0
      %v2156 = vadd.f32 0.0, %v2155
      %v2157 = vpop.f32.mrf.mxu0
      %v2158 = vadd.f32 0.0, %v2157
      %2159 = vmatmul.bf16.gmra.mxu0 %v2132
      %v2160 = vpop.f32.mrf.mxu0
      %v2161 = vadd.f32 0.0, %v2160
      %v2162 = vpop.f32.mrf.mxu0
      %v2163 = vadd.f32 0.0, %v2162
      %2164 = vmatmul.bf16.gmra.mxu0 %v2134
      %v2165 = vpop.f32.mrf.mxu0
      %v2166 = vadd.f32 0.0, %v2165
      %v2167 = vpop.f32.mrf.mxu0
      %v2168 = vadd.f32 0.0, %v2167
      %2169 = vmatmul.bf16.gmra.mxu0 %v2136
      %v2170 = vpop.f32.mrf.mxu0
      %v2171 = vadd.f32 0.0, %v2170
      %v2172 = vpop.f32.mrf.mxu0
      %v2173 = vadd.f32 0.0, %v2172
      %2174 = vdwg.mxu0
      %2175 = vmatpush.bf16.msra.mxu0 %v875
      %2176 = vmatpush.bf16.msra.mxu0 %v874
      %2177 = vmatpush.bf16.msra.mxu0 %v873
      %2178 = vmatpush.bf16.msra.mxu0 %v872
      %2179 = vmatpush.bf16.msra.mxu0 %v871
      %2180 = vmatpush.bf16.msra.mxu0 %v870
      %2181 = vmatpush.bf16.msra.mxu0 %v869
      %2182 = vmatpush.bf16.msra.mxu0 %v868
      %2183 = vmatmul.bf16.gmra.mxu0 %v2131
      %v2184 = vpop.f32.mrf.mxu0
      %v2185 = vadd.f32 %v2156, %v2184
      %v2186 = vpop.f32.mrf.mxu0
      %v2187 = vadd.f32 %v2158, %v2186
      %2188 = vmatmul.bf16.gmra.mxu0 %v2133
      %v2189 = vpop.f32.mrf.mxu0
      %v2190 = vadd.f32 %v2161, %v2189
      %v2191 = vpop.f32.mrf.mxu0
      %v2192 = vadd.f32 %v2163, %v2191
      %2193 = vmatmul.bf16.gmra.mxu0 %v2135
      %v2194 = vpop.f32.mrf.mxu0
      %v2195 = vadd.f32 %v2166, %v2194
      %v2196 = vpop.f32.mrf.mxu0
      %v2197 = vadd.f32 %v2168, %v2196
      %2198 = vmatmul.bf16.gmra.mxu0 %v2137
      %v2199 = vpop.f32.mrf.mxu0
      %v2200 = vadd.f32 %v2171, %v2199
      %v2201 = vpop.f32.mrf.mxu0
      %v2202 = vadd.f32 %v2173, %v2201
      %2203 = vdwg.mxu0
      %v2204 = vpack.c.bf16 %v2187, %v2185
      %v2205 = vpack.c.bf16 %v2192, %v2190
      %v2206 = vpack.c.bf16 %v2197, %v2195
      %v2207 = vpack.c.bf16 %v2202, %v2200
      %s2208 = scalar_lea.vmem %s4, 112
      %v2209 = vld [vmem:[%s2208] sm:$0xf]
      %v2210 = vld [vmem:[%s2208 + $0x4] sm:$0xf]
      %v2211 = vld [vmem:[%s2208 + $0x8] sm:$0xf]
      %v2212 = vld [vmem:[%s2208 + $0xc] sm:$0xf]
      %v2217 = vunpack.c.l.b16 %v2209
      %v2218 = vunpack.c.l.b16 %v2210
      %v2219 = vunpack.c.l.b16 %v2211
      %v2220 = vunpack.c.l.b16 %v2212
      %v2221 = vpack.c.b16 %v2218, %v2217
      %v2222 = vpack.c.b16 %v2220, %v2219
      %v2226 = vsel %vm626, %v2204, 0
      %v2229 = vsel %vm626, %v2205, 0
      %v2232 = vsel %vm626, %v2206, 0
      %v2235 = vsel %vm626, %v2207, 0
      %2237 = vmatpush.bf16.msra.mxu0 0
      %2238 = vmatpush.bf16.msra.mxu0 0
      %2239 = vmatpush.bf16.msra.mxu0 0
      %2240 = vmatpush.bf16.msra.mxu0 0
      %2241 = vmatpush.bf16.msra.mxu0 0
      %2242 = vmatpush.bf16.msra.mxu0 0
      %2243 = vmatpush.bf16.msra.mxu0 %v2222
      %2244 = vmatpush.bf16.msra.mxu0 %v2221
      %2245 = vmatmul.bf16.gmra.mxu0 %v2226
      %v2246 = vpop.f32.mrf.mxu0
      %v2247 = vadd.f32 0.0, %v2246
      %v2248 = vpop.f32.mrf.mxu0
      %v2249 = vadd.f32 0.0, %v2248
      %2250 = vmatmul.bf16.gmra.mxu0 %v2229
      %v2251 = vpop.f32.mrf.mxu0
      %v2252 = vadd.f32 0.0, %v2251
      %v2253 = vpop.f32.mrf.mxu0
      %v2254 = vadd.f32 0.0, %v2253
      %2255 = vmatmul.bf16.gmra.mxu0 %v2232
      %v2256 = vpop.f32.mrf.mxu0
      %v2257 = vadd.f32 0.0, %v2256
      %v2258 = vpop.f32.mrf.mxu0
      %v2259 = vadd.f32 0.0, %v2258
      %2260 = vmatmul.bf16.gmra.mxu0 %v2235
      %v2261 = vpop.f32.mrf.mxu0
      %v2262 = vadd.f32 0.0, %v2261
      %v2263 = vpop.f32.mrf.mxu0
      %v2264 = vadd.f32 0.0, %v2263
      %2265 = vdwg.mxu0
      %v2266 = vadd.f32 %v2089, %v2247
      %v2267 = vadd.f32 %v2090, %v2249
      %v2268 = vadd.f32 %v2091, %v2252
      %v2269 = vadd.f32 %v2092, %v2254
      %v2270 = vadd.f32 %v2093, %v2257
      %v2271 = vadd.f32 %v2094, %v2259
      %v2272 = vadd.f32 %v2095, %v2262
      %v2273 = vadd.f32 %v2096, %v2264
      %s2274 = scalar_lea.vmem %s3, 512
      %v2275 = vld [vmem:[%s2274] sm:$0xff]
      %v2276 = vld [vmem:[%s2274 + $0x8] sm:$0xff]
      %v2277 = vld [vmem:[%s2274 + $0x10] sm:$0xff]
      %v2278 = vld [vmem:[%s2274 + $0x18] sm:$0xff]
      %v2279 = vld [vmem:[%s2274 + $0x20] sm:$0xff]
      %v2280 = vld [vmem:[%s2274 + $0x28] sm:$0xff]
      %v2281 = vld [vmem:[%s2274 + $0x30] sm:$0xff]
      %v2282 = vld [vmem:[%s2274 + $0x38] sm:$0xff]
      %v2291 = vunpack.c.l.b16 %v2275
      %v2292 = vunpack.c.h.b16 %v2275
      %v2293 = vunpack.c.l.b16 %v2276
      %v2294 = vunpack.c.h.b16 %v2276
      %v2295 = vunpack.c.l.b16 %v2277
      %v2296 = vunpack.c.h.b16 %v2277
      %v2297 = vunpack.c.l.b16 %v2278
      %v2298 = vunpack.c.h.b16 %v2278
      %v2299 = vunpack.c.l.b16 %v2279
      %v2300 = vunpack.c.h.b16 %v2279
      %v2301 = vunpack.c.l.b16 %v2280
      %v2302 = vunpack.c.h.b16 %v2280
      %v2303 = vunpack.c.l.b16 %v2281
      %v2304 = vunpack.c.h.b16 %v2281
      %v2305 = vunpack.c.l.b16 %v2282
      %v2306 = vunpack.c.h.b16 %v2282
      %v2307 = vpack.c.b16 %v2293, %v2291
      %v2308 = vpack.c.b16 %v2294, %v2292
      %v2309 = vpack.c.b16 %v2297, %v2295
      %v2310 = vpack.c.b16 %v2298, %v2296
      %v2311 = vpack.c.b16 %v2301, %v2299
      %v2312 = vpack.c.b16 %v2302, %v2300
      %v2313 = vpack.c.b16 %v2305, %v2303
      %v2314 = vpack.c.b16 %v2306, %v2304
      %2323 = vmatpush.bf16.msra.mxu0 %v867
      %2324 = vmatpush.bf16.msra.mxu0 %v866
      %2325 = vmatpush.bf16.msra.mxu0 %v865
      %2326 = vmatpush.bf16.msra.mxu0 %v864
      %2327 = vmatpush.bf16.msra.mxu0 %v863
      %2328 = vmatpush.bf16.msra.mxu0 %v862
      %2329 = vmatpush.bf16.msra.mxu0 %v861
      %2330 = vmatpush.bf16.msra.mxu0 %v860
      %2331 = vmatmul.bf16.gmra.mxu0 %v2307
      %v2332 = vpop.f32.mrf.mxu0
      %v2333 = vadd.f32 0.0, %v2332
      %v2334 = vpop.f32.mrf.mxu0
      %v2335 = vadd.f32 0.0, %v2334
      %2336 = vmatmul.bf16.gmra.mxu0 %v2309
      %v2337 = vpop.f32.mrf.mxu0
      %v2338 = vadd.f32 0.0, %v2337
      %v2339 = vpop.f32.mrf.mxu0
      %v2340 = vadd.f32 0.0, %v2339
      %2341 = vmatmul.bf16.gmra.mxu0 %v2311
      %v2342 = vpop.f32.mrf.mxu0
      %v2343 = vadd.f32 0.0, %v2342
      %v2344 = vpop.f32.mrf.mxu0
      %v2345 = vadd.f32 0.0, %v2344
      %2346 = vmatmul.bf16.gmra.mxu0 %v2313
      %v2347 = vpop.f32.mrf.mxu0
      %v2348 = vadd.f32 0.0, %v2347
      %v2349 = vpop.f32.mrf.mxu0
      %v2350 = vadd.f32 0.0, %v2349
      %2351 = vdwg.mxu0
      %2352 = vmatpush.bf16.msra.mxu0 %v875
      %2353 = vmatpush.bf16.msra.mxu0 %v874
      %2354 = vmatpush.bf16.msra.mxu0 %v873
      %2355 = vmatpush.bf16.msra.mxu0 %v872
      %2356 = vmatpush.bf16.msra.mxu0 %v871
      %2357 = vmatpush.bf16.msra.mxu0 %v870
      %2358 = vmatpush.bf16.msra.mxu0 %v869
      %2359 = vmatpush.bf16.msra.mxu0 %v868
      %2360 = vmatmul.bf16.gmra.mxu0 %v2308
      %v2361 = vpop.f32.mrf.mxu0
      %v2362 = vadd.f32 %v2333, %v2361
      %v2363 = vpop.f32.mrf.mxu0
      %v2364 = vadd.f32 %v2335, %v2363
      %2365 = vmatmul.bf16.gmra.mxu0 %v2310
      %v2366 = vpop.f32.mrf.mxu0
      %v2367 = vadd.f32 %v2338, %v2366
      %v2368 = vpop.f32.mrf.mxu0
      %v2369 = vadd.f32 %v2340, %v2368
      %2370 = vmatmul.bf16.gmra.mxu0 %v2312
      %v2371 = vpop.f32.mrf.mxu0
      %v2372 = vadd.f32 %v2343, %v2371
      %v2373 = vpop.f32.mrf.mxu0
      %v2374 = vadd.f32 %v2345, %v2373
      %2375 = vmatmul.bf16.gmra.mxu0 %v2314
      %v2376 = vpop.f32.mrf.mxu0
      %v2377 = vadd.f32 %v2348, %v2376
      %v2378 = vpop.f32.mrf.mxu0
      %v2379 = vadd.f32 %v2350, %v2378
      %2380 = vdwg.mxu0
      %v2381 = vpack.c.bf16 %v2364, %v2362
      %v2382 = vpack.c.bf16 %v2369, %v2367
      %v2383 = vpack.c.bf16 %v2374, %v2372
      %v2384 = vpack.c.bf16 %v2379, %v2377
      %s2385 = scalar_lea.vmem %s4, 128
      %v2386 = vld [vmem:[%s2385] sm:$0xf]
      %v2387 = vld [vmem:[%s2385 + $0x4] sm:$0xf]
      %v2388 = vld [vmem:[%s2385 + $0x8] sm:$0xf]
      %v2389 = vld [vmem:[%s2385 + $0xc] sm:$0xf]
      %v2394 = vunpack.c.l.b16 %v2386
      %v2395 = vunpack.c.l.b16 %v2387
      %v2396 = vunpack.c.l.b16 %v2388
      %v2397 = vunpack.c.l.b16 %v2389
      %v2398 = vpack.c.b16 %v2395, %v2394
      %v2399 = vpack.c.b16 %v2397, %v2396
      %v2403 = vsel %vm626, %v2381, 0
      %v2406 = vsel %vm626, %v2382, 0
      %v2409 = vsel %vm626, %v2383, 0
      %v2412 = vsel %vm626, %v2384, 0
      %2414 = vmatpush.bf16.msra.mxu0 0
      %2415 = vmatpush.bf16.msra.mxu0 0
      %2416 = vmatpush.bf16.msra.mxu0 0
      %2417 = vmatpush.bf16.msra.mxu0 0
      %2418 = vmatpush.bf16.msra.mxu0 0
      %2419 = vmatpush.bf16.msra.mxu0 0
      %2420 = vmatpush.bf16.msra.mxu0 %v2399
      %2421 = vmatpush.bf16.msra.mxu0 %v2398
      %2422 = vmatmul.bf16.gmra.mxu0 %v2403
      %v2423 = vpop.f32.mrf.mxu0
      %v2424 = vadd.f32 0.0, %v2423
      %v2425 = vpop.f32.mrf.mxu0
      %v2426 = vadd.f32 0.0, %v2425
      %2427 = vmatmul.bf16.gmra.mxu0 %v2406
      %v2428 = vpop.f32.mrf.mxu0
      %v2429 = vadd.f32 0.0, %v2428
      %v2430 = vpop.f32.mrf.mxu0
      %v2431 = vadd.f32 0.0, %v2430
      %2432 = vmatmul.bf16.gmra.mxu0 %v2409
      %v2433 = vpop.f32.mrf.mxu0
      %v2434 = vadd.f32 0.0, %v2433
      %v2435 = vpop.f32.mrf.mxu0
      %v2436 = vadd.f32 0.0, %v2435
      %2437 = vmatmul.bf16.gmra.mxu0 %v2412
      %v2438 = vpop.f32.mrf.mxu0
      %v2439 = vadd.f32 0.0, %v2438
      %v2440 = vpop.f32.mrf.mxu0
      %v2441 = vadd.f32 0.0, %v2440
      %2442 = vdwg.mxu0
      %v2443 = vadd.f32 %v2266, %v2424
      %v2444 = vadd.f32 %v2267, %v2426
      %v2445 = vadd.f32 %v2268, %v2429
      %v2446 = vadd.f32 %v2269, %v2431
      %v2447 = vadd.f32 %v2270, %v2434
      %v2448 = vadd.f32 %v2271, %v2436
      %v2449 = vadd.f32 %v2272, %v2439
      %v2450 = vadd.f32 %v2273, %v2441
      %v2451 = vld [vmem:[%s5] sm:$0x1]
      %v2453 = vperm.slane %v2451, 0
      %v2455 = vadd.f32 %v2443, %v2453
      %v2456 = vadd.f32 %v2444, %v2453
      %v2457 = vadd.f32 %v2445, %v2453
      %v2458 = vadd.f32 %v2446, %v2453
      %v2459 = vadd.f32 %v2447, %v2453
      %v2460 = vadd.f32 %v2448, %v2453
      %v2461 = vadd.f32 %v2449, %v2453
      %v2462 = vadd.f32 %v2450, %v2453
      %vm2463 = vcmp.ge.f32.partialorder %v2455, 0.0
      %vm2464 = vcmp.ge.f32.partialorder %v2456, 0.0
      %vm2465 = vcmp.ge.f32.partialorder %v2457, 0.0
      %vm2466 = vcmp.ge.f32.partialorder %v2458, 0.0
      %vm2467 = vcmp.ge.f32.partialorder %v2459, 0.0
      %vm2468 = vcmp.ge.f32.partialorder %v2460, 0.0
      %vm2469 = vcmp.ge.f32.partialorder %v2461, 0.0
      %vm2470 = vcmp.ge.f32.partialorder %v2462, 0.0
      %v2471 = vmul.f32 %v2455, 0.25
      %v2472 = vmul.f32 %v2456, 0.25
      %v2473 = vmul.f32 %v2457, 0.25
      %v2474 = vmul.f32 %v2458, 0.25
      %v2475 = vmul.f32 %v2459, 0.25
      %v2476 = vmul.f32 %v2460, 0.25
      %v2477 = vmul.f32 %v2461, 0.25
      %v2478 = vmul.f32 %v2462, 0.25
      %v2479 = vsel %vm2463, %v2455, %v2471
      %v2480 = vsel %vm2464, %v2456, %v2472
      %v2481 = vsel %vm2465, %v2457, %v2473
      %v2482 = vsel %vm2466, %v2458, %v2474
      %v2483 = vsel %vm2467, %v2459, %v2475
      %v2484 = vsel %vm2468, %v2460, %v2476
      %v2485 = vsel %vm2469, %v2461, %v2477
      %v2486 = vsel %vm2470, %v2462, %v2478
      %v2487 = vpack.c.bf16 %v2480, %v2479
      %v2488 = vpack.c.bf16 %v2482, %v2481
      %v2489 = vpack.c.bf16 %v2484, %v2483
      %v2490 = vpack.c.bf16 %v2486, %v2485
      %v2491 = vld [vmem:[%s6] sm:$0xf]
      %v2492 = vld [vmem:[%s6 + $0x4] sm:$0xf]
      %v2493 = vld [vmem:[%s6 + $0x8] sm:$0xf]
      %v2494 = vld [vmem:[%s6 + $0xc] sm:$0x1]
      %v2495 = vld [vmem:[%s7] sm:$0xff]
      %v2496 = vld [vmem:[%s7 + $0x8] sm:$0xff]
      %v2497 = vld [vmem:[%s7 + $0x10] sm:$0xff]
      %v2498 = vld [vmem:[%s7 + $0x18] sm:$0x1]
      %v2503 = vunpack.c.l.b16 %v2491
      %v2504 = vunpack.c.l.b16 %v2492
      %v2505 = vunpack.c.l.b16 %v2493
      %v2506 = vunpack.c.l.b16 %v2494
      %v2507 = vpack.c.b16 %v2504, %v2503
      %v2508 = vpack.c.b16 %v2506, %v2505
      %vm2509 = vcmask 523264
      %v2511 = vsel %vm2509, %v2507, 0
      %v2514 = vsel %vm2509, %v2508, 0
      %2516 = vmatpush.bf16.msra.mxu0 0
      %2517 = vmatpush.bf16.msra.mxu0 0
      %2518 = vmatpush.bf16.msra.mxu0 0
      %2519 = vmatpush.bf16.msra.mxu0 0
      %2520 = vmatpush.bf16.msra.mxu0 %v2490
      %2521 = vmatpush.bf16.msra.mxu0 %v2489
      %2522 = vmatpush.bf16.msra.mxu0 %v2488
      %2523 = vmatpush.bf16.msra.mxu0 %v2487
      %2524 = vmatmul.bf16.gmra.mxu0 %v2511
      %v2525 = vpop.f32.mrf.mxu0
      %v2526 = vadd.f32 %v2495, %v2525
      %v2527 = vpop.f32.mrf.mxu0
      %v2528 = vadd.f32 %v2496, %v2527
      %2529 = vmatmul.bf16.gmra.mxu0 %v2514
      %v2530 = vpop.f32.mrf.mxu0
      %v2531 = vadd.f32 %v2497, %v2530
      %v2532 = vpop.f32.mrf.mxu0
      %v2533 = vadd.f32 %v2498, %v2532
      %2534 = vdwg.mxu0
      %v2535 = vpack.c.bf16 %v2528, %v2526
      %v2536 = vpack.c.bf16 %v2533, %v2531
      %v2537 = vld [vmem:[%s8] sm:$0xf]
      %v2538 = vld [vmem:[%s8 + $0x4] sm:$0xf]
      %v2539 = vld [vmem:[%s8 + $0x8] sm:$0xf]
      %v2540 = vld [vmem:[%s8 + $0xc] sm:$0xf]
      %v2541 = vld [vmem:[%s8 + $0x10] sm:$0xf]
      %v2542 = vld [vmem:[%s8 + $0x14] sm:$0xf]
      %v2543 = vld [vmem:[%s8 + $0x18] sm:$0xf]
      %v2544 = vld [vmem:[%s8 + $0x1c] sm:$0xf]
      %s2545 = scalar_lea.vmem %s6, 16
      %v2546 = vld [vmem:[%s2545] sm:$0xf]
      %v2547 = vld [vmem:[%s2545 + $0x4] sm:$0xf]
      %v2548 = vld [vmem:[%s2545 + $0x8] sm:$0xf]
      %v2549 = vld [vmem:[%s2545 + $0xc] sm:$0x1]
      %s2550 = scalar_lea.vmem %s7, 32
      %v2551 = vld [vmem:[%s2550] sm:$0xff]
      %v2552 = vld [vmem:[%s2550 + $0x8] sm:$0xff]
      %v2553 = vld [vmem:[%s2550 + $0x10] sm:$0xff]
      %v2554 = vld [vmem:[%s2550 + $0x18] sm:$0x1]
      %v2559 = vunpack.c.l.b16 %v2546
      %v2560 = vunpack.c.l.b16 %v2547
      %v2561 = vunpack.c.l.b16 %v2548
      %v2562 = vunpack.c.l.b16 %v2549
      %v2563 = vpack.c.b16 %v2560, %v2559
      %v2564 = vpack.c.b16 %v2562, %v2561
      %v2566 = vsel %vm2509, %v2563, 0
      %v2569 = vsel %vm2509, %v2564, 0
      %2571 = vmatpush.bf16.msra.mxu0 0
      %2572 = vmatpush.bf16.msra.mxu0 0
      %2573 = vmatpush.bf16.msra.mxu0 0
      %2574 = vmatpush.bf16.msra.mxu0 0
      %2575 = vmatpush.bf16.msra.mxu0 %v2490
      %2576 = vmatpush.bf16.msra.mxu0 %v2489
      %2577 = vmatpush.bf16.msra.mxu0 %v2488
      %2578 = vmatpush.bf16.msra.mxu0 %v2487
      %2579 = vmatmul.bf16.gmra.mxu0 %v2566
      %v2580 = vpop.f32.mrf.mxu0
      %v2581 = vadd.f32 %v2551, %v2580
      %v2582 = vpop.f32.mrf.mxu0
      %v2583 = vadd.f32 %v2552, %v2582
      %2584 = vmatmul.bf16.gmra.mxu0 %v2569
      %v2585 = vpop.f32.mrf.mxu0
      %v2586 = vadd.f32 %v2553, %v2585
      %v2587 = vpop.f32.mrf.mxu0
      %v2588 = vadd.f32 %v2554, %v2587
      %2589 = vdwg.mxu0
      %v2590 = vpack.c.bf16 %v2583, %v2581
      %v2591 = vpack.c.bf16 %v2588, %v2586
      %s2592 = scalar_lea.vmem %s8, 32
      %v2593 = vld [vmem:[%s2592] sm:$0xf]
      %v2594 = vld [vmem:[%s2592 + $0x4] sm:$0xf]
      %v2595 = vld [vmem:[%s2592 + $0x8] sm:$0xf]
      %v2596 = vld [vmem:[%s2592 + $0xc] sm:$0xf]
      %v2597 = vld [vmem:[%s2592 + $0x10] sm:$0xf]
      %v2598 = vld [vmem:[%s2592 + $0x14] sm:$0xf]
      %v2599 = vld [vmem:[%s2592 + $0x18] sm:$0xf]
      %v2600 = vld [vmem:[%s2592 + $0x1c] sm:$0xf]
      %v2609 = vunpack.c.l.b16 %v2593
      %v2610 = vunpack.c.l.b16 %v2594
      %v2611 = vunpack.c.l.b16 %v2595
      %v2612 = vunpack.c.l.b16 %v2596
      %v2613 = vunpack.c.l.b16 %v2597
      %v2614 = vunpack.c.l.b16 %v2598
      %v2615 = vunpack.c.l.b16 %v2599
      %v2616 = vunpack.c.l.b16 %v2600
      %v2617 = vpack.c.b16 %v2610, %v2609
      %v2618 = vpack.c.b16 %v2612, %v2611
      %v2619 = vpack.c.b16 %v2614, %v2613
      %v2620 = vpack.c.b16 %v2616, %v2615
      %v2626 = vsel %vm2509, %v2590, 0
      %v2629 = vsel %vm2509, %v2591, 0
      %2631 = vmatpush.bf16.msra.mxu0 0
      %2632 = vmatpush.bf16.msra.mxu0 0
      %2633 = vmatpush.bf16.msra.mxu0 0
      %2634 = vmatpush.bf16.msra.mxu0 0
      %2635 = vmatpush.bf16.msra.mxu0 %v2620
      %2636 = vmatpush.bf16.msra.mxu0 %v2619
      %2637 = vmatpush.bf16.msra.mxu0 %v2618
      %2638 = vmatpush.bf16.msra.mxu0 %v2617
      %2639 = vmatmul.bf16.gmra.mxu0 %v2626
      %v2640 = vpop.f32.mrf.mxu0
      %v2641 = vadd.f32 0.0, %v2640
      %v2642 = vpop.f32.mrf.mxu0
      %v2643 = vadd.f32 0.0, %v2642
      %2644 = vmatmul.bf16.gmra.mxu0 %v2629
      %v2645 = vpop.f32.mrf.mxu0
      %v2646 = vadd.f32 0.0, %v2645
      %v2647 = vpop.f32.mrf.mxu0
      %v2648 = vadd.f32 0.0, %v2647
      %2649 = vdwg.mxu0
      %v2658 = vunpack.c.l.b16 %v2537
      %v2659 = vunpack.c.l.b16 %v2538
      %v2660 = vunpack.c.l.b16 %v2539
      %v2661 = vunpack.c.l.b16 %v2540
      %v2662 = vunpack.c.l.b16 %v2541
      %v2663 = vunpack.c.l.b16 %v2542
      %v2664 = vunpack.c.l.b16 %v2543
      %v2665 = vunpack.c.l.b16 %v2544
      %v2666 = vpack.c.b16 %v2659, %v2658
      %v2667 = vpack.c.b16 %v2661, %v2660
      %v2668 = vpack.c.b16 %v2663, %v2662
      %v2669 = vpack.c.b16 %v2665, %v2664
      %v2675 = vsel %vm2509, %v2535, 0
      %v2678 = vsel %vm2509, %v2536, 0
      %2680 = vmatpush.bf16.msra.mxu0 0
      %2681 = vmatpush.bf16.msra.mxu0 0
      %2682 = vmatpush.bf16.msra.mxu0 0
      %2683 = vmatpush.bf16.msra.mxu0 0
      %2684 = vmatpush.bf16.msra.mxu0 %v2669
      %2685 = vmatpush.bf16.msra.mxu0 %v2668
      %2686 = vmatpush.bf16.msra.mxu0 %v2667
      %2687 = vmatpush.bf16.msra.mxu0 %v2666
      %2688 = vmatmul.bf16.gmra.mxu0 %v2675
      %v2689 = vpop.f32.mrf.mxu0
      %v2690 = vadd.f32 %v2641, %v2689
      %v2691 = vpop.f32.mrf.mxu0
      %v2692 = vadd.f32 %v2643, %v2691
      %2693 = vmatmul.bf16.gmra.mxu0 %v2678
      %v2694 = vpop.f32.mrf.mxu0
      %v2695 = vadd.f32 %v2646, %v2694
      %v2696 = vpop.f32.mrf.mxu0
      %v2697 = vadd.f32 %v2648, %v2696
      %2698 = vdwg.mxu0
      %s2699 = scalar_lea.vmem %s6, 32
      %v2700 = vld [vmem:[%s2699] sm:$0xf]
      %v2701 = vld [vmem:[%s2699 + $0x4] sm:$0xf]
      %v2702 = vld [vmem:[%s2699 + $0x8] sm:$0xf]
      %v2703 = vld [vmem:[%s2699 + $0xc] sm:$0x1]
      %s2704 = scalar_lea.vmem %s7, 64
      %v2705 = vld [vmem:[%s2704] sm:$0xff]
      %v2706 = vld [vmem:[%s2704 + $0x8] sm:$0xff]
      %v2707 = vld [vmem:[%s2704 + $0x10] sm:$0xff]
      %v2708 = vld [vmem:[%s2704 + $0x18] sm:$0x1]
      %v2713 = vunpack.c.l.b16 %v2700
      %v2714 = vunpack.c.l.b16 %v2701
      %v2715 = vunpack.c.l.b16 %v2702
      %v2716 = vunpack.c.l.b16 %v2703
      %v2717 = vpack.c.b16 %v2714, %v2713
      %v2718 = vpack.c.b16 %v2716, %v2715
      %v2720 = vsel %vm2509, %v2717, 0
      %v2723 = vsel %vm2509, %v2718, 0
      %2725 = vmatpush.bf16.msra.mxu0 0
      %2726 = vmatpush.bf16.msra.mxu0 0
      %2727 = vmatpush.bf16.msra.mxu0 0
      %2728 = vmatpush.bf16.msra.mxu0 0
      %2729 = vmatpush.bf16.msra.mxu0 %v2490
      %2730 = vmatpush.bf16.msra.mxu0 %v2489
      %2731 = vmatpush.bf16.msra.mxu0 %v2488
      %2732 = vmatpush.bf16.msra.mxu0 %v2487
      %2733 = vmatmul.bf16.gmra.mxu0 %v2720
      %v2734 = vpop.f32.mrf.mxu0
      %v2735 = vadd.f32 %v2705, %v2734
      %v2736 = vpop.f32.mrf.mxu0
      %v2737 = vadd.f32 %v2706, %v2736
      %2738 = vmatmul.bf16.gmra.mxu0 %v2723
      %v2739 = vpop.f32.mrf.mxu0
      %v2740 = vadd.f32 %v2707, %v2739
      %v2741 = vpop.f32.mrf.mxu0
      %v2742 = vadd.f32 %v2708, %v2741
      %2743 = vdwg.mxu0
      %v2744 = vpack.c.bf16 %v2737, %v2735
      %v2745 = vpack.c.bf16 %v2742, %v2740
      %s2746 = scalar_lea.vmem %s8, 64
      %v2747 = vld [vmem:[%s2746] sm:$0xf]
      %v2748 = vld [vmem:[%s2746 + $0x4] sm:$0xf]
      %v2749 = vld [vmem:[%s2746 + $0x8] sm:$0xf]
      %v2750 = vld [vmem:[%s2746 + $0xc] sm:$0xf]
      %v2751 = vld [vmem:[%s2746 + $0x10] sm:$0xf]
      %v2752 = vld [vmem:[%s2746 + $0x14] sm:$0xf]
      %v2753 = vld [vmem:[%s2746 + $0x18] sm:$0xf]
      %v2754 = vld [vmem:[%s2746 + $0x1c] sm:$0xf]
      %v2763 = vunpack.c.l.b16 %v2747
      %v2764 = vunpack.c.l.b16 %v2748
      %v2765 = vunpack.c.l.b16 %v2749
      %v2766 = vunpack.c.l.b16 %v2750
      %v2767 = vunpack.c.l.b16 %v2751
      %v2768 = vunpack.c.l.b16 %v2752
      %v2769 = vunpack.c.l.b16 %v2753
      %v2770 = vunpack.c.l.b16 %v2754
      %v2771 = vpack.c.b16 %v2764, %v2763
      %v2772 = vpack.c.b16 %v2766, %v2765
      %v2773 = vpack.c.b16 %v2768, %v2767
      %v2774 = vpack.c.b16 %v2770, %v2769
      %v2780 = vsel %vm2509, %v2744, 0
      %v2783 = vsel %vm2509, %v2745, 0
      %2785 = vmatpush.bf16.msra.mxu0 0
      %2786 = vmatpush.bf16.msra.mxu0 0
      %2787 = vmatpush.bf16.msra.mxu0 0
      %2788 = vmatpush.bf16.msra.mxu0 0
      %2789 = vmatpush.bf16.msra.mxu0 %v2774
      %2790 = vmatpush.bf16.msra.mxu0 %v2773
      %2791 = vmatpush.bf16.msra.mxu0 %v2772
      %2792 = vmatpush.bf16.msra.mxu0 %v2771
      %2793 = vmatmul.bf16.gmra.mxu0 %v2780
      %v2794 = vpop.f32.mrf.mxu0
      %v2795 = vadd.f32 0.0, %v2794
      %v2796 = vpop.f32.mrf.mxu0
      %v2797 = vadd.f32 0.0, %v2796
      %2798 = vmatmul.bf16.gmra.mxu0 %v2783
      %v2799 = vpop.f32.mrf.mxu0
      %v2800 = vadd.f32 0.0, %v2799
      %v2801 = vpop.f32.mrf.mxu0
      %v2802 = vadd.f32 0.0, %v2801
      %2803 = vdwg.mxu0
      %v2804 = vadd.f32 %v2690, %v2795
      %v2805 = vadd.f32 %v2692, %v2797
      %v2806 = vadd.f32 %v2695, %v2800
      %v2807 = vadd.f32 %v2697, %v2802
      %s2808 = scalar_lea.vmem %s6, 48
      %v2809 = vld [vmem:[%s2808] sm:$0xf]
      %v2810 = vld [vmem:[%s2808 + $0x4] sm:$0xf]
      %v2811 = vld [vmem:[%s2808 + $0x8] sm:$0xf]
      %v2812 = vld [vmem:[%s2808 + $0xc] sm:$0x1]
      %s2813 = scalar_lea.vmem %s7, 96
      %v2814 = vld [vmem:[%s2813] sm:$0xff]
      %v2815 = vld [vmem:[%s2813 + $0x8] sm:$0xff]
      %v2816 = vld [vmem:[%s2813 + $0x10] sm:$0xff]
      %v2817 = vld [vmem:[%s2813 + $0x18] sm:$0x1]
      %v2822 = vunpack.c.l.b16 %v2809
      %v2823 = vunpack.c.l.b16 %v2810
      %v2824 = vunpack.c.l.b16 %v2811
      %v2825 = vunpack.c.l.b16 %v2812
      %v2826 = vpack.c.b16 %v2823, %v2822
      %v2827 = vpack.c.b16 %v2825, %v2824
      %v2829 = vsel %vm2509, %v2826, 0
      %v2832 = vsel %vm2509, %v2827, 0
      %2834 = vmatpush.bf16.msra.mxu0 0
      %2835 = vmatpush.bf16.msra.mxu0 0
      %2836 = vmatpush.bf16.msra.mxu0 0
      %2837 = vmatpush.bf16.msra.mxu0 0
      %2838 = vmatpush.bf16.msra.mxu0 %v2490
      %2839 = vmatpush.bf16.msra.mxu0 %v2489
      %2840 = vmatpush.bf16.msra.mxu0 %v2488
      %2841 = vmatpush.bf16.msra.mxu0 %v2487
      %2842 = vmatmul.bf16.gmra.mxu0 %v2829
      %v2843 = vpop.f32.mrf.mxu0
      %v2844 = vadd.f32 %v2814, %v2843
      %v2845 = vpop.f32.mrf.mxu0
      %v2846 = vadd.f32 %v2815, %v2845
      %2847 = vmatmul.bf16.gmra.mxu0 %v2832
      %v2848 = vpop.f32.mrf.mxu0
      %v2849 = vadd.f32 %v2816, %v2848
      %v2850 = vpop.f32.mrf.mxu0
      %v2851 = vadd.f32 %v2817, %v2850
      %2852 = vdwg.mxu0
      %v2853 = vpack.c.bf16 %v2846, %v2844
      %v2854 = vpack.c.bf16 %v2851, %v2849
      %s2855 = scalar_lea.vmem %s8, 96
      %v2856 = vld [vmem:[%s2855] sm:$0xf]
      %v2857 = vld [vmem:[%s2855 + $0x4] sm:$0xf]
      %v2858 = vld [vmem:[%s2855 + $0x8] sm:$0xf]
      %v2859 = vld [vmem:[%s2855 + $0xc] sm:$0xf]
      %v2860 = vld [vmem:[%s2855 + $0x10] sm:$0xf]
      %v2861 = vld [vmem:[%s2855 + $0x14] sm:$0xf]
      %v2862 = vld [vmem:[%s2855 + $0x18] sm:$0xf]
      %v2863 = vld [vmem:[%s2855 + $0x1c] sm:$0xf]
      %v2872 = vunpack.c.l.b16 %v2856
      %v2873 = vunpack.c.l.b16 %v2857
      %v2874 = vunpack.c.l.b16 %v2858
      %v2875 = vunpack.c.l.b16 %v2859
      %v2876 = vunpack.c.l.b16 %v2860
      %v2877 = vunpack.c.l.b16 %v2861
      %v2878 = vunpack.c.l.b16 %v2862
      %v2879 = vunpack.c.l.b16 %v2863
      %v2880 = vpack.c.b16 %v2873, %v2872
      %v2881 = vpack.c.b16 %v2875, %v2874
      %v2882 = vpack.c.b16 %v2877, %v2876
      %v2883 = vpack.c.b16 %v2879, %v2878
      %v2889 = vsel %vm2509, %v2853, 0
      %v2892 = vsel %vm2509, %v2854, 0
      %2894 = vmatpush.bf16.msra.mxu0 0
      %2895 = vmatpush.bf16.msra.mxu0 0
      %2896 = vmatpush.bf16.msra.mxu0 0
      %2897 = vmatpush.bf16.msra.mxu0 0
      %2898 = vmatpush.bf16.msra.mxu0 %v2883
      %2899 = vmatpush.bf16.msra.mxu0 %v2882
      %2900 = vmatpush.bf16.msra.mxu0 %v2881
      %2901 = vmatpush.bf16.msra.mxu0 %v2880
      %2902 = vmatmul.bf16.gmra.mxu0 %v2889
      %v2903 = vpop.f32.mrf.mxu0
      %v2904 = vadd.f32 0.0, %v2903
      %v2905 = vpop.f32.mrf.mxu0
      %v2906 = vadd.f32 0.0, %v2905
      %2907 = vmatmul.bf16.gmra.mxu0 %v2892
      %v2908 = vpop.f32.mrf.mxu0
      %v2909 = vadd.f32 0.0, %v2908
      %v2910 = vpop.f32.mrf.mxu0
      %v2911 = vadd.f32 0.0, %v2910
      %2912 = vdwg.mxu0
      %v2913 = vadd.f32 %v2804, %v2904
      %v2914 = vadd.f32 %v2805, %v2906
      %v2915 = vadd.f32 %v2806, %v2909
      %v2916 = vadd.f32 %v2807, %v2911
      %s2917 = scalar_lea.vmem %s6, 64
      %v2918 = vld [vmem:[%s2917] sm:$0xf]
      %v2919 = vld [vmem:[%s2917 + $0x4] sm:$0xf]
      %v2920 = vld [vmem:[%s2917 + $0x8] sm:$0xf]
      %v2921 = vld [vmem:[%s2917 + $0xc] sm:$0x1]
      %s2922 = scalar_lea.vmem %s7, 128
      %v2923 = vld [vmem:[%s2922] sm:$0xff]
      %v2924 = vld [vmem:[%s2922 + $0x8] sm:$0xff]
      %v2925 = vld [vmem:[%s2922 + $0x10] sm:$0xff]
      %v2926 = vld [vmem:[%s2922 + $0x18] sm:$0x1]
      %v2931 = vunpack.c.l.b16 %v2918
      %v2932 = vunpack.c.l.b16 %v2919
      %v2933 = vunpack.c.l.b16 %v2920
      %v2934 = vunpack.c.l.b16 %v2921
      %v2935 = vpack.c.b16 %v2932, %v2931
      %v2936 = vpack.c.b16 %v2934, %v2933
      %v2938 = vsel %vm2509, %v2935, 0
      %v2941 = vsel %vm2509, %v2936, 0
      %2943 = vmatpush.bf16.msra.mxu0 0
      %2944 = vmatpush.bf16.msra.mxu0 0
      %2945 = vmatpush.bf16.msra.mxu0 0
      %2946 = vmatpush.bf16.msra.mxu0 0
      %2947 = vmatpush.bf16.msra.mxu0 %v2490
      %2948 = vmatpush.bf16.msra.mxu0 %v2489
      %2949 = vmatpush.bf16.msra.mxu0 %v2488
      %2950 = vmatpush.bf16.msra.mxu0 %v2487
      %2951 = vmatmul.bf16.gmra.mxu0 %v2938
      %v2952 = vpop.f32.mrf.mxu0
      %v2953 = vadd.f32 %v2923, %v2952
      %v2954 = vpop.f32.mrf.mxu0
      %v2955 = vadd.f32 %v2924, %v2954
      %2956 = vmatmul.bf16.gmra.mxu0 %v2941
      %v2957 = vpop.f32.mrf.mxu0
      %v2958 = vadd.f32 %v2925, %v2957
      %v2959 = vpop.f32.mrf.mxu0
      %v2960 = vadd.f32 %v2926, %v2959
      %2961 = vdwg.mxu0
      %v2962 = vpack.c.bf16 %v2955, %v2953
      %v2963 = vpack.c.bf16 %v2960, %v2958
      %s2964 = scalar_lea.vmem %s8, 128
      %v2965 = vld [vmem:[%s2964] sm:$0xf]
      %v2966 = vld [vmem:[%s2964 + $0x4] sm:$0xf]
      %v2967 = vld [vmem:[%s2964 + $0x8] sm:$0xf]
      %v2968 = vld [vmem:[%s2964 + $0xc] sm:$0xf]
      %v2969 = vld [vmem:[%s2964 + $0x10] sm:$0xf]
      %v2970 = vld [vmem:[%s2964 + $0x14] sm:$0xf]
      %v2971 = vld [vmem:[%s2964 + $0x18] sm:$0xf]
      %v2972 = vld [vmem:[%s2964 + $0x1c] sm:$0xf]
      %v2981 = vunpack.c.l.b16 %v2965
      %v2982 = vunpack.c.l.b16 %v2966
      %v2983 = vunpack.c.l.b16 %v2967
      %v2984 = vunpack.c.l.b16 %v2968
      %v2985 = vunpack.c.l.b16 %v2969
      %v2986 = vunpack.c.l.b16 %v2970
      %v2987 = vunpack.c.l.b16 %v2971
      %v2988 = vunpack.c.l.b16 %v2972
      %v2989 = vpack.c.b16 %v2982, %v2981
      %v2990 = vpack.c.b16 %v2984, %v2983
      %v2991 = vpack.c.b16 %v2986, %v2985
      %v2992 = vpack.c.b16 %v2988, %v2987
      %v2998 = vsel %vm2509, %v2962, 0
      %v3001 = vsel %vm2509, %v2963, 0
      %3003 = vmatpush.bf16.msra.mxu0 0
      %3004 = vmatpush.bf16.msra.mxu0 0
      %3005 = vmatpush.bf16.msra.mxu0 0
      %3006 = vmatpush.bf16.msra.mxu0 0
      %3007 = vmatpush.bf16.msra.mxu0 %v2992
      %3008 = vmatpush.bf16.msra.mxu0 %v2991
      %3009 = vmatpush.bf16.msra.mxu0 %v2990
      %3010 = vmatpush.bf16.msra.mxu0 %v2989
      %3011 = vmatmul.bf16.gmra.mxu0 %v2998
      %v3012 = vpop.f32.mrf.mxu0
      %v3013 = vadd.f32 0.0, %v3012
      %v3014 = vpop.f32.mrf.mxu0
      %v3015 = vadd.f32 0.0, %v3014
      %3016 = vmatmul.bf16.gmra.mxu0 %v3001
      %v3017 = vpop.f32.mrf.mxu0
      %v3018 = vadd.f32 0.0, %v3017
      %v3019 = vpop.f32.mrf.mxu0
      %v3020 = vadd.f32 0.0, %v3019
      %3021 = vdwg.mxu0
      %v3022 = vadd.f32 %v2913, %v3013
      %v3023 = vadd.f32 %v2914, %v3015
      %v3024 = vadd.f32 %v2915, %v3018
      %v3025 = vadd.f32 %v2916, %v3020
      %s3026 = scalar_lea.vmem %s6, 80
      %v3027 = vld [vmem:[%s3026] sm:$0xf]
      %v3028 = vld [vmem:[%s3026 + $0x4] sm:$0xf]
      %v3029 = vld [vmem:[%s3026 + $0x8] sm:$0xf]
      %v3030 = vld [vmem:[%s3026 + $0xc] sm:$0x1]
      %s3031 = scalar_lea.vmem %s7, 160
      %v3032 = vld [vmem:[%s3031] sm:$0xff]
      %v3033 = vld [vmem:[%s3031 + $0x8] sm:$0xff]
      %v3034 = vld [vmem:[%s3031 + $0x10] sm:$0xff]
      %v3035 = vld [vmem:[%s3031 + $0x18] sm:$0x1]
      %v3040 = vunpack.c.l.b16 %v3027
      %v3041 = vunpack.c.l.b16 %v3028
      %v3042 = vunpack.c.l.b16 %v3029
      %v3043 = vunpack.c.l.b16 %v3030
      %v3044 = vpack.c.b16 %v3041, %v3040
      %v3045 = vpack.c.b16 %v3043, %v3042
      %v3047 = vsel %vm2509, %v3044, 0
      %v3050 = vsel %vm2509, %v3045, 0
      %3052 = vmatpush.bf16.msra.mxu0 0
      %3053 = vmatpush.bf16.msra.mxu0 0
      %3054 = vmatpush.bf16.msra.mxu0 0
      %3055 = vmatpush.bf16.msra.mxu0 0
      %3056 = vmatpush.bf16.msra.mxu0 %v2490
      %3057 = vmatpush.bf16.msra.mxu0 %v2489
      %3058 = vmatpush.bf16.msra.mxu0 %v2488
      %3059 = vmatpush.bf16.msra.mxu0 %v2487
      %3060 = vmatmul.bf16.gmra.mxu0 %v3047
      %v3061 = vpop.f32.mrf.mxu0
      %v3062 = vadd.f32 %v3032, %v3061
      %v3063 = vpop.f32.mrf.mxu0
      %v3064 = vadd.f32 %v3033, %v3063
      %3065 = vmatmul.bf16.gmra.mxu0 %v3050
      %v3066 = vpop.f32.mrf.mxu0
      %v3067 = vadd.f32 %v3034, %v3066
      %v3068 = vpop.f32.mrf.mxu0
      %v3069 = vadd.f32 %v3035, %v3068
      %3070 = vdwg.mxu0
      %v3071 = vpack.c.bf16 %v3064, %v3062
      %v3072 = vpack.c.bf16 %v3069, %v3067
      %s3073 = scalar_lea.vmem %s8, 160
      %v3074 = vld [vmem:[%s3073] sm:$0xf]
      %v3075 = vld [vmem:[%s3073 + $0x4] sm:$0xf]
      %v3076 = vld [vmem:[%s3073 + $0x8] sm:$0xf]
      %v3077 = vld [vmem:[%s3073 + $0xc] sm:$0xf]
      %v3078 = vld [vmem:[%s3073 + $0x10] sm:$0xf]
      %v3079 = vld [vmem:[%s3073 + $0x14] sm:$0xf]
      %v3080 = vld [vmem:[%s3073 + $0x18] sm:$0xf]
      %v3081 = vld [vmem:[%s3073 + $0x1c] sm:$0xf]
      %v3090 = vunpack.c.l.b16 %v3074
      %v3091 = vunpack.c.l.b16 %v3075
      %v3092 = vunpack.c.l.b16 %v3076
      %v3093 = vunpack.c.l.b16 %v3077
      %v3094 = vunpack.c.l.b16 %v3078
      %v3095 = vunpack.c.l.b16 %v3079
      %v3096 = vunpack.c.l.b16 %v3080
      %v3097 = vunpack.c.l.b16 %v3081
      %v3098 = vpack.c.b16 %v3091, %v3090
      %v3099 = vpack.c.b16 %v3093, %v3092
      %v3100 = vpack.c.b16 %v3095, %v3094
      %v3101 = vpack.c.b16 %v3097, %v3096
      %v3107 = vsel %vm2509, %v3071, 0
      %v3110 = vsel %vm2509, %v3072, 0
      %3112 = vmatpush.bf16.msra.mxu0 0
      %3113 = vmatpush.bf16.msra.mxu0 0
      %3114 = vmatpush.bf16.msra.mxu0 0
      %3115 = vmatpush.bf16.msra.mxu0 0
      %3116 = vmatpush.bf16.msra.mxu0 %v3101
      %3117 = vmatpush.bf16.msra.mxu0 %v3100
      %3118 = vmatpush.bf16.msra.mxu0 %v3099
      %3119 = vmatpush.bf16.msra.mxu0 %v3098
      %3120 = vmatmul.bf16.gmra.mxu0 %v3107
      %v3121 = vpop.f32.mrf.mxu0
      %v3122 = vadd.f32 0.0, %v3121
      %v3123 = vpop.f32.mrf.mxu0
      %v3124 = vadd.f32 0.0, %v3123
      %3125 = vmatmul.bf16.gmra.mxu0 %v3110
      %v3126 = vpop.f32.mrf.mxu0
      %v3127 = vadd.f32 0.0, %v3126
      %v3128 = vpop.f32.mrf.mxu0
      %v3129 = vadd.f32 0.0, %v3128
      %3130 = vdwg.mxu0
      %v3131 = vadd.f32 %v3022, %v3122
      %v3132 = vadd.f32 %v3023, %v3124
      %v3133 = vadd.f32 %v3024, %v3127
      %v3134 = vadd.f32 %v3025, %v3129
      %s3135 = scalar_lea.vmem %s6, 96
      %v3136 = vld [vmem:[%s3135] sm:$0xf]
      %v3137 = vld [vmem:[%s3135 + $0x4] sm:$0xf]
      %v3138 = vld [vmem:[%s3135 + $0x8] sm:$0xf]
      %v3139 = vld [vmem:[%s3135 + $0xc] sm:$0x1]
      %s3140 = scalar_lea.vmem %s7, 192
      %v3141 = vld [vmem:[%s3140] sm:$0xff]
      %v3142 = vld [vmem:[%s3140 + $0x8] sm:$0xff]
      %v3143 = vld [vmem:[%s3140 + $0x10] sm:$0xff]
      %v3144 = vld [vmem:[%s3140 + $0x18] sm:$0x1]
      %v3149 = vunpack.c.l.b16 %v3136
      %v3150 = vunpack.c.l.b16 %v3137
      %v3151 = vunpack.c.l.b16 %v3138
      %v3152 = vunpack.c.l.b16 %v3139
      %v3153 = vpack.c.b16 %v3150, %v3149
      %v3154 = vpack.c.b16 %v3152, %v3151
      %v3156 = vsel %vm2509, %v3153, 0
      %v3159 = vsel %vm2509, %v3154, 0
      %3161 = vmatpush.bf16.msra.mxu0 0
      %3162 = vmatpush.bf16.msra.mxu0 0
      %3163 = vmatpush.bf16.msra.mxu0 0
      %3164 = vmatpush.bf16.msra.mxu0 0
      %3165 = vmatpush.bf16.msra.mxu0 %v2490
      %3166 = vmatpush.bf16.msra.mxu0 %v2489
      %3167 = vmatpush.bf16.msra.mxu0 %v2488
      %3168 = vmatpush.bf16.msra.mxu0 %v2487
      %3169 = vmatmul.bf16.gmra.mxu0 %v3156
      %v3170 = vpop.f32.mrf.mxu0
      %v3171 = vadd.f32 %v3141, %v3170
      %v3172 = vpop.f32.mrf.mxu0
      %v3173 = vadd.f32 %v3142, %v3172
      %3174 = vmatmul.bf16.gmra.mxu0 %v3159
      %v3175 = vpop.f32.mrf.mxu0
      %v3176 = vadd.f32 %v3143, %v3175
      %v3177 = vpop.f32.mrf.mxu0
      %v3178 = vadd.f32 %v3144, %v3177
      %3179 = vdwg.mxu0
      %v3180 = vpack.c.bf16 %v3173, %v3171
      %v3181 = vpack.c.bf16 %v3178, %v3176
      %s3182 = scalar_lea.vmem %s8, 192
      %v3183 = vld [vmem:[%s3182] sm:$0xf]
      %v3184 = vld [vmem:[%s3182 + $0x4] sm:$0xf]
      %v3185 = vld [vmem:[%s3182 + $0x8] sm:$0xf]
      %v3186 = vld [vmem:[%s3182 + $0xc] sm:$0xf]
      %v3187 = vld [vmem:[%s3182 + $0x10] sm:$0xf]
      %v3188 = vld [vmem:[%s3182 + $0x14] sm:$0xf]
      %v3189 = vld [vmem:[%s3182 + $0x18] sm:$0xf]
      %v3190 = vld [vmem:[%s3182 + $0x1c] sm:$0xf]
      %v3199 = vunpack.c.l.b16 %v3183
      %v3200 = vunpack.c.l.b16 %v3184
      %v3201 = vunpack.c.l.b16 %v3185
      %v3202 = vunpack.c.l.b16 %v3186
      %v3203 = vunpack.c.l.b16 %v3187
      %v3204 = vunpack.c.l.b16 %v3188
      %v3205 = vunpack.c.l.b16 %v3189
      %v3206 = vunpack.c.l.b16 %v3190
      %v3207 = vpack.c.b16 %v3200, %v3199
      %v3208 = vpack.c.b16 %v3202, %v3201
      %v3209 = vpack.c.b16 %v3204, %v3203
      %v3210 = vpack.c.b16 %v3206, %v3205
      %v3216 = vsel %vm2509, %v3180, 0
      %v3219 = vsel %vm2509, %v3181, 0
      %3221 = vmatpush.bf16.msra.mxu0 0
      %3222 = vmatpush.bf16.msra.mxu0 0
      %3223 = vmatpush.bf16.msra.mxu0 0
      %3224 = vmatpush.bf16.msra.mxu0 0
      %3225 = vmatpush.bf16.msra.mxu0 %v3210
      %3226 = vmatpush.bf16.msra.mxu0 %v3209
      %3227 = vmatpush.bf16.msra.mxu0 %v3208
      %3228 = vmatpush.bf16.msra.mxu0 %v3207
      %3229 = vmatmul.bf16.gmra.mxu0 %v3216
      %v3230 = vpop.f32.mrf.mxu0
      %v3231 = vadd.f32 0.0, %v3230
      %v3232 = vpop.f32.mrf.mxu0
      %v3233 = vadd.f32 0.0, %v3232
      %3234 = vmatmul.bf16.gmra.mxu0 %v3219
      %v3235 = vpop.f32.mrf.mxu0
      %v3236 = vadd.f32 0.0, %v3235
      %v3237 = vpop.f32.mrf.mxu0
      %v3238 = vadd.f32 0.0, %v3237
      %3239 = vdwg.mxu0
      %v3240 = vadd.f32 %v3131, %v3231
      %v3241 = vadd.f32 %v3132, %v3233
      %v3242 = vadd.f32 %v3133, %v3236
      %v3243 = vadd.f32 %v3134, %v3238
      %s3244 = scalar_lea.vmem %s6, 112
      %v3245 = vld [vmem:[%s3244] sm:$0xf]
      %v3246 = vld [vmem:[%s3244 + $0x4] sm:$0xf]
      %v3247 = vld [vmem:[%s3244 + $0x8] sm:$0xf]
      %v3248 = vld [vmem:[%s3244 + $0xc] sm:$0x1]
      %s3249 = scalar_lea.vmem %s7, 224
      %v3250 = vld [vmem:[%s3249] sm:$0xff]
      %v3251 = vld [vmem:[%s3249 + $0x8] sm:$0xff]
      %v3252 = vld [vmem:[%s3249 + $0x10] sm:$0xff]
      %v3253 = vld [vmem:[%s3249 + $0x18] sm:$0x1]
      %v3258 = vunpack.c.l.b16 %v3245
      %v3259 = vunpack.c.l.b16 %v3246
      %v3260 = vunpack.c.l.b16 %v3247
      %v3261 = vunpack.c.l.b16 %v3248
      %v3262 = vpack.c.b16 %v3259, %v3258
      %v3263 = vpack.c.b16 %v3261, %v3260
      %v3265 = vsel %vm2509, %v3262, 0
      %v3268 = vsel %vm2509, %v3263, 0
      %3270 = vmatpush.bf16.msra.mxu0 0
      %3271 = vmatpush.bf16.msra.mxu0 0
      %3272 = vmatpush.bf16.msra.mxu0 0
      %3273 = vmatpush.bf16.msra.mxu0 0
      %3274 = vmatpush.bf16.msra.mxu0 %v2490
      %3275 = vmatpush.bf16.msra.mxu0 %v2489
      %3276 = vmatpush.bf16.msra.mxu0 %v2488
      %3277 = vmatpush.bf16.msra.mxu0 %v2487
      %3278 = vmatmul.bf16.gmra.mxu0 %v3265
      %v3279 = vpop.f32.mrf.mxu0
      %v3280 = vadd.f32 %v3250, %v3279
      %v3281 = vpop.f32.mrf.mxu0
      %v3282 = vadd.f32 %v3251, %v3281
      %3283 = vmatmul.bf16.gmra.mxu0 %v3268
      %v3284 = vpop.f32.mrf.mxu0
      %v3285 = vadd.f32 %v3252, %v3284
      %v3286 = vpop.f32.mrf.mxu0
      %v3287 = vadd.f32 %v3253, %v3286
      %3288 = vdwg.mxu0
      %v3289 = vpack.c.bf16 %v3282, %v3280
      %v3290 = vpack.c.bf16 %v3287, %v3285
      %s3291 = scalar_lea.vmem %s8, 224
      %v3292 = vld [vmem:[%s3291] sm:$0xf]
      %v3293 = vld [vmem:[%s3291 + $0x4] sm:$0xf]
      %v3294 = vld [vmem:[%s3291 + $0x8] sm:$0xf]
      %v3295 = vld [vmem:[%s3291 + $0xc] sm:$0xf]
      %v3296 = vld [vmem:[%s3291 + $0x10] sm:$0xf]
      %v3297 = vld [vmem:[%s3291 + $0x14] sm:$0xf]
      %v3298 = vld [vmem:[%s3291 + $0x18] sm:$0xf]
      %v3299 = vld [vmem:[%s3291 + $0x1c] sm:$0xf]
      %v3308 = vunpack.c.l.b16 %v3292
      %v3309 = vunpack.c.l.b16 %v3293
      %v3310 = vunpack.c.l.b16 %v3294
      %v3311 = vunpack.c.l.b16 %v3295
      %v3312 = vunpack.c.l.b16 %v3296
      %v3313 = vunpack.c.l.b16 %v3297
      %v3314 = vunpack.c.l.b16 %v3298
      %v3315 = vunpack.c.l.b16 %v3299
      %v3316 = vpack.c.b16 %v3309, %v3308
      %v3317 = vpack.c.b16 %v3311, %v3310
      %v3318 = vpack.c.b16 %v3313, %v3312
      %v3319 = vpack.c.b16 %v3315, %v3314
      %v3325 = vsel %vm2509, %v3289, 0
      %v3328 = vsel %vm2509, %v3290, 0
      %3330 = vmatpush.bf16.msra.mxu0 0
      %3331 = vmatpush.bf16.msra.mxu0 0
      %3332 = vmatpush.bf16.msra.mxu0 0
      %3333 = vmatpush.bf16.msra.mxu0 0
      %3334 = vmatpush.bf16.msra.mxu0 %v3319
      %3335 = vmatpush.bf16.msra.mxu0 %v3318
      %3336 = vmatpush.bf16.msra.mxu0 %v3317
      %3337 = vmatpush.bf16.msra.mxu0 %v3316
      %3338 = vmatmul.bf16.gmra.mxu0 %v3325
      %v3339 = vpop.f32.mrf.mxu0
      %v3340 = vadd.f32 0.0, %v3339
      %v3341 = vpop.f32.mrf.mxu0
      %v3342 = vadd.f32 0.0, %v3341
      %3343 = vmatmul.bf16.gmra.mxu0 %v3328
      %v3344 = vpop.f32.mrf.mxu0
      %v3345 = vadd.f32 0.0, %v3344
      %v3346 = vpop.f32.mrf.mxu0
      %v3347 = vadd.f32 0.0, %v3346
      %3348 = vdwg.mxu0
      %v3349 = vadd.f32 %v3240, %v3340
      %v3350 = vadd.f32 %v3241, %v3342
      %v3351 = vadd.f32 %v3242, %v3345
      %v3352 = vadd.f32 %v3243, %v3347
      %s3353 = scalar_lea.vmem %s6, 128
      %v3354 = vld [vmem:[%s3353] sm:$0xf]
      %v3355 = vld [vmem:[%s3353 + $0x4] sm:$0xf]
      %v3356 = vld [vmem:[%s3353 + $0x8] sm:$0xf]
      %v3357 = vld [vmem:[%s3353 + $0xc] sm:$0x1]
      %s3358 = scalar_lea.vmem %s7, 256
      %v3359 = vld [vmem:[%s3358] sm:$0xff]
      %v3360 = vld [vmem:[%s3358 + $0x8] sm:$0xff]
      %v3361 = vld [vmem:[%s3358 + $0x10] sm:$0xff]
      %v3362 = vld [vmem:[%s3358 + $0x18] sm:$0x1]
      %v3367 = vunpack.c.l.b16 %v3354
      %v3368 = vunpack.c.l.b16 %v3355
      %v3369 = vunpack.c.l.b16 %v3356
      %v3370 = vunpack.c.l.b16 %v3357
      %v3371 = vpack.c.b16 %v3368, %v3367
      %v3372 = vpack.c.b16 %v3370, %v3369
      %v3374 = vsel %vm2509, %v3371, 0
      %v3377 = vsel %vm2509, %v3372, 0
      %3379 = vmatpush.bf16.msra.mxu0 0
      %3380 = vmatpush.bf16.msra.mxu0 0
      %3381 = vmatpush.bf16.msra.mxu0 0
      %3382 = vmatpush.bf16.msra.mxu0 0
      %3383 = vmatpush.bf16.msra.mxu0 %v2490
      %3384 = vmatpush.bf16.msra.mxu0 %v2489
      %3385 = vmatpush.bf16.msra.mxu0 %v2488
      %3386 = vmatpush.bf16.msra.mxu0 %v2487
      %3387 = vmatmul.bf16.gmra.mxu0 %v3374
      %v3388 = vpop.f32.mrf.mxu0
      %v3389 = vadd.f32 %v3359, %v3388
      %v3390 = vpop.f32.mrf.mxu0
      %v3391 = vadd.f32 %v3360, %v3390
      %3392 = vmatmul.bf16.gmra.mxu0 %v3377
      %v3393 = vpop.f32.mrf.mxu0
      %v3394 = vadd.f32 %v3361, %v3393
      %v3395 = vpop.f32.mrf.mxu0
      %v3396 = vadd.f32 %v3362, %v3395
      %3397 = vdwg.mxu0
      %v3398 = vpack.c.bf16 %v3391, %v3389
      %v3399 = vpack.c.bf16 %v3396, %v3394
      %s3400 = scalar_lea.vmem %s8, 256
      %v3401 = vld [vmem:[%s3400] sm:$0xf]
      %v3402 = vld [vmem:[%s3400 + $0x4] sm:$0xf]
      %v3403 = vld [vmem:[%s3400 + $0x8] sm:$0xf]
      %v3404 = vld [vmem:[%s3400 + $0xc] sm:$0xf]
      %v3405 = vld [vmem:[%s3400 + $0x10] sm:$0xf]
      %v3406 = vld [vmem:[%s3400 + $0x14] sm:$0xf]
      %v3407 = vld [vmem:[%s3400 + $0x18] sm:$0xf]
      %v3408 = vld [vmem:[%s3400 + $0x1c] sm:$0xf]
      %v3417 = vunpack.c.l.b16 %v3401
      %v3418 = vunpack.c.l.b16 %v3402
      %v3419 = vunpack.c.l.b16 %v3403
      %v3420 = vunpack.c.l.b16 %v3404
      %v3421 = vunpack.c.l.b16 %v3405
      %v3422 = vunpack.c.l.b16 %v3406
      %v3423 = vunpack.c.l.b16 %v3407
      %v3424 = vunpack.c.l.b16 %v3408
      %v3425 = vpack.c.b16 %v3418, %v3417
      %v3426 = vpack.c.b16 %v3420, %v3419
      %v3427 = vpack.c.b16 %v3422, %v3421
      %v3428 = vpack.c.b16 %v3424, %v3423
      %v3434 = vsel %vm2509, %v3398, 0
      %v3437 = vsel %vm2509, %v3399, 0
      %3439 = vmatpush.bf16.msra.mxu0 0
      %3440 = vmatpush.bf16.msra.mxu0 0
      %3441 = vmatpush.bf16.msra.mxu0 0
      %3442 = vmatpush.bf16.msra.mxu0 0
      %3443 = vmatpush.bf16.msra.mxu0 %v3428
      %3444 = vmatpush.bf16.msra.mxu0 %v3427
      %3445 = vmatpush.bf16.msra.mxu0 %v3426
      %3446 = vmatpush.bf16.msra.mxu0 %v3425
      %3447 = vmatmul.bf16.gmra.mxu0 %v3434
      %v3448 = vpop.f32.mrf.mxu0
      %v3449 = vadd.f32 0.0, %v3448
      %v3450 = vpop.f32.mrf.mxu0
      %v3451 = vadd.f32 0.0, %v3450
      %3452 = vmatmul.bf16.gmra.mxu0 %v3437
      %v3453 = vpop.f32.mrf.mxu0
      %v3454 = vadd.f32 0.0, %v3453
      %v3455 = vpop.f32.mrf.mxu0
      %v3456 = vadd.f32 0.0, %v3455
      %3457 = vdwg.mxu0
      %v3458 = vadd.f32 %v3349, %v3449
      %v3459 = vadd.f32 %v3350, %v3451
      %v3460 = vadd.f32 %v3351, %v3454
      %v3461 = vadd.f32 %v3352, %v3456
      %v3462 = vld [vmem:[%s9] sm:$0x1]
      %v3464 = vperm.slane %v3462, 0
      %v3466 = vadd.f32 %v3458, %v3464
      %v3467 = vadd.f32 %v3459, %v3464
      %v3468 = vadd.f32 %v3460, %v3464
      %v3469 = vadd.f32 %v3461, %v3464
      %vm3470 = vcmp.ge.f32.partialorder %v3466, 0.0
      %vm3471 = vcmp.ge.f32.partialorder %v3467, 0.0
      %vm3472 = vcmp.ge.f32.partialorder %v3468, 0.0
      %vm3473 = vcmp.ge.f32.partialorder %v3469, 0.0
      %v3474 = vmul.f32 %v3466, 0.2
      %v3475 = vmul.f32 %v3467, 0.2
      %v3476 = vmul.f32 %v3468, 0.2
      %v3477 = vmul.f32 %v3469, 0.2
      %v3478 = vsel %vm3470, %v3466, %v3474
      %v3479 = vsel %vm3471, %v3467, %v3475
      %v3480 = vsel %vm3472, %v3468, %v3476
      %v3481 = vsel %vm3473, %v3469, %v3477
      %v3482 = vpack.c.bf16 %v3479, %v3478
      %v3483 = vpack.c.bf16 %v3481, %v3480
      %v3484 = vld [vmem:[%s10] sm:$0xf]
      %v3485 = vld [vmem:[%s10 + $0x4] sm:$0xf]
      %v3486 = vld [vmem:[%s10 + $0x8] sm:$0xf]
      %v3487 = vld [vmem:[%s10 + $0xc] sm:$0x1]
      %v3492 = vunpack.c.l.b16 %v3484
      %v3493 = vunpack.c.l.b16 %v3485
      %v3494 = vunpack.c.l.b16 %v3486
      %v3495 = vunpack.c.l.b16 %v3487
      %v3496 = vpack.c.b16 %v3493, %v3492
      %v3497 = vpack.c.b16 %v3495, %v3494
      %vm3498 = vcmask 203776
      %v3500 = vsel %vm3498, %v3496, 0
      %v3503 = vsel %vm3498, %v3497, 0
      %vm3505 = vcmask 1043456
      %vm3506 = vcmask 1044480
      %v3507 = vsel %vm3505, 4294967295, 65535
      %v3508 = vsel %vm3506, %v3507, 0
      %v3510 = vand.u32 %v3483, %v3508
      %3512 = vmatpush.bf16.msra.mxu0 0
      %3513 = vmatpush.bf16.msra.mxu0 0
      %3514 = vmatpush.bf16.msra.mxu0 0
      %3515 = vmatpush.bf16.msra.mxu0 0
      %3516 = vmatpush.bf16.msra.mxu0 0
      %3517 = vmatpush.bf16.msra.mxu0 0
      %3518 = vmatpush.bf16.msra.mxu0 %v3510
      %3519 = vmatpush.bf16.msra.mxu0 %v3482
      %3520 = vmatmul.bf16.gmra.mxu0 %v3500
      %v3521 = vpop.f32.mrf.mxu0
      %v3522 = vadd.f32 0.0, %v3521
      %v3523 = vpop.f32.mrf.mxu0
      %v3524 = vadd.f32 0.0, %v3523
      %3525 = vmatmul.bf16.gmra.mxu0 %v3503
      %v3526 = vpop.f32.mrf.mxu0
      %v3527 = vadd.f32 0.0, %v3526
      %v3528 = vpop.f32.mrf.mxu0
      %v3529 = vadd.f32 0.0, %v3528
      %3530 = vdwg.mxu0
      %v3531 = vpack.c.bf16 %v3524, %v3522
      %v3532 = vpack.c.bf16 %v3529, %v3527
      %v3533 = vld [vmem:[%s11] sm:$0xff]
      %v3534 = vld [vmem:[%s11 + $0x8] sm:$0xff]
      %v3535 = vld [vmem:[%s11 + $0x10] sm:$0xff]
      %v3536 = vld [vmem:[%s11 + $0x18] sm:$0xff]
      %v3537 = vld [vmem:[%s11 + $0x20] sm:$0xff]
      %v3538 = vld [vmem:[%s11 + $0x28] sm:$0xff]
      %v3539 = vld [vmem:[%s11 + $0x30] sm:$0xff]
      %v3540 = vld [vmem:[%s11 + $0x38] sm:$0xff]
      %v3541 = vld [vmem:[%s11 + $0x40] sm:$0xff]
      %v3542 = vld [vmem:[%s11 + $0x48] sm:$0xff]
      %v3543 = vld [vmem:[%s11 + $0x50] sm:$0xff]
      %v3544 = vld [vmem:[%s11 + $0x58] sm:$0xff]
      %v3545 = vld [vmem:[%s11 + $0x60] sm:$0xff]
      %v3546 = vld [vmem:[%s11 + $0x68] sm:$0xff]
      %v3547 = vld [vmem:[%s11 + $0x70] sm:$0xff]
      %v3548 = vld [vmem:[%s11 + $0x78] sm:$0xff]
      %s3549 = scalar_lea.vmem %s10, 16
      %v3550 = vld [vmem:[%s3549] sm:$0xf]
      %v3551 = vld [vmem:[%s3549 + $0x4] sm:$0xf]
      %v3552 = vld [vmem:[%s3549 + $0x8] sm:$0xf]
      %v3553 = vld [vmem:[%s3549 + $0xc] sm:$0x1]
      %v3558 = vunpack.c.l.b16 %v3550
      %v3559 = vunpack.c.l.b16 %v3551
      %v3560 = vunpack.c.l.b16 %v3552
      %v3561 = vunpack.c.l.b16 %v3553
      %v3562 = vpack.c.b16 %v3559, %v3558
      %v3563 = vpack.c.b16 %v3561, %v3560
      %v3565 = vsel %vm3498, %v3562, 0
      %v3568 = vsel %vm3498, %v3563, 0
      %3570 = vmatpush.bf16.msra.mxu0 0
      %3571 = vmatpush.bf16.msra.mxu0 0
      %3572 = vmatpush.bf16.msra.mxu0 0
      %3573 = vmatpush.bf16.msra.mxu0 0
      %3574 = vmatpush.bf16.msra.mxu0 0
      %3575 = vmatpush.bf16.msra.mxu0 0
      %3576 = vmatpush.bf16.msra.mxu0 %v3510
      %3577 = vmatpush.bf16.msra.mxu0 %v3482
      %3578 = vmatmul.bf16.gmra.mxu0 %v3565
      %v3579 = vpop.f32.mrf.mxu0
      %v3580 = vadd.f32 0.0, %v3579
      %v3581 = vpop.f32.mrf.mxu0
      %v3582 = vadd.f32 0.0, %v3581
      %3583 = vmatmul.bf16.gmra.mxu0 %v3568
      %v3584 = vpop.f32.mrf.mxu0
      %v3585 = vadd.f32 0.0, %v3584
      %v3586 = vpop.f32.mrf.mxu0
      %v3587 = vadd.f32 0.0, %v3586
      %3588 = vdwg.mxu0
      %v3589 = vpack.c.bf16 %v3582, %v3580
      %v3590 = vpack.c.bf16 %v3587, %v3585
      %s3591 = scalar_lea.vmem %s11, 128
      %v3592 = vld [vmem:[%s3591] sm:$0xff]
      %v3593 = vld [vmem:[%s3591 + $0x8] sm:$0xff]
      %v3594 = vld [vmem:[%s3591 + $0x10] sm:$0xff]
      %v3595 = vld [vmem:[%s3591 + $0x18] sm:$0xff]
      %v3596 = vld [vmem:[%s3591 + $0x20] sm:$0xff]
      %v3597 = vld [vmem:[%s3591 + $0x28] sm:$0xff]
      %v3598 = vld [vmem:[%s3591 + $0x30] sm:$0xff]
      %v3599 = vld [vmem:[%s3591 + $0x38] sm:$0xff]
      %v3600 = vld [vmem:[%s3591 + $0x40] sm:$0xff]
      %v3601 = vld [vmem:[%s3591 + $0x48] sm:$0xff]
      %v3602 = vld [vmem:[%s3591 + $0x50] sm:$0xff]
      %v3603 = vld [vmem:[%s3591 + $0x58] sm:$0xff]
      %v3604 = vld [vmem:[%s3591 + $0x60] sm:$0xff]
      %v3605 = vld [vmem:[%s3591 + $0x68] sm:$0xff]
      %v3606 = vld [vmem:[%s3591 + $0x70] sm:$0xff]
      %v3607 = vld [vmem:[%s3591 + $0x78] sm:$0xff]
      %v3624 = vunpack.c.l.b16 %v3592
      %v3625 = vunpack.c.h.b16 %v3592
      %v3626 = vunpack.c.l.b16 %v3593
      %v3627 = vunpack.c.h.b16 %v3593
      %v3628 = vunpack.c.l.b16 %v3594
      %v3629 = vunpack.c.h.b16 %v3594
      %v3630 = vunpack.c.l.b16 %v3595
      %v3631 = vunpack.c.h.b16 %v3595
      %v3632 = vunpack.c.l.b16 %v3596
      %v3633 = vunpack.c.h.b16 %v3596
      %v3634 = vunpack.c.l.b16 %v3597
      %v3635 = vunpack.c.h.b16 %v3597
      %v3636 = vunpack.c.l.b16 %v3598
      %v3637 = vunpack.c.h.b16 %v3598
      %v3638 = vunpack.c.l.b16 %v3599
      %v3639 = vunpack.c.h.b16 %v3599
      %v3640 = vunpack.c.l.b16 %v3600
      %v3641 = vunpack.c.h.b16 %v3600
      %v3642 = vunpack.c.l.b16 %v3601
      %v3643 = vunpack.c.h.b16 %v3601
      %v3644 = vunpack.c.l.b16 %v3602
      %v3645 = vunpack.c.h.b16 %v3602
      %v3646 = vunpack.c.l.b16 %v3603
      %v3647 = vunpack.c.h.b16 %v3603
      %v3648 = vunpack.c.l.b16 %v3604
      %v3649 = vunpack.c.h.b16 %v3604
      %v3650 = vunpack.c.l.b16 %v3605
      %v3651 = vunpack.c.h.b16 %v3605
      %v3652 = vunpack.c.l.b16 %v3606
      %v3653 = vunpack.c.h.b16 %v3606
      %v3654 = vunpack.c.l.b16 %v3607
      %v3655 = vunpack.c.h.b16 %v3607
      %v3656 = vpack.c.b16 %v3626, %v3624
      %v3657 = vpack.c.b16 %v3627, %v3625
      %v3658 = vpack.c.b16 %v3630, %v3628
      %v3659 = vpack.c.b16 %v3631, %v3629
      %v3660 = vpack.c.b16 %v3634, %v3632
      %v3661 = vpack.c.b16 %v3635, %v3633
      %v3662 = vpack.c.b16 %v3638, %v3636
      %v3663 = vpack.c.b16 %v3639, %v3637
      %v3664 = vpack.c.b16 %v3642, %v3640
      %v3665 = vpack.c.b16 %v3643, %v3641
      %v3666 = vpack.c.b16 %v3646, %v3644
      %v3667 = vpack.c.b16 %v3647, %v3645
      %v3668 = vpack.c.b16 %v3650, %v3648
      %v3669 = vpack.c.b16 %v3651, %v3649
      %v3670 = vpack.c.b16 %v3654, %v3652
      %v3671 = vpack.c.b16 %v3655, %v3653
      %3688 = vmatpush.bf16.msra.mxu0 %v3670
      %3689 = vmatpush.bf16.msra.mxu0 %v3668
      %3690 = vmatpush.bf16.msra.mxu0 %v3666
      %3691 = vmatpush.bf16.msra.mxu0 %v3664
      %3692 = vmatpush.bf16.msra.mxu0 %v3662
      %3693 = vmatpush.bf16.msra.mxu0 %v3660
      %3694 = vmatpush.bf16.msra.mxu0 %v3658
      %3695 = vmatpush.bf16.msra.mxu0 %v3656
      %3696 = vmatmul.bf16.gmra.mxu0 %v3589
      %v3697 = vpop.f32.mrf.mxu0
      %v3698 = vadd.f32 0.0, %v3697
      %v3699 = vpop.f32.mrf.mxu0
      %v3700 = vadd.f32 0.0, %v3699
      %3701 = vmatmul.bf16.gmra.mxu0 %v3590
      %v3702 = vpop.f32.mrf.mxu0
      %v3703 = vadd.f32 0.0, %v3702
      %v3704 = vpop.f32.mrf.mxu0
      %v3705 = vadd.f32 0.0, %v3704
      %3706 = vdwg.mxu0
      %3707 = vmatpush.bf16.msra.mxu0 %v3671
      %3708 = vmatpush.bf16.msra.mxu0 %v3669
      %3709 = vmatpush.bf16.msra.mxu0 %v3667
      %3710 = vmatpush.bf16.msra.mxu0 %v3665
      %3711 = vmatpush.bf16.msra.mxu0 %v3663
      %3712 = vmatpush.bf16.msra.mxu0 %v3661
      %3713 = vmatpush.bf16.msra.mxu0 %v3659
      %3714 = vmatpush.bf16.msra.mxu0 %v3657
      %3715 = vmatmul.bf16.gmra.mxu0 %v3589
      %v3716 = vpop.f32.mrf.mxu0
      %v3717 = vadd.f32 0.0, %v3716
      %v3718 = vpop.f32.mrf.mxu0
      %v3719 = vadd.f32 0.0, %v3718
      %3720 = vmatmul.bf16.gmra.mxu0 %v3590
      %v3721 = vpop.f32.mrf.mxu0
      %v3722 = vadd.f32 0.0, %v3721
      %v3723 = vpop.f32.mrf.mxu0
      %v3724 = vadd.f32 0.0, %v3723
      %3725 = vdwg.mxu0
      %v3742 = vunpack.c.l.b16 %v3533
      %v3743 = vunpack.c.h.b16 %v3533
      %v3744 = vunpack.c.l.b16 %v3534
      %v3745 = vunpack.c.h.b16 %v3534
      %v3746 = vunpack.c.l.b16 %v3535
      %v3747 = vunpack.c.h.b16 %v3535
      %v3748 = vunpack.c.l.b16 %v3536
      %v3749 = vunpack.c.h.b16 %v3536
      %v3750 = vunpack.c.l.b16 %v3537
      %v3751 = vunpack.c.h.b16 %v3537
      %v3752 = vunpack.c.l.b16 %v3538
      %v3753 = vunpack.c.h.b16 %v3538
      %v3754 = vunpack.c.l.b16 %v3539
      %v3755 = vunpack.c.h.b16 %v3539
      %v3756 = vunpack.c.l.b16 %v3540
      %v3757 = vunpack.c.h.b16 %v3540
      %v3758 = vunpack.c.l.b16 %v3541
      %v3759 = vunpack.c.h.b16 %v3541
      %v3760 = vunpack.c.l.b16 %v3542
      %v3761 = vunpack.c.h.b16 %v3542
      %v3762 = vunpack.c.l.b16 %v3543
      %v3763 = vunpack.c.h.b16 %v3543
      %v3764 = vunpack.c.l.b16 %v3544
      %v3765 = vunpack.c.h.b16 %v3544
      %v3766 = vunpack.c.l.b16 %v3545
      %v3767 = vunpack.c.h.b16 %v3545
      %v3768 = vunpack.c.l.b16 %v3546
      %v3769 = vunpack.c.h.b16 %v3546
      %v3770 = vunpack.c.l.b16 %v3547
      %v3771 = vunpack.c.h.b16 %v3547
      %v3772 = vunpack.c.l.b16 %v3548
      %v3773 = vunpack.c.h.b16 %v3548
      %v3774 = vpack.c.b16 %v3744, %v3742
      %v3775 = vpack.c.b16 %v3745, %v3743
      %v3776 = vpack.c.b16 %v3748, %v3746
      %v3777 = vpack.c.b16 %v3749, %v3747
      %v3778 = vpack.c.b16 %v3752, %v3750
      %v3779 = vpack.c.b16 %v3753, %v3751
      %v3780 = vpack.c.b16 %v3756, %v3754
      %v3781 = vpack.c.b16 %v3757, %v3755
      %v3782 = vpack.c.b16 %v3760, %v3758
      %v3783 = vpack.c.b16 %v3761, %v3759
      %v3784 = vpack.c.b16 %v3764, %v3762
      %v3785 = vpack.c.b16 %v3765, %v3763
      %v3786 = vpack.c.b16 %v3768, %v3766
      %v3787 = vpack.c.b16 %v3769, %v3767
      %v3788 = vpack.c.b16 %v3772, %v3770
      %v3789 = vpack.c.b16 %v3773, %v3771
      %3806 = vmatpush.bf16.msra.mxu0 %v3788
      %3807 = vmatpush.bf16.msra.mxu0 %v3786
      %3808 = vmatpush.bf16.msra.mxu0 %v3784
      %3809 = vmatpush.bf16.msra.mxu0 %v3782
      %3810 = vmatpush.bf16.msra.mxu0 %v3780
      %3811 = vmatpush.bf16.msra.mxu0 %v3778
      %3812 = vmatpush.bf16.msra.mxu0 %v3776
      %3813 = vmatpush.bf16.msra.mxu0 %v3774
      %3814 = vmatmul.bf16.gmra.mxu0 %v3531
      %v3815 = vpop.f32.mrf.mxu0
      %v3816 = vadd.f32 %v3698, %v3815
      %v3817 = vpop.f32.mrf.mxu0
      %v3818 = vadd.f32 %v3700, %v3817
      %3819 = vmatmul.bf16.gmra.mxu0 %v3532
      %v3820 = vpop.f32.mrf.mxu0
      %v3821 = vadd.f32 %v3703, %v3820
      %v3822 = vpop.f32.mrf.mxu0
      %v3823 = vadd.f32 %v3705, %v3822
      %3824 = vdwg.mxu0
      %3825 = vmatpush.bf16.msra.mxu0 %v3789
      %3826 = vmatpush.bf16.msra.mxu0 %v3787
      %3827 = vmatpush.bf16.msra.mxu0 %v3785
      %3828 = vmatpush.bf16.msra.mxu0 %v3783
      %3829 = vmatpush.bf16.msra.mxu0 %v3781
      %3830 = vmatpush.bf16.msra.mxu0 %v3779
      %3831 = vmatpush.bf16.msra.mxu0 %v3777
      %3832 = vmatpush.bf16.msra.mxu0 %v3775
      %3833 = vmatmul.bf16.gmra.mxu0 %v3531
      %v3834 = vpop.f32.mrf.mxu0
      %v3835 = vadd.f32 %v3717, %v3834
      %v3836 = vpop.f32.mrf.mxu0
      %v3837 = vadd.f32 %v3719, %v3836
      %3838 = vmatmul.bf16.gmra.mxu0 %v3532
      %v3839 = vpop.f32.mrf.mxu0
      %v3840 = vadd.f32 %v3722, %v3839
      %v3841 = vpop.f32.mrf.mxu0
      %v3842 = vadd.f32 %v3724, %v3841
      %3843 = vdwg.mxu0
      %s3844 = scalar_lea.vmem %s10, 32
      %v3845 = vld [vmem:[%s3844] sm:$0xf]
      %v3846 = vld [vmem:[%s3844 + $0x4] sm:$0xf]
      %v3847 = vld [vmem:[%s3844 + $0x8] sm:$0xf]
      %v3848 = vld [vmem:[%s3844 + $0xc] sm:$0x1]
      %v3853 = vunpack.c.l.b16 %v3845
      %v3854 = vunpack.c.l.b16 %v3846
      %v3855 = vunpack.c.l.b16 %v3847
      %v3856 = vunpack.c.l.b16 %v3848
      %v3857 = vpack.c.b16 %v3854, %v3853
      %v3858 = vpack.c.b16 %v3856, %v3855
      %v3860 = vsel %vm3498, %v3857, 0
      %v3863 = vsel %vm3498, %v3858, 0
      %3865 = vmatpush.bf16.msra.mxu0 0
      %3866 = vmatpush.bf16.msra.mxu0 0
      %3867 = vmatpush.bf16.msra.mxu0 0
      %3868 = vmatpush.bf16.msra.mxu0 0
      %3869 = vmatpush.bf16.msra.mxu0 0
      %3870 = vmatpush.bf16.msra.mxu0 0
      %3871 = vmatpush.bf16.msra.mxu0 %v3510
      %3872 = vmatpush.bf16.msra.mxu0 %v3482
      %3873 = vmatmul.bf16.gmra.mxu0 %v3860
      %v3874 = vpop.f32.mrf.mxu0
      %v3875 = vadd.f32 0.0, %v3874
      %v3876 = vpop.f32.mrf.mxu0
      %v3877 = vadd.f32 0.0, %v3876
      %3878 = vmatmul.bf16.gmra.mxu0 %v3863
      %v3879 = vpop.f32.mrf.mxu0
      %v3880 = vadd.f32 0.0, %v3879
      %v3881 = vpop.f32.mrf.mxu0
      %v3882 = vadd.f32 0.0, %v3881
      %3883 = vdwg.mxu0
      %v3884 = vpack.c.bf16 %v3877, %v3875
      %v3885 = vpack.c.bf16 %v3882, %v3880
      %s3886 = scalar_lea.vmem %s11, 256
      %v3887 = vld [vmem:[%s3886] sm:$0xff]
      %v3888 = vld [vmem:[%s3886 + $0x8] sm:$0xff]
      %v3889 = vld [vmem:[%s3886 + $0x10] sm:$0xff]
      %v3890 = vld [vmem:[%s3886 + $0x18] sm:$0xff]
      %v3891 = vld [vmem:[%s3886 + $0x20] sm:$0xff]
      %v3892 = vld [vmem:[%s3886 + $0x28] sm:$0xff]
      %v3893 = vld [vmem:[%s3886 + $0x30] sm:$0xff]
      %v3894 = vld [vmem:[%s3886 + $0x38] sm:$0xff]
      %v3895 = vld [vmem:[%s3886 + $0x40] sm:$0xff]
      %v3896 = vld [vmem:[%s3886 + $0x48] sm:$0xff]
      %v3897 = vld [vmem:[%s3886 + $0x50] sm:$0xff]
      %v3898 = vld [vmem:[%s3886 + $0x58] sm:$0xff]
      %v3899 = vld [vmem:[%s3886 + $0x60] sm:$0xff]
      %v3900 = vld [vmem:[%s3886 + $0x68] sm:$0xff]
      %v3901 = vld [vmem:[%s3886 + $0x70] sm:$0xff]
      %v3902 = vld [vmem:[%s3886 + $0x78] sm:$0xff]
      %v3919 = vunpack.c.l.b16 %v3887
      %v3920 = vunpack.c.h.b16 %v3887
      %v3921 = vunpack.c.l.b16 %v3888
      %v3922 = vunpack.c.h.b16 %v3888
      %v3923 = vunpack.c.l.b16 %v3889
      %v3924 = vunpack.c.h.b16 %v3889
      %v3925 = vunpack.c.l.b16 %v3890
      %v3926 = vunpack.c.h.b16 %v3890
      %v3927 = vunpack.c.l.b16 %v3891
      %v3928 = vunpack.c.h.b16 %v3891
      %v3929 = vunpack.c.l.b16 %v3892
      %v3930 = vunpack.c.h.b16 %v3892
      %v3931 = vunpack.c.l.b16 %v3893
      %v3932 = vunpack.c.h.b16 %v3893
      %v3933 = vunpack.c.l.b16 %v3894
      %v3934 = vunpack.c.h.b16 %v3894
      %v3935 = vunpack.c.l.b16 %v3895
      %v3936 = vunpack.c.h.b16 %v3895
      %v3937 = vunpack.c.l.b16 %v3896
      %v3938 = vunpack.c.h.b16 %v3896
      %v3939 = vunpack.c.l.b16 %v3897
      %v3940 = vunpack.c.h.b16 %v3897
      %v3941 = vunpack.c.l.b16 %v3898
      %v3942 = vunpack.c.h.b16 %v3898
      %v3943 = vunpack.c.l.b16 %v3899
      %v3944 = vunpack.c.h.b16 %v3899
      %v3945 = vunpack.c.l.b16 %v3900
      %v3946 = vunpack.c.h.b16 %v3900
      %v3947 = vunpack.c.l.b16 %v3901
      %v3948 = vunpack.c.h.b16 %v3901
      %v3949 = vunpack.c.l.b16 %v3902
      %v3950 = vunpack.c.h.b16 %v3902
      %v3951 = vpack.c.b16 %v3921, %v3919
      %v3952 = vpack.c.b16 %v3922, %v3920
      %v3953 = vpack.c.b16 %v3925, %v3923
      %v3954 = vpack.c.b16 %v3926, %v3924
      %v3955 = vpack.c.b16 %v3929, %v3927
      %v3956 = vpack.c.b16 %v3930, %v3928
      %v3957 = vpack.c.b16 %v3933, %v3931
      %v3958 = vpack.c.b16 %v3934, %v3932
      %v3959 = vpack.c.b16 %v3937, %v3935
      %v3960 = vpack.c.b16 %v3938, %v3936
      %v3961 = vpack.c.b16 %v3941, %v3939
      %v3962 = vpack.c.b16 %v3942, %v3940
      %v3963 = vpack.c.b16 %v3945, %v3943
      %v3964 = vpack.c.b16 %v3946, %v3944
      %v3965 = vpack.c.b16 %v3949, %v3947
      %v3966 = vpack.c.b16 %v3950, %v3948
      %3983 = vmatpush.bf16.msra.mxu0 %v3965
      %3984 = vmatpush.bf16.msra.mxu0 %v3963
      %3985 = vmatpush.bf16.msra.mxu0 %v3961
      %3986 = vmatpush.bf16.msra.mxu0 %v3959
      %3987 = vmatpush.bf16.msra.mxu0 %v3957
      %3988 = vmatpush.bf16.msra.mxu0 %v3955
      %3989 = vmatpush.bf16.msra.mxu0 %v3953
      %3990 = vmatpush.bf16.msra.mxu0 %v3951
      %3991 = vmatmul.bf16.gmra.mxu0 %v3884
      %v3992 = vpop.f32.mrf.mxu0
      %v3993 = vadd.f32 0.0, %v3992
      %v3994 = vpop.f32.mrf.mxu0
      %v3995 = vadd.f32 0.0, %v3994
      %3996 = vmatmul.bf16.gmra.mxu0 %v3885
      %v3997 = vpop.f32.mrf.mxu0
      %v3998 = vadd.f32 0.0, %v3997
      %v3999 = vpop.f32.mrf.mxu0
      %v4000 = vadd.f32 0.0, %v3999
      %4001 = vdwg.mxu0
      %4002 = vmatpush.bf16.msra.mxu0 %v3966
      %4003 = vmatpush.bf16.msra.mxu0 %v3964
      %4004 = vmatpush.bf16.msra.mxu0 %v3962
      %4005 = vmatpush.bf16.msra.mxu0 %v3960
      %4006 = vmatpush.bf16.msra.mxu0 %v3958
      %4007 = vmatpush.bf16.msra.mxu0 %v3956
      %4008 = vmatpush.bf16.msra.mxu0 %v3954
      %4009 = vmatpush.bf16.msra.mxu0 %v3952
      %4010 = vmatmul.bf16.gmra.mxu0 %v3884
      %v4011 = vpop.f32.mrf.mxu0
      %v4012 = vadd.f32 0.0, %v4011
      %v4013 = vpop.f32.mrf.mxu0
      %v4014 = vadd.f32 0.0, %v4013
      %4015 = vmatmul.bf16.gmra.mxu0 %v3885
      %v4016 = vpop.f32.mrf.mxu0
      %v4017 = vadd.f32 0.0, %v4016
      %v4018 = vpop.f32.mrf.mxu0
      %v4019 = vadd.f32 0.0, %v4018
      %4020 = vdwg.mxu0
      %v4021 = vadd.f32 %v3816, %v3993
      %v4022 = vadd.f32 %v3835, %v4012
      %v4023 = vadd.f32 %v3818, %v3995
      %v4024 = vadd.f32 %v3837, %v4014
      %v4025 = vadd.f32 %v3821, %v3998
      %v4026 = vadd.f32 %v3840, %v4017
      %v4027 = vadd.f32 %v3823, %v4000
      %v4028 = vadd.f32 %v3842, %v4019
      %s4029 = scalar_lea.vmem %s10, 48
      %v4030 = vld [vmem:[%s4029] sm:$0xf]
      %v4031 = vld [vmem:[%s4029 + $0x4] sm:$0xf]
      %v4032 = vld [vmem:[%s4029 + $0x8] sm:$0xf]
      %v4033 = vld [vmem:[%s4029 + $0xc] sm:$0x1]
      %v4038 = vunpack.c.l.b16 %v4030
      %v4039 = vunpack.c.l.b16 %v4031
      %v4040 = vunpack.c.l.b16 %v4032
      %v4041 = vunpack.c.l.b16 %v4033
      %v4042 = vpack.c.b16 %v4039, %v4038
      %v4043 = vpack.c.b16 %v4041, %v4040
      %v4045 = vsel %vm3498, %v4042, 0
      %v4048 = vsel %vm3498, %v4043, 0
      %4050 = vmatpush.bf16.msra.mxu0 0
      %4051 = vmatpush.bf16.msra.mxu0 0
      %4052 = vmatpush.bf16.msra.mxu0 0
      %4053 = vmatpush.bf16.msra.mxu0 0
      %4054 = vmatpush.bf16.msra.mxu0 0
      %4055 = vmatpush.bf16.msra.mxu0 0
      %4056 = vmatpush.bf16.msra.mxu0 %v3510
      %4057 = vmatpush.bf16.msra.mxu0 %v3482
      %4058 = vmatmul.bf16.gmra.mxu0 %v4045
      %v4059 = vpop.f32.mrf.mxu0
      %v4060 = vadd.f32 0.0, %v4059
      %v4061 = vpop.f32.mrf.mxu0
      %v4062 = vadd.f32 0.0, %v4061
      %4063 = vmatmul.bf16.gmra.mxu0 %v4048
      %v4064 = vpop.f32.mrf.mxu0
      %v4065 = vadd.f32 0.0, %v4064
      %v4066 = vpop.f32.mrf.mxu0
      %v4067 = vadd.f32 0.0, %v4066
      %4068 = vdwg.mxu0
      %v4069 = vpack.c.bf16 %v4062, %v4060
      %v4070 = vpack.c.bf16 %v4067, %v4065
      %s4071 = scalar_lea.vmem %s11, 384
      %v4072 = vld [vmem:[%s4071] sm:$0xff]
      %v4073 = vld [vmem:[%s4071 + $0x8] sm:$0xff]
      %v4074 = vld [vmem:[%s4071 + $0x10] sm:$0xff]
      %v4075 = vld [vmem:[%s4071 + $0x18] sm:$0xff]
      %v4076 = vld [vmem:[%s4071 + $0x20] sm:$0xff]
      %v4077 = vld [vmem:[%s4071 + $0x28] sm:$0xff]
      %v4078 = vld [vmem:[%s4071 + $0x30] sm:$0xff]
      %v4079 = vld [vmem:[%s4071 + $0x38] sm:$0xff]
      %v4080 = vld [vmem:[%s4071 + $0x40] sm:$0xff]
      %v4081 = vld [vmem:[%s4071 + $0x48] sm:$0xff]
      %v4082 = vld [vmem:[%s4071 + $0x50] sm:$0xff]
      %v4083 = vld [vmem:[%s4071 + $0x58] sm:$0xff]
      %v4084 = vld [vmem:[%s4071 + $0x60] sm:$0xff]
      %v4085 = vld [vmem:[%s4071 + $0x68] sm:$0xff]
      %v4086 = vld [vmem:[%s4071 + $0x70] sm:$0xff]
      %v4087 = vld [vmem:[%s4071 + $0x78] sm:$0xff]
      %v4104 = vunpack.c.l.b16 %v4072
      %v4105 = vunpack.c.h.b16 %v4072
      %v4106 = vunpack.c.l.b16 %v4073
      %v4107 = vunpack.c.h.b16 %v4073
      %v4108 = vunpack.c.l.b16 %v4074
      %v4109 = vunpack.c.h.b16 %v4074
      %v4110 = vunpack.c.l.b16 %v4075
      %v4111 = vunpack.c.h.b16 %v4075
      %v4112 = vunpack.c.l.b16 %v4076
      %v4113 = vunpack.c.h.b16 %v4076
      %v4114 = vunpack.c.l.b16 %v4077
      %v4115 = vunpack.c.h.b16 %v4077
      %v4116 = vunpack.c.l.b16 %v4078
      %v4117 = vunpack.c.h.b16 %v4078
      %v4118 = vunpack.c.l.b16 %v4079
      %v4119 = vunpack.c.h.b16 %v4079
      %v4120 = vunpack.c.l.b16 %v4080
      %v4121 = vunpack.c.h.b16 %v4080
      %v4122 = vunpack.c.l.b16 %v4081
      %v4123 = vunpack.c.h.b16 %v4081
      %v4124 = vunpack.c.l.b16 %v4082
      %v4125 = vunpack.c.h.b16 %v4082
      %v4126 = vunpack.c.l.b16 %v4083
      %v4127 = vunpack.c.h.b16 %v4083
      %v4128 = vunpack.c.l.b16 %v4084
      %v4129 = vunpack.c.h.b16 %v4084
      %v4130 = vunpack.c.l.b16 %v4085
      %v4131 = vunpack.c.h.b16 %v4085
      %v4132 = vunpack.c.l.b16 %v4086
      %v4133 = vunpack.c.h.b16 %v4086
      %v4134 = vunpack.c.l.b16 %v4087
      %v4135 = vunpack.c.h.b16 %v4087
      %v4136 = vpack.c.b16 %v4106, %v4104
      %v4137 = vpack.c.b16 %v4107, %v4105
      %v4138 = vpack.c.b16 %v4110, %v4108
      %v4139 = vpack.c.b16 %v4111, %v4109
      %v4140 = vpack.c.b16 %v4114, %v4112
      %v4141 = vpack.c.b16 %v4115, %v4113
      %v4142 = vpack.c.b16 %v4118, %v4116
      %v4143 = vpack.c.b16 %v4119, %v4117
      %v4144 = vpack.c.b16 %v4122, %v4120
      %v4145 = vpack.c.b16 %v4123, %v4121
      %v4146 = vpack.c.b16 %v4126, %v4124
      %v4147 = vpack.c.b16 %v4127, %v4125
      %v4148 = vpack.c.b16 %v4130, %v4128
      %v4149 = vpack.c.b16 %v4131, %v4129
      %v4150 = vpack.c.b16 %v4134, %v4132
      %v4151 = vpack.c.b16 %v4135, %v4133
      %4168 = vmatpush.bf16.msra.mxu0 %v4150
      %4169 = vmatpush.bf16.msra.mxu0 %v4148
      %4170 = vmatpush.bf16.msra.mxu0 %v4146
      %4171 = vmatpush.bf16.msra.mxu0 %v4144
      %4172 = vmatpush.bf16.msra.mxu0 %v4142
      %4173 = vmatpush.bf16.msra.mxu0 %v4140
      %4174 = vmatpush.bf16.msra.mxu0 %v4138
      %4175 = vmatpush.bf16.msra.mxu0 %v4136
      %4176 = vmatmul.bf16.gmra.mxu0 %v4069
      %v4177 = vpop.f32.mrf.mxu0
      %v4178 = vadd.f32 0.0, %v4177
      %v4179 = vpop.f32.mrf.mxu0
      %v4180 = vadd.f32 0.0, %v4179
      %4181 = vmatmul.bf16.gmra.mxu0 %v4070
      %v4182 = vpop.f32.mrf.mxu0
      %v4183 = vadd.f32 0.0, %v4182
      %v4184 = vpop.f32.mrf.mxu0
      %v4185 = vadd.f32 0.0, %v4184
      %4186 = vdwg.mxu0
      %4187 = vmatpush.bf16.msra.mxu0 %v4151
      %4188 = vmatpush.bf16.msra.mxu0 %v4149
      %4189 = vmatpush.bf16.msra.mxu0 %v4147
      %4190 = vmatpush.bf16.msra.mxu0 %v4145
      %4191 = vmatpush.bf16.msra.mxu0 %v4143
      %4192 = vmatpush.bf16.msra.mxu0 %v4141
      %4193 = vmatpush.bf16.msra.mxu0 %v4139
      %4194 = vmatpush.bf16.msra.mxu0 %v4137
      %4195 = vmatmul.bf16.gmra.mxu0 %v4069
      %v4196 = vpop.f32.mrf.mxu0
      %v4197 = vadd.f32 0.0, %v4196
      %v4198 = vpop.f32.mrf.mxu0
      %v4199 = vadd.f32 0.0, %v4198
      %4200 = vmatmul.bf16.gmra.mxu0 %v4070
      %v4201 = vpop.f32.mrf.mxu0
      %v4202 = vadd.f32 0.0, %v4201
      %v4203 = vpop.f32.mrf.mxu0
      %v4204 = vadd.f32 0.0, %v4203
      %4205 = vdwg.mxu0
      %v4206 = vadd.f32 %v4021, %v4178
      %v4207 = vadd.f32 %v4022, %v4197
      %v4208 = vadd.f32 %v4023, %v4180
      %v4209 = vadd.f32 %v4024, %v4199
      %v4210 = vadd.f32 %v4025, %v4183
      %v4211 = vadd.f32 %v4026, %v4202
      %v4212 = vadd.f32 %v4027, %v4185
      %v4213 = vadd.f32 %v4028, %v4204
      %s4214 = scalar_lea.vmem %s10, 64
      %v4215 = vld [vmem:[%s4214] sm:$0xf]
      %v4216 = vld [vmem:[%s4214 + $0x4] sm:$0xf]
      %v4217 = vld [vmem:[%s4214 + $0x8] sm:$0xf]
      %v4218 = vld [vmem:[%s4214 + $0xc] sm:$0x1]
      %v4223 = vunpack.c.l.b16 %v4215
      %v4224 = vunpack.c.l.b16 %v4216
      %v4225 = vunpack.c.l.b16 %v4217
      %v4226 = vunpack.c.l.b16 %v4218
      %v4227 = vpack.c.b16 %v4224, %v4223
      %v4228 = vpack.c.b16 %v4226, %v4225
      %v4230 = vsel %vm3498, %v4227, 0
      %v4233 = vsel %vm3498, %v4228, 0
      %4235 = vmatpush.bf16.msra.mxu0 0
      %4236 = vmatpush.bf16.msra.mxu0 0
      %4237 = vmatpush.bf16.msra.mxu0 0
      %4238 = vmatpush.bf16.msra.mxu0 0
      %4239 = vmatpush.bf16.msra.mxu0 0
      %4240 = vmatpush.bf16.msra.mxu0 0
      %4241 = vmatpush.bf16.msra.mxu0 %v3510
      %4242 = vmatpush.bf16.msra.mxu0 %v3482
      %4243 = vmatmul.bf16.gmra.mxu0 %v4230
      %v4244 = vpop.f32.mrf.mxu0
      %v4245 = vadd.f32 0.0, %v4244
      %v4246 = vpop.f32.mrf.mxu0
      %v4247 = vadd.f32 0.0, %v4246
      %4248 = vmatmul.bf16.gmra.mxu0 %v4233
      %v4249 = vpop.f32.mrf.mxu0
      %v4250 = vadd.f32 0.0, %v4249
      %v4251 = vpop.f32.mrf.mxu0
      %v4252 = vadd.f32 0.0, %v4251
      %4253 = vdwg.mxu0
      %v4254 = vpack.c.bf16 %v4247, %v4245
      %v4255 = vpack.c.bf16 %v4252, %v4250
      %s4256 = scalar_lea.vmem %s11, 512
      %v4257 = vld [vmem:[%s4256] sm:$0xff]
      %v4258 = vld [vmem:[%s4256 + $0x8] sm:$0xff]
      %v4259 = vld [vmem:[%s4256 + $0x10] sm:$0xff]
      %v4260 = vld [vmem:[%s4256 + $0x18] sm:$0xff]
      %v4261 = vld [vmem:[%s4256 + $0x20] sm:$0xff]
      %v4262 = vld [vmem:[%s4256 + $0x28] sm:$0xff]
      %v4263 = vld [vmem:[%s4256 + $0x30] sm:$0xff]
      %v4264 = vld [vmem:[%s4256 + $0x38] sm:$0xff]
      %v4265 = vld [vmem:[%s4256 + $0x40] sm:$0xff]
      %v4266 = vld [vmem:[%s4256 + $0x48] sm:$0xff]
      %v4267 = vld [vmem:[%s4256 + $0x50] sm:$0xff]
      %v4268 = vld [vmem:[%s4256 + $0x58] sm:$0xff]
      %v4269 = vld [vmem:[%s4256 + $0x60] sm:$0xff]
      %v4270 = vld [vmem:[%s4256 + $0x68] sm:$0xff]
      %v4271 = vld [vmem:[%s4256 + $0x70] sm:$0xff]
      %v4272 = vld [vmem:[%s4256 + $0x78] sm:$0xff]
      %v4289 = vunpack.c.l.b16 %v4257
      %v4290 = vunpack.c.h.b16 %v4257
      %v4291 = vunpack.c.l.b16 %v4258
      %v4292 = vunpack.c.h.b16 %v4258
      %v4293 = vunpack.c.l.b16 %v4259
      %v4294 = vunpack.c.h.b16 %v4259
      %v4295 = vunpack.c.l.b16 %v4260
      %v4296 = vunpack.c.h.b16 %v4260
      %v4297 = vunpack.c.l.b16 %v4261
      %v4298 = vunpack.c.h.b16 %v4261
      %v4299 = vunpack.c.l.b16 %v4262
      %v4300 = vunpack.c.h.b16 %v4262
      %v4301 = vunpack.c.l.b16 %v4263
      %v4302 = vunpack.c.h.b16 %v4263
      %v4303 = vunpack.c.l.b16 %v4264
      %v4304 = vunpack.c.h.b16 %v4264
      %v4305 = vunpack.c.l.b16 %v4265
      %v4306 = vunpack.c.h.b16 %v4265
      %v4307 = vunpack.c.l.b16 %v4266
      %v4308 = vunpack.c.h.b16 %v4266
      %v4309 = vunpack.c.l.b16 %v4267
      %v4310 = vunpack.c.h.b16 %v4267
      %v4311 = vunpack.c.l.b16 %v4268
      %v4312 = vunpack.c.h.b16 %v4268
      %v4313 = vunpack.c.l.b16 %v4269
      %v4314 = vunpack.c.h.b16 %v4269
      %v4315 = vunpack.c.l.b16 %v4270
      %v4316 = vunpack.c.h.b16 %v4270
      %v4317 = vunpack.c.l.b16 %v4271
      %v4318 = vunpack.c.h.b16 %v4271
      %v4319 = vunpack.c.l.b16 %v4272
      %v4320 = vunpack.c.h.b16 %v4272
      %v4321 = vpack.c.b16 %v4291, %v4289
      %v4322 = vpack.c.b16 %v4292, %v4290
      %v4323 = vpack.c.b16 %v4295, %v4293
      %v4324 = vpack.c.b16 %v4296, %v4294
      %v4325 = vpack.c.b16 %v4299, %v4297
      %v4326 = vpack.c.b16 %v4300, %v4298
      %v4327 = vpack.c.b16 %v4303, %v4301
      %v4328 = vpack.c.b16 %v4304, %v4302
      %v4329 = vpack.c.b16 %v4307, %v4305
      %v4330 = vpack.c.b16 %v4308, %v4306
      %v4331 = vpack.c.b16 %v4311, %v4309
      %v4332 = vpack.c.b16 %v4312, %v4310
      %v4333 = vpack.c.b16 %v4315, %v4313
      %v4334 = vpack.c.b16 %v4316, %v4314
      %v4335 = vpack.c.b16 %v4319, %v4317
      %v4336 = vpack.c.b16 %v4320, %v4318
      %4353 = vmatpush.bf16.msra.mxu0 %v4335
      %4354 = vmatpush.bf16.msra.mxu0 %v4333
      %4355 = vmatpush.bf16.msra.mxu0 %v4331
      %4356 = vmatpush.bf16.msra.mxu0 %v4329
      %4357 = vmatpush.bf16.msra.mxu0 %v4327
      %4358 = vmatpush.bf16.msra.mxu0 %v4325
      %4359 = vmatpush.bf16.msra.mxu0 %v4323
      %4360 = vmatpush.bf16.msra.mxu0 %v4321
      %4361 = vmatmul.bf16.gmra.mxu0 %v4254
      %v4362 = vpop.f32.mrf.mxu0
      %v4363 = vadd.f32 0.0, %v4362
      %v4364 = vpop.f32.mrf.mxu0
      %v4365 = vadd.f32 0.0, %v4364
      %4366 = vmatmul.bf16.gmra.mxu0 %v4255
      %v4367 = vpop.f32.mrf.mxu0
      %v4368 = vadd.f32 0.0, %v4367
      %v4369 = vpop.f32.mrf.mxu0
      %v4370 = vadd.f32 0.0, %v4369
      %4371 = vdwg.mxu0
      %4372 = vmatpush.bf16.msra.mxu0 %v4336
      %4373 = vmatpush.bf16.msra.mxu0 %v4334
      %4374 = vmatpush.bf16.msra.mxu0 %v4332
      %4375 = vmatpush.bf16.msra.mxu0 %v4330
      %4376 = vmatpush.bf16.msra.mxu0 %v4328
      %4377 = vmatpush.bf16.msra.mxu0 %v4326
      %4378 = vmatpush.bf16.msra.mxu0 %v4324
      %4379 = vmatpush.bf16.msra.mxu0 %v4322
      %4380 = vmatmul.bf16.gmra.mxu0 %v4254
      %v4381 = vpop.f32.mrf.mxu0
      %v4382 = vadd.f32 0.0, %v4381
      %v4383 = vpop.f32.mrf.mxu0
      %v4384 = vadd.f32 0.0, %v4383
      %4385 = vmatmul.bf16.gmra.mxu0 %v4255
      %v4386 = vpop.f32.mrf.mxu0
      %v4387 = vadd.f32 0.0, %v4386
      %v4388 = vpop.f32.mrf.mxu0
      %v4389 = vadd.f32 0.0, %v4388
      %4390 = vdwg.mxu0
      %v4391 = vadd.f32 %v4206, %v4363
      %v4392 = vadd.f32 %v4207, %v4382
      %v4393 = vadd.f32 %v4208, %v4365
      %v4394 = vadd.f32 %v4209, %v4384
      %v4395 = vadd.f32 %v4210, %v4368
      %v4396 = vadd.f32 %v4211, %v4387
      %v4397 = vadd.f32 %v4212, %v4370
      %v4398 = vadd.f32 %v4213, %v4389
      %s4399 = scalar_lea.vmem %s10, 80
      %v4400 = vld [vmem:[%s4399] sm:$0xf]
      %v4401 = vld [vmem:[%s4399 + $0x4] sm:$0xf]
      %v4402 = vld [vmem:[%s4399 + $0x8] sm:$0xf]
      %v4403 = vld [vmem:[%s4399 + $0xc] sm:$0x1]
      %v4408 = vunpack.c.l.b16 %v4400
      %v4409 = vunpack.c.l.b16 %v4401
      %v4410 = vunpack.c.l.b16 %v4402
      %v4411 = vunpack.c.l.b16 %v4403
      %v4412 = vpack.c.b16 %v4409, %v4408
      %v4413 = vpack.c.b16 %v4411, %v4410
      %v4415 = vsel %vm3498, %v4412, 0
      %v4418 = vsel %vm3498, %v4413, 0
      %4420 = vmatpush.bf16.msra.mxu0 0
      %4421 = vmatpush.bf16.msra.mxu0 0
      %4422 = vmatpush.bf16.msra.mxu0 0
      %4423 = vmatpush.bf16.msra.mxu0 0
      %4424 = vmatpush.bf16.msra.mxu0 0
      %4425 = vmatpush.bf16.msra.mxu0 0
      %4426 = vmatpush.bf16.msra.mxu0 %v3510
      %4427 = vmatpush.bf16.msra.mxu0 %v3482
      %4428 = vmatmul.bf16.gmra.mxu0 %v4415
      %v4429 = vpop.f32.mrf.mxu0
      %v4430 = vadd.f32 0.0, %v4429
      %v4431 = vpop.f32.mrf.mxu0
      %v4432 = vadd.f32 0.0, %v4431
      %4433 = vmatmul.bf16.gmra.mxu0 %v4418
      %v4434 = vpop.f32.mrf.mxu0
      %v4435 = vadd.f32 0.0, %v4434
      %v4436 = vpop.f32.mrf.mxu0
      %v4437 = vadd.f32 0.0, %v4436
      %4438 = vdwg.mxu0
      %v4439 = vpack.c.bf16 %v4432, %v4430
      %v4440 = vpack.c.bf16 %v4437, %v4435
      %s4441 = scalar_lea.vmem %s11, 640
      %v4442 = vld [vmem:[%s4441] sm:$0xff]
      %v4443 = vld [vmem:[%s4441 + $0x8] sm:$0xff]
      %v4444 = vld [vmem:[%s4441 + $0x10] sm:$0xff]
      %v4445 = vld [vmem:[%s4441 + $0x18] sm:$0xff]
      %v4446 = vld [vmem:[%s4441 + $0x20] sm:$0xff]
      %v4447 = vld [vmem:[%s4441 + $0x28] sm:$0xff]
      %v4448 = vld [vmem:[%s4441 + $0x30] sm:$0xff]
      %v4449 = vld [vmem:[%s4441 + $0x38] sm:$0xff]
      %v4450 = vld [vmem:[%s4441 + $0x40] sm:$0xff]
      %v4451 = vld [vmem:[%s4441 + $0x48] sm:$0xff]
      %v4452 = vld [vmem:[%s4441 + $0x50] sm:$0xff]
      %v4453 = vld [vmem:[%s4441 + $0x58] sm:$0xff]
      %v4454 = vld [vmem:[%s4441 + $0x60] sm:$0xff]
      %v4455 = vld [vmem:[%s4441 + $0x68] sm:$0xff]
      %v4456 = vld [vmem:[%s4441 + $0x70] sm:$0xff]
      %v4457 = vld [vmem:[%s4441 + $0x78] sm:$0xff]
      %v4474 = vunpack.c.l.b16 %v4442
      %v4475 = vunpack.c.h.b16 %v4442
      %v4476 = vunpack.c.l.b16 %v4443
      %v4477 = vunpack.c.h.b16 %v4443
      %v4478 = vunpack.c.l.b16 %v4444
      %v4479 = vunpack.c.h.b16 %v4444
      %v4480 = vunpack.c.l.b16 %v4445
      %v4481 = vunpack.c.h.b16 %v4445
      %v4482 = vunpack.c.l.b16 %v4446
      %v4483 = vunpack.c.h.b16 %v4446
      %v4484 = vunpack.c.l.b16 %v4447
      %v4485 = vunpack.c.h.b16 %v4447
      %v4486 = vunpack.c.l.b16 %v4448
      %v4487 = vunpack.c.h.b16 %v4448
      %v4488 = vunpack.c.l.b16 %v4449
      %v4489 = vunpack.c.h.b16 %v4449
      %v4490 = vunpack.c.l.b16 %v4450
      %v4491 = vunpack.c.h.b16 %v4450
      %v4492 = vunpack.c.l.b16 %v4451
      %v4493 = vunpack.c.h.b16 %v4451
      %v4494 = vunpack.c.l.b16 %v4452
      %v4495 = vunpack.c.h.b16 %v4452
      %v4496 = vunpack.c.l.b16 %v4453
      %v4497 = vunpack.c.h.b16 %v4453
      %v4498 = vunpack.c.l.b16 %v4454
      %v4499 = vunpack.c.h.b16 %v4454
      %v4500 = vunpack.c.l.b16 %v4455
      %v4501 = vunpack.c.h.b16 %v4455
      %v4502 = vunpack.c.l.b16 %v4456
      %v4503 = vunpack.c.h.b16 %v4456
      %v4504 = vunpack.c.l.b16 %v4457
      %v4505 = vunpack.c.h.b16 %v4457
      %v4506 = vpack.c.b16 %v4476, %v4474
      %v4507 = vpack.c.b16 %v4477, %v4475
      %v4508 = vpack.c.b16 %v4480, %v4478
      %v4509 = vpack.c.b16 %v4481, %v4479
      %v4510 = vpack.c.b16 %v4484, %v4482
      %v4511 = vpack.c.b16 %v4485, %v4483
      %v4512 = vpack.c.b16 %v4488, %v4486
      %v4513 = vpack.c.b16 %v4489, %v4487
      %v4514 = vpack.c.b16 %v4492, %v4490
      %v4515 = vpack.c.b16 %v4493, %v4491
      %v4516 = vpack.c.b16 %v4496, %v4494
      %v4517 = vpack.c.b16 %v4497, %v4495
      %v4518 = vpack.c.b16 %v4500, %v4498
      %v4519 = vpack.c.b16 %v4501, %v4499
      %v4520 = vpack.c.b16 %v4504, %v4502
      %v4521 = vpack.c.b16 %v4505, %v4503
      %4538 = vmatpush.bf16.msra.mxu0 %v4520
      %4539 = vmatpush.bf16.msra.mxu0 %v4518
      %4540 = vmatpush.bf16.msra.mxu0 %v4516
      %4541 = vmatpush.bf16.msra.mxu0 %v4514
      %4542 = vmatpush.bf16.msra.mxu0 %v4512
      %4543 = vmatpush.bf16.msra.mxu0 %v4510
      %4544 = vmatpush.bf16.msra.mxu0 %v4508
      %4545 = vmatpush.bf16.msra.mxu0 %v4506
      %4546 = vmatmul.bf16.gmra.mxu0 %v4439
      %v4547 = vpop.f32.mrf.mxu0
      %v4548 = vadd.f32 0.0, %v4547
      %v4549 = vpop.f32.mrf.mxu0
      %v4550 = vadd.f32 0.0, %v4549
      %4551 = vmatmul.bf16.gmra.mxu0 %v4440
      %v4552 = vpop.f32.mrf.mxu0
      %v4553 = vadd.f32 0.0, %v4552
      %v4554 = vpop.f32.mrf.mxu0
      %v4555 = vadd.f32 0.0, %v4554
      %4556 = vdwg.mxu0
      %4557 = vmatpush.bf16.msra.mxu0 %v4521
      %4558 = vmatpush.bf16.msra.mxu0 %v4519
      %4559 = vmatpush.bf16.msra.mxu0 %v4517
      %4560 = vmatpush.bf16.msra.mxu0 %v4515
      %4561 = vmatpush.bf16.msra.mxu0 %v4513
      %4562 = vmatpush.bf16.msra.mxu0 %v4511
      %4563 = vmatpush.bf16.msra.mxu0 %v4509
      %4564 = vmatpush.bf16.msra.mxu0 %v4507
      %4565 = vmatmul.bf16.gmra.mxu0 %v4439
      %v4566 = vpop.f32.mrf.mxu0
      %v4567 = vadd.f32 0.0, %v4566
      %v4568 = vpop.f32.mrf.mxu0
      %v4569 = vadd.f32 0.0, %v4568
      %4570 = vmatmul.bf16.gmra.mxu0 %v4440
      %v4571 = vpop.f32.mrf.mxu0
      %v4572 = vadd.f32 0.0, %v4571
      %v4573 = vpop.f32.mrf.mxu0
      %v4574 = vadd.f32 0.0, %v4573
      %4575 = vdwg.mxu0
      %v4576 = vadd.f32 %v4391, %v4548
      %v4577 = vadd.f32 %v4392, %v4567
      %v4578 = vadd.f32 %v4393, %v4550
      %v4579 = vadd.f32 %v4394, %v4569
      %v4580 = vadd.f32 %v4395, %v4553
      %v4581 = vadd.f32 %v4396, %v4572
      %v4582 = vadd.f32 %v4397, %v4555
      %v4583 = vadd.f32 %v4398, %v4574
      %s4584 = scalar_lea.vmem %s10, 96
      %v4585 = vld [vmem:[%s4584] sm:$0xf]
      %v4586 = vld [vmem:[%s4584 + $0x4] sm:$0xf]
      %v4587 = vld [vmem:[%s4584 + $0x8] sm:$0xf]
      %v4588 = vld [vmem:[%s4584 + $0xc] sm:$0x1]
      %v4593 = vunpack.c.l.b16 %v4585
      %v4594 = vunpack.c.l.b16 %v4586
      %v4595 = vunpack.c.l.b16 %v4587
      %v4596 = vunpack.c.l.b16 %v4588
      %v4597 = vpack.c.b16 %v4594, %v4593
      %v4598 = vpack.c.b16 %v4596, %v4595
      %v4600 = vsel %vm3498, %v4597, 0
      %v4603 = vsel %vm3498, %v4598, 0
      %4605 = vmatpush.bf16.msra.mxu0 0
      %4606 = vmatpush.bf16.msra.mxu0 0
      %4607 = vmatpush.bf16.msra.mxu0 0
      %4608 = vmatpush.bf16.msra.mxu0 0
      %4609 = vmatpush.bf16.msra.mxu0 0
      %4610 = vmatpush.bf16.msra.mxu0 0
      %4611 = vmatpush.bf16.msra.mxu0 %v3510
      %4612 = vmatpush.bf16.msra.mxu0 %v3482
      %4613 = vmatmul.bf16.gmra.mxu0 %v4600
      %v4614 = vpop.f32.mrf.mxu0
      %v4615 = vadd.f32 0.0, %v4614
      %v4616 = vpop.f32.mrf.mxu0
      %v4617 = vadd.f32 0.0, %v4616
      %4618 = vmatmul.bf16.gmra.mxu0 %v4603
      %v4619 = vpop.f32.mrf.mxu0
      %v4620 = vadd.f32 0.0, %v4619
      %v4621 = vpop.f32.mrf.mxu0
      %v4622 = vadd.f32 0.0, %v4621
      %4623 = vdwg.mxu0
      %v4624 = vpack.c.bf16 %v4617, %v4615
      %v4625 = vpack.c.bf16 %v4622, %v4620
      %s4626 = scalar_lea.vmem %s11, 768
      %v4627 = vld [vmem:[%s4626] sm:$0xff]
      %v4628 = vld [vmem:[%s4626 + $0x8] sm:$0xff]
      %v4629 = vld [vmem:[%s4626 + $0x10] sm:$0xff]
      %v4630 = vld [vmem:[%s4626 + $0x18] sm:$0xff]
      %v4631 = vld [vmem:[%s4626 + $0x20] sm:$0xff]
      %v4632 = vld [vmem:[%s4626 + $0x28] sm:$0xff]
      %v4633 = vld [vmem:[%s4626 + $0x30] sm:$0xff]
      %v4634 = vld [vmem:[%s4626 + $0x38] sm:$0xff]
      %v4635 = vld [vmem:[%s4626 + $0x40] sm:$0xff]
      %v4636 = vld [vmem:[%s4626 + $0x48] sm:$0xff]
      %v4637 = vld [vmem:[%s4626 + $0x50] sm:$0xff]
      %v4638 = vld [vmem:[%s4626 + $0x58] sm:$0xff]
      %v4639 = vld [vmem:[%s4626 + $0x60] sm:$0xff]
      %v4640 = vld [vmem:[%s4626 + $0x68] sm:$0xff]
      %v4641 = vld [vmem:[%s4626 + $0x70] sm:$0xff]
      %v4642 = vld [vmem:[%s4626 + $0x78] sm:$0xff]
      %v4659 = vunpack.c.l.b16 %v4627
      %v4660 = vunpack.c.h.b16 %v4627
      %v4661 = vunpack.c.l.b16 %v4628
      %v4662 = vunpack.c.h.b16 %v4628
      %v4663 = vunpack.c.l.b16 %v4629
      %v4664 = vunpack.c.h.b16 %v4629
      %v4665 = vunpack.c.l.b16 %v4630
      %v4666 = vunpack.c.h.b16 %v4630
      %v4667 = vunpack.c.l.b16 %v4631
      %v4668 = vunpack.c.h.b16 %v4631
      %v4669 = vunpack.c.l.b16 %v4632
      %v4670 = vunpack.c.h.b16 %v4632
      %v4671 = vunpack.c.l.b16 %v4633
      %v4672 = vunpack.c.h.b16 %v4633
      %v4673 = vunpack.c.l.b16 %v4634
      %v4674 = vunpack.c.h.b16 %v4634
      %v4675 = vunpack.c.l.b16 %v4635
      %v4676 = vunpack.c.h.b16 %v4635
      %v4677 = vunpack.c.l.b16 %v4636
      %v4678 = vunpack.c.h.b16 %v4636
      %v4679 = vunpack.c.l.b16 %v4637
      %v4680 = vunpack.c.h.b16 %v4637
      %v4681 = vunpack.c.l.b16 %v4638
      %v4682 = vunpack.c.h.b16 %v4638
      %v4683 = vunpack.c.l.b16 %v4639
      %v4684 = vunpack.c.h.b16 %v4639
      %v4685 = vunpack.c.l.b16 %v4640
      %v4686 = vunpack.c.h.b16 %v4640
      %v4687 = vunpack.c.l.b16 %v4641
      %v4688 = vunpack.c.h.b16 %v4641
      %v4689 = vunpack.c.l.b16 %v4642
      %v4690 = vunpack.c.h.b16 %v4642
      %v4691 = vpack.c.b16 %v4661, %v4659
      %v4692 = vpack.c.b16 %v4662, %v4660
      %v4693 = vpack.c.b16 %v4665, %v4663
      %v4694 = vpack.c.b16 %v4666, %v4664
      %v4695 = vpack.c.b16 %v4669, %v4667
      %v4696 = vpack.c.b16 %v4670, %v4668
      %v4697 = vpack.c.b16 %v4673, %v4671
      %v4698 = vpack.c.b16 %v4674, %v4672
      %v4699 = vpack.c.b16 %v4677, %v4675
      %v4700 = vpack.c.b16 %v4678, %v4676
      %v4701 = vpack.c.b16 %v4681, %v4679
      %v4702 = vpack.c.b16 %v4682, %v4680
      %v4703 = vpack.c.b16 %v4685, %v4683
      %v4704 = vpack.c.b16 %v4686, %v4684
      %v4705 = vpack.c.b16 %v4689, %v4687
      %v4706 = vpack.c.b16 %v4690, %v4688
      %4723 = vmatpush.bf16.msra.mxu0 %v4705
      %4724 = vmatpush.bf16.msra.mxu0 %v4703
      %4725 = vmatpush.bf16.msra.mxu0 %v4701
      %4726 = vmatpush.bf16.msra.mxu0 %v4699
      %4727 = vmatpush.bf16.msra.mxu0 %v4697
      %4728 = vmatpush.bf16.msra.mxu0 %v4695
      %4729 = vmatpush.bf16.msra.mxu0 %v4693
      %4730 = vmatpush.bf16.msra.mxu0 %v4691
      %4731 = vmatmul.bf16.gmra.mxu0 %v4624
      %v4732 = vpop.f32.mrf.mxu0
      %v4733 = vadd.f32 0.0, %v4732
      %v4734 = vpop.f32.mrf.mxu0
      %v4735 = vadd.f32 0.0, %v4734
      %4736 = vmatmul.bf16.gmra.mxu0 %v4625
      %v4737 = vpop.f32.mrf.mxu0
      %v4738 = vadd.f32 0.0, %v4737
      %v4739 = vpop.f32.mrf.mxu0
      %v4740 = vadd.f32 0.0, %v4739
      %4741 = vdwg.mxu0
      %4742 = vmatpush.bf16.msra.mxu0 %v4706
      %4743 = vmatpush.bf16.msra.mxu0 %v4704
      %4744 = vmatpush.bf16.msra.mxu0 %v4702
      %4745 = vmatpush.bf16.msra.mxu0 %v4700
      %4746 = vmatpush.bf16.msra.mxu0 %v4698
      %4747 = vmatpush.bf16.msra.mxu0 %v4696
      %4748 = vmatpush.bf16.msra.mxu0 %v4694
      %4749 = vmatpush.bf16.msra.mxu0 %v4692
      %4750 = vmatmul.bf16.gmra.mxu0 %v4624
      %v4751 = vpop.f32.mrf.mxu0
      %v4752 = vadd.f32 0.0, %v4751
      %v4753 = vpop.f32.mrf.mxu0
      %v4754 = vadd.f32 0.0, %v4753
      %4755 = vmatmul.bf16.gmra.mxu0 %v4625
      %v4756 = vpop.f32.mrf.mxu0
      %v4757 = vadd.f32 0.0, %v4756
      %v4758 = vpop.f32.mrf.mxu0
      %v4759 = vadd.f32 0.0, %v4758
      %4760 = vdwg.mxu0
      %v4761 = vadd.f32 %v4576, %v4733
      %v4762 = vadd.f32 %v4577, %v4752
      %v4763 = vadd.f32 %v4578, %v4735
      %v4764 = vadd.f32 %v4579, %v4754
      %v4765 = vadd.f32 %v4580, %v4738
      %v4766 = vadd.f32 %v4581, %v4757
      %v4767 = vadd.f32 %v4582, %v4740
      %v4768 = vadd.f32 %v4583, %v4759
      %s4769 = scalar_lea.vmem %s10, 112
      %v4770 = vld [vmem:[%s4769] sm:$0xf]
      %v4771 = vld [vmem:[%s4769 + $0x4] sm:$0xf]
      %v4772 = vld [vmem:[%s4769 + $0x8] sm:$0xf]
      %v4773 = vld [vmem:[%s4769 + $0xc] sm:$0x1]
      %v4778 = vunpack.c.l.b16 %v4770
      %v4779 = vunpack.c.l.b16 %v4771
      %v4780 = vunpack.c.l.b16 %v4772
      %v4781 = vunpack.c.l.b16 %v4773
      %v4782 = vpack.c.b16 %v4779, %v4778
      %v4783 = vpack.c.b16 %v4781, %v4780
      %v4785 = vsel %vm3498, %v4782, 0
      %v4788 = vsel %vm3498, %v4783, 0
      %4790 = vmatpush.bf16.msra.mxu0 0
      %4791 = vmatpush.bf16.msra.mxu0 0
      %4792 = vmatpush.bf16.msra.mxu0 0
      %4793 = vmatpush.bf16.msra.mxu0 0
      %4794 = vmatpush.bf16.msra.mxu0 0
      %4795 = vmatpush.bf16.msra.mxu0 0
      %4796 = vmatpush.bf16.msra.mxu0 %v3510
      %4797 = vmatpush.bf16.msra.mxu0 %v3482
      %4798 = vmatmul.bf16.gmra.mxu0 %v4785
      %v4799 = vpop.f32.mrf.mxu0
      %v4800 = vadd.f32 0.0, %v4799
      %v4801 = vpop.f32.mrf.mxu0
      %v4802 = vadd.f32 0.0, %v4801
      %4803 = vmatmul.bf16.gmra.mxu0 %v4788
      %v4804 = vpop.f32.mrf.mxu0
      %v4805 = vadd.f32 0.0, %v4804
      %v4806 = vpop.f32.mrf.mxu0
      %v4807 = vadd.f32 0.0, %v4806
      %4808 = vdwg.mxu0
      %v4809 = vpack.c.bf16 %v4802, %v4800
      %v4810 = vpack.c.bf16 %v4807, %v4805
      %s4811 = scalar_lea.vmem %s11, 896
      %v4812 = vld [vmem:[%s4811] sm:$0xff]
      %v4813 = vld [vmem:[%s4811 + $0x8] sm:$0xff]
      %v4814 = vld [vmem:[%s4811 + $0x10] sm:$0xff]
      %v4815 = vld [vmem:[%s4811 + $0x18] sm:$0xff]
      %v4816 = vld [vmem:[%s4811 + $0x20] sm:$0xff]
      %v4817 = vld [vmem:[%s4811 + $0x28] sm:$0xff]
      %v4818 = vld [vmem:[%s4811 + $0x30] sm:$0xff]
      %v4819 = vld [vmem:[%s4811 + $0x38] sm:$0xff]
      %v4820 = vld [vmem:[%s4811 + $0x40] sm:$0xff]
      %v4821 = vld [vmem:[%s4811 + $0x48] sm:$0xff]
      %v4822 = vld [vmem:[%s4811 + $0x50] sm:$0xff]
      %v4823 = vld [vmem:[%s4811 + $0x58] sm:$0xff]
      %v4824 = vld [vmem:[%s4811 + $0x60] sm:$0xff]
      %v4825 = vld [vmem:[%s4811 + $0x68] sm:$0xff]
      %v4826 = vld [vmem:[%s4811 + $0x70] sm:$0xff]
      %v4827 = vld [vmem:[%s4811 + $0x78] sm:$0xff]
      %v4844 = vunpack.c.l.b16 %v4812
      %v4845 = vunpack.c.h.b16 %v4812
      %v4846 = vunpack.c.l.b16 %v4813
      %v4847 = vunpack.c.h.b16 %v4813
      %v4848 = vunpack.c.l.b16 %v4814
      %v4849 = vunpack.c.h.b16 %v4814
      %v4850 = vunpack.c.l.b16 %v4815
      %v4851 = vunpack.c.h.b16 %v4815
      %v4852 = vunpack.c.l.b16 %v4816
      %v4853 = vunpack.c.h.b16 %v4816
      %v4854 = vunpack.c.l.b16 %v4817
      %v4855 = vunpack.c.h.b16 %v4817
      %v4856 = vunpack.c.l.b16 %v4818
      %v4857 = vunpack.c.h.b16 %v4818
      %v4858 = vunpack.c.l.b16 %v4819
      %v4859 = vunpack.c.h.b16 %v4819
      %v4860 = vunpack.c.l.b16 %v4820
      %v4861 = vunpack.c.h.b16 %v4820
      %v4862 = vunpack.c.l.b16 %v4821
      %v4863 = vunpack.c.h.b16 %v4821
      %v4864 = vunpack.c.l.b16 %v4822
      %v4865 = vunpack.c.h.b16 %v4822
      %v4866 = vunpack.c.l.b16 %v4823
      %v4867 = vunpack.c.h.b16 %v4823
      %v4868 = vunpack.c.l.b16 %v4824
      %v4869 = vunpack.c.h.b16 %v4824
      %v4870 = vunpack.c.l.b16 %v4825
      %v4871 = vunpack.c.h.b16 %v4825
      %v4872 = vunpack.c.l.b16 %v4826
      %v4873 = vunpack.c.h.b16 %v4826
      %v4874 = vunpack.c.l.b16 %v4827
      %v4875 = vunpack.c.h.b16 %v4827
      %v4876 = vpack.c.b16 %v4846, %v4844
      %v4877 = vpack.c.b16 %v4847, %v4845
      %v4878 = vpack.c.b16 %v4850, %v4848
      %v4879 = vpack.c.b16 %v4851, %v4849
      %v4880 = vpack.c.b16 %v4854, %v4852
      %v4881 = vpack.c.b16 %v4855, %v4853
      %v4882 = vpack.c.b16 %v4858, %v4856
      %v4883 = vpack.c.b16 %v4859, %v4857
      %v4884 = vpack.c.b16 %v4862, %v4860
      %v4885 = vpack.c.b16 %v4863, %v4861
      %v4886 = vpack.c.b16 %v4866, %v4864
      %v4887 = vpack.c.b16 %v4867, %v4865
      %v4888 = vpack.c.b16 %v4870, %v4868
      %v4889 = vpack.c.b16 %v4871, %v4869
      %v4890 = vpack.c.b16 %v4874, %v4872
      %v4891 = vpack.c.b16 %v4875, %v4873
      %4908 = vmatpush.bf16.msra.mxu0 %v4890
      %4909 = vmatpush.bf16.msra.mxu0 %v4888
      %4910 = vmatpush.bf16.msra.mxu0 %v4886
      %4911 = vmatpush.bf16.msra.mxu0 %v4884
      %4912 = vmatpush.bf16.msra.mxu0 %v4882
      %4913 = vmatpush.bf16.msra.mxu0 %v4880
      %4914 = vmatpush.bf16.msra.mxu0 %v4878
      %4915 = vmatpush.bf16.msra.mxu0 %v4876
      %4916 = vmatmul.bf16.gmra.mxu0 %v4809
      %v4917 = vpop.f32.mrf.mxu0
      %v4918 = vadd.f32 0.0, %v4917
      %v4919 = vpop.f32.mrf.mxu0
      %v4920 = vadd.f32 0.0, %v4919
      %4921 = vmatmul.bf16.gmra.mxu0 %v4810
      %v4922 = vpop.f32.mrf.mxu0
      %v4923 = vadd.f32 0.0, %v4922
      %v4924 = vpop.f32.mrf.mxu0
      %v4925 = vadd.f32 0.0, %v4924
      %4926 = vdwg.mxu0
      %4927 = vmatpush.bf16.msra.mxu0 %v4891
      %4928 = vmatpush.bf16.msra.mxu0 %v4889
      %4929 = vmatpush.bf16.msra.mxu0 %v4887
      %4930 = vmatpush.bf16.msra.mxu0 %v4885
      %4931 = vmatpush.bf16.msra.mxu0 %v4883
      %4932 = vmatpush.bf16.msra.mxu0 %v4881
      %4933 = vmatpush.bf16.msra.mxu0 %v4879
      %4934 = vmatpush.bf16.msra.mxu0 %v4877
      %4935 = vmatmul.bf16.gmra.mxu0 %v4809
      %v4936 = vpop.f32.mrf.mxu0
      %v4937 = vadd.f32 0.0, %v4936
      %v4938 = vpop.f32.mrf.mxu0
      %v4939 = vadd.f32 0.0, %v4938
      %4940 = vmatmul.bf16.gmra.mxu0 %v4810
      %v4941 = vpop.f32.mrf.mxu0
      %v4942 = vadd.f32 0.0, %v4941
      %v4943 = vpop.f32.mrf.mxu0
      %v4944 = vadd.f32 0.0, %v4943
      %4945 = vdwg.mxu0
      %v4946 = vadd.f32 %v4761, %v4918
      %v4947 = vadd.f32 %v4762, %v4937
      %v4948 = vadd.f32 %v4763, %v4920
      %v4949 = vadd.f32 %v4764, %v4939
      %v4950 = vadd.f32 %v4765, %v4923
      %v4951 = vadd.f32 %v4766, %v4942
      %v4952 = vadd.f32 %v4767, %v4925
      %v4953 = vadd.f32 %v4768, %v4944
      %s4954 = scalar_lea.vmem %s10, 128
      %v4955 = vld [vmem:[%s4954] sm:$0xf]
      %v4956 = vld [vmem:[%s4954 + $0x4] sm:$0xf]
      %v4957 = vld [vmem:[%s4954 + $0x8] sm:$0xf]
      %v4958 = vld [vmem:[%s4954 + $0xc] sm:$0x1]
      %v4963 = vunpack.c.l.b16 %v4955
      %v4964 = vunpack.c.l.b16 %v4956
      %v4965 = vunpack.c.l.b16 %v4957
      %v4966 = vunpack.c.l.b16 %v4958
      %v4967 = vpack.c.b16 %v4964, %v4963
      %v4968 = vpack.c.b16 %v4966, %v4965
      %v4970 = vsel %vm3498, %v4967, 0
      %v4973 = vsel %vm3498, %v4968, 0
      %4975 = vmatpush.bf16.msra.mxu0 0
      %4976 = vmatpush.bf16.msra.mxu0 0
      %4977 = vmatpush.bf16.msra.mxu0 0
      %4978 = vmatpush.bf16.msra.mxu0 0
      %4979 = vmatpush.bf16.msra.mxu0 0
      %4980 = vmatpush.bf16.msra.mxu0 0
      %4981 = vmatpush.bf16.msra.mxu0 %v3510
      %4982 = vmatpush.bf16.msra.mxu0 %v3482
      %4983 = vmatmul.bf16.gmra.mxu0 %v4970
      %v4984 = vpop.f32.mrf.mxu0
      %v4985 = vadd.f32 0.0, %v4984
      %v4986 = vpop.f32.mrf.mxu0
      %v4987 = vadd.f32 0.0, %v4986
      %4988 = vmatmul.bf16.gmra.mxu0 %v4973
      %v4989 = vpop.f32.mrf.mxu0
      %v4990 = vadd.f32 0.0, %v4989
      %v4991 = vpop.f32.mrf.mxu0
      %v4992 = vadd.f32 0.0, %v4991
      %4993 = vdwg.mxu0
      %v4994 = vpack.c.bf16 %v4987, %v4985
      %v4995 = vpack.c.bf16 %v4992, %v4990
      %s4996 = scalar_lea.vmem %s11, 1024
      %v4997 = vld [vmem:[%s4996] sm:$0xff]
      %v4998 = vld [vmem:[%s4996 + $0x8] sm:$0xff]
      %v4999 = vld [vmem:[%s4996 + $0x10] sm:$0xff]
      %v5000 = vld [vmem:[%s4996 + $0x18] sm:$0xff]
      %v5001 = vld [vmem:[%s4996 + $0x20] sm:$0xff]
      %v5002 = vld [vmem:[%s4996 + $0x28] sm:$0xff]
      %v5003 = vld [vmem:[%s4996 + $0x30] sm:$0xff]
      %v5004 = vld [vmem:[%s4996 + $0x38] sm:$0xff]
      %v5005 = vld [vmem:[%s4996 + $0x40] sm:$0xff]
      %v5006 = vld [vmem:[%s4996 + $0x48] sm:$0xff]
      %v5007 = vld [vmem:[%s4996 + $0x50] sm:$0xff]
      %v5008 = vld [vmem:[%s4996 + $0x58] sm:$0xff]
      %v5009 = vld [vmem:[%s4996 + $0x60] sm:$0xff]
      %v5010 = vld [vmem:[%s4996 + $0x68] sm:$0xff]
      %v5011 = vld [vmem:[%s4996 + $0x70] sm:$0xff]
      %v5012 = vld [vmem:[%s4996 + $0x78] sm:$0xff]
      %v5029 = vunpack.c.l.b16 %v4997
      %v5030 = vunpack.c.h.b16 %v4997
      %v5031 = vunpack.c.l.b16 %v4998
      %v5032 = vunpack.c.h.b16 %v4998
      %v5033 = vunpack.c.l.b16 %v4999
      %v5034 = vunpack.c.h.b16 %v4999
      %v5035 = vunpack.c.l.b16 %v5000
      %v5036 = vunpack.c.h.b16 %v5000
      %v5037 = vunpack.c.l.b16 %v5001
      %v5038 = vunpack.c.h.b16 %v5001
      %v5039 = vunpack.c.l.b16 %v5002
      %v5040 = vunpack.c.h.b16 %v5002
      %v5041 = vunpack.c.l.b16 %v5003
      %v5042 = vunpack.c.h.b16 %v5003
      %v5043 = vunpack.c.l.b16 %v5004
      %v5044 = vunpack.c.h.b16 %v5004
      %v5045 = vunpack.c.l.b16 %v5005
      %v5046 = vunpack.c.h.b16 %v5005
      %v5047 = vunpack.c.l.b16 %v5006
      %v5048 = vunpack.c.h.b16 %v5006
      %v5049 = vunpack.c.l.b16 %v5007
      %v5050 = vunpack.c.h.b16 %v5007
      %v5051 = vunpack.c.l.b16 %v5008
      %v5052 = vunpack.c.h.b16 %v5008
      %v5053 = vunpack.c.l.b16 %v5009
      %v5054 = vunpack.c.h.b16 %v5009
      %v5055 = vunpack.c.l.b16 %v5010
      %v5056 = vunpack.c.h.b16 %v5010
      %v5057 = vunpack.c.l.b16 %v5011
      %v5058 = vunpack.c.h.b16 %v5011
      %v5059 = vunpack.c.l.b16 %v5012
      %v5060 = vunpack.c.h.b16 %v5012
      %v5061 = vpack.c.b16 %v5031, %v5029
      %v5062 = vpack.c.b16 %v5032, %v5030
      %v5063 = vpack.c.b16 %v5035, %v5033
      %v5064 = vpack.c.b16 %v5036, %v5034
      %v5065 = vpack.c.b16 %v5039, %v5037
      %v5066 = vpack.c.b16 %v5040, %v5038
      %v5067 = vpack.c.b16 %v5043, %v5041
      %v5068 = vpack.c.b16 %v5044, %v5042
      %v5069 = vpack.c.b16 %v5047, %v5045
      %v5070 = vpack.c.b16 %v5048, %v5046
      %v5071 = vpack.c.b16 %v5051, %v5049
      %v5072 = vpack.c.b16 %v5052, %v5050
      %v5073 = vpack.c.b16 %v5055, %v5053
      %v5074 = vpack.c.b16 %v5056, %v5054
      %v5075 = vpack.c.b16 %v5059, %v5057
      %v5076 = vpack.c.b16 %v5060, %v5058
      %5093 = vmatpush.bf16.msra.mxu0 %v5075
      %5094 = vmatpush.bf16.msra.mxu0 %v5073
      %5095 = vmatpush.bf16.msra.mxu0 %v5071
      %5096 = vmatpush.bf16.msra.mxu0 %v5069
      %5097 = vmatpush.bf16.msra.mxu0 %v5067
      %5098 = vmatpush.bf16.msra.mxu0 %v5065
      %5099 = vmatpush.bf16.msra.mxu0 %v5063
      %5100 = vmatpush.bf16.msra.mxu0 %v5061
      %5101 = vmatmul.bf16.gmra.mxu0 %v4994
      %v5102 = vpop.f32.mrf.mxu0
      %v5103 = vadd.f32 0.0, %v5102
      %v5104 = vpop.f32.mrf.mxu0
      %v5105 = vadd.f32 0.0, %v5104
      %5106 = vmatmul.bf16.gmra.mxu0 %v4995
      %v5107 = vpop.f32.mrf.mxu0
      %v5108 = vadd.f32 0.0, %v5107
      %v5109 = vpop.f32.mrf.mxu0
      %v5110 = vadd.f32 0.0, %v5109
      %5111 = vdwg.mxu0
      %5112 = vmatpush.bf16.msra.mxu0 %v5076
      %5113 = vmatpush.bf16.msra.mxu0 %v5074
      %5114 = vmatpush.bf16.msra.mxu0 %v5072
      %5115 = vmatpush.bf16.msra.mxu0 %v5070
      %5116 = vmatpush.bf16.msra.mxu0 %v5068
      %5117 = vmatpush.bf16.msra.mxu0 %v5066
      %5118 = vmatpush.bf16.msra.mxu0 %v5064
      %5119 = vmatpush.bf16.msra.mxu0 %v5062
      %5120 = vmatmul.bf16.gmra.mxu0 %v4994
      %v5121 = vpop.f32.mrf.mxu0
      %v5122 = vadd.f32 0.0, %v5121
      %v5123 = vpop.f32.mrf.mxu0
      %v5124 = vadd.f32 0.0, %v5123
      %5125 = vmatmul.bf16.gmra.mxu0 %v4995
      %v5126 = vpop.f32.mrf.mxu0
      %v5127 = vadd.f32 0.0, %v5126
      %v5128 = vpop.f32.mrf.mxu0
      %v5129 = vadd.f32 0.0, %v5128
      %5130 = vdwg.mxu0
      %v5131 = vadd.f32 %v4946, %v5103
      %v5132 = vadd.f32 %v4947, %v5122
      %v5133 = vadd.f32 %v4948, %v5105
      %v5134 = vadd.f32 %v4949, %v5124
      %v5135 = vadd.f32 %v4950, %v5108
      %v5136 = vadd.f32 %v4951, %v5127
      %v5137 = vadd.f32 %v4952, %v5110
      %v5138 = vadd.f32 %v4953, %v5129
      %v5139 = vld [vmem:[%s12] sm:$0x3]
      %v5141 = vperm.slane %v5139, 0
      %v5142 = vperm.slane %v5139, 1
      %v5145 = vadd.f32 %v5131, %v5141
      %v5146 = vadd.f32 %v5132, %v5142
      %v5147 = vadd.f32 %v5133, %v5141
      %v5148 = vadd.f32 %v5134, %v5142
      %v5149 = vadd.f32 %v5135, %v5141
      %v5150 = vadd.f32 %v5136, %v5142
      %v5151 = vadd.f32 %v5137, %v5141
      %v5152 = vadd.f32 %v5138, %v5142
      %vm5153 = vcmp.ge.f32.partialorder %v5145, 0.0
      %vm5154 = vcmp.ge.f32.partialorder %v5146, 0.0
      %vm5155 = vcmp.ge.f32.partialorder %v5147, 0.0
      %vm5156 = vcmp.ge.f32.partialorder %v5148, 0.0
      %vm5157 = vcmp.ge.f32.partialorder %v5149, 0.0
      %vm5158 = vcmp.ge.f32.partialorder %v5150, 0.0
      %vm5159 = vcmp.ge.f32.partialorder %v5151, 0.0
      %vm5160 = vcmp.ge.f32.partialorder %v5152, 0.0
      %v5161 = vmul.f32 %v5145, 0.25
      %v5162 = vmul.f32 %v5146, 0.25
      %v5163 = vmul.f32 %v5147, 0.25
      %v5164 = vmul.f32 %v5148, 0.25
      %v5165 = vmul.f32 %v5149, 0.25
      %v5166 = vmul.f32 %v5150, 0.25
      %v5167 = vmul.f32 %v5151, 0.25
      %v5168 = vmul.f32 %v5152, 0.25
      %v5169 = vsel %vm5153, %v5145, %v5161
      %v5170 = vsel %vm5154, %v5146, %v5162
      %v5171 = vsel %vm5155, %v5147, %v5163
      %v5172 = vsel %vm5156, %v5148, %v5164
      %v5173 = vsel %vm5157, %v5149, %v5165
      %v5174 = vsel %vm5158, %v5150, %v5166
      %v5175 = vsel %vm5159, %v5151, %v5167
      %v5176 = vsel %vm5160, %v5152, %v5168
      %v5177 = vld [vmem:[%s13] sm:$0xff]
      %v5178 = vld [vmem:[%s13 + $0x8] sm:$0xff]
      %v5179 = vld [vmem:[%s13 + $0x10] sm:$0xff]
      %v5180 = vld [vmem:[%s13 + $0x18] sm:$0xff]
      %v5181 = vld [vmem:[%s13 + $0x20] sm:$0xff]
      %v5182 = vld [vmem:[%s13 + $0x28] sm:$0xff]
      %v5183 = vld [vmem:[%s13 + $0x30] sm:$0x1]
      %v5184 = vld [vmem:[%s13 + $0x38] sm:$0x1]
      %v5185 = vmul.f32 %v5169, %v5177
      %v5186 = vmul.f32 %v5170, %v5178
      %v5187 = vmul.f32 %v5171, %v5179
      %v5188 = vmul.f32 %v5172, %v5180
      %v5189 = vmul.f32 %v5173, %v5181
      %v5190 = vmul.f32 %v5174, %v5182
      %v5191 = vmul.f32 %v5175, %v5183
      %v5192 = vmul.f32 %v5176, %v5184
      %v5193 = vadd.f32 %v5185, %v5186
      %5194 = vadd.xlane.f32.xlu0 %v5193
      %v5195 = vpop.xlane.xlu0 %5194
      %v5196 = vadd.f32 %v5187, %v5188
      %5197 = vadd.xlane.f32.xlu0 %v5196
      %v5198 = vpop.xlane.xlu0 %5197
      %v5199 = vadd.f32 %v5189, %v5190
      %5200 = vadd.xlane.f32.xlu0 %v5199
      %v5201 = vpop.xlane.xlu0 %5200
      %vm5202 = vcmask 1040384
      %v5203 = vsel %vm5202, %v5191, 0.0
      %v5204 = vsel %vm5202, %v5192, 0.0
      %v5205 = vadd.f32 %v5203, %v5204
      %5206 = vadd.xlane.f32.xlu0 %v5205
      %v5207 = vpop.xlane.xlu0 %5206
      %v5208 = vadd.f32 %v5195, %v5198
      %v5209 = vadd.f32 %v5208, %v5201
      %v5210 = vsel %vm5202, %v5207, 0.0
      %v5211 = vadd.f32 %v5209, %v5210
      %v5212 = vrot.slane %v5211, 4
      %v5213 = vadd.f32 %v5211, %v5212
      %v5214 = vrot.slane %v5213, 2
      %v5215 = vadd.f32 %v5213, %v5214
      %v5216 = vrot.slane %v5215, 1
      %v5217 = vadd.f32 %v5215, %v5216
      %v5218 = vld [vmem:[#allocation2] sm:$0x1]
      %v5219 = vadd.f32 %v5217, %v5218
      %v5220 = vand.u32 2147483647, %v5219
      %v5221 = vsub.f32 0.0, %v5220
      %v5222 = vmul.f32 %v5221, 1.442695
      %v5223 = vpow.pop %v5222
      %vm5224 = vcmp.ge.f32.partialorder %v5219, 0.0
      %v5225 = vadd.f32 %v5223, 1.0
      %v5226 = vrcp.pop %v5225
      %v5227 = vmul.f32 %v5225, %v5226
      %v5228 = vsub.f32 1.0, %v5227
      %v5229 = vmul.f32 %v5226, %v5228
      %v5230 = vadd.f32 %v5226, %v5229
      %vm5231 = vweird.f32 %v5225
      %vm5232 = vweird.f32 %v5226
      %vm5233 = vmor %vm5231, %vm5232
      %v5234 = vsel %vm5233, %v5226, %v5230
      %v5235 = vand.u32 2147483647, %v5225
      %vm5236 = vcmp.eq.f32.partialorder %v5235, 8.507059e+37
      %v5237 = vand.u32 %v5225, 2147483648
      %v5238 = vor.u32 1.1754944e-38, %v5237
      %v5239 = vsel %vm5236, %v5238, %v5234
      %v5240 = vmul.f32 1.0, %v5239
      %v5241 = vmul.f32 %v5223, %v5239
      %v5242 = vsel %vm5224, %v5240, %v5241
      %vm5243 = vcmask 0
      %5244 = vst.msk [vmem:[%s492] sm:$0x1] %vm5243, %v5242
      %p5245 = scmp.lt.s32.totalorder %s28, 1
      %s5246 = scalar_select %p5245, %s28, 1
      %s5247 = scalar_lea.vmem %s15, %s5246
      // Predicated region
      $region81: #{discriminator_forward.1} parent=79 // pred_check
        %p5248 = pneg %p366
      $region82: #{discriminator_forward.1} parent=79 // pred_check_branch
        %5250 = sbr.rel (%p5248) target = $region84
      $region83: #{discriminator_forward.1} parent=79 // pred_region
        _
      $region84: #{discriminator_forward.1} parent=79 // pred_fallthru
        _
    $region80: #{discriminator_forward.1} parent=5 // pred_fallthru
      _
    %p5251 = scmp.le.s32.totalorder 2, %s23
    // Predicated region
    $region85: #{discriminator_forward.1} parent=5 // pred_check
      %p5252 = pneg %p5251
    $region86: #{discriminator_forward.1} parent=5 // pred_check_branch
      %5254 = sbr.rel (%p5252) target = $region88
    $region87: #{discriminator_forward.1} parent=5 // pred_region
      %s5255 = ssub.s32 %s23, 2
      // Predicated region
      $region89: #{discriminator_forward.1} parent=87 // pred_check
        %p5256 = pneg %p372
      $region90: #{discriminator_forward.1} parent=87 // pred_check_branch
        %5258 = sbr.rel (%p5256) target = $region92
      $region91: #{discriminator_forward.1} parent=87 // pred_region
        %p5259 = scmp.lt.s32.totalorder %s29, 1
        %s5260 = scalar_select %p5259, %s29, 1
        %s5261 = scalar_lea.vmem %s15, %s5260
      $region92: #{discriminator_forward.1} parent=87 // pred_fallthru
        _
    $region88: #{discriminator_forward.1} parent=5 // pred_fallthru
      _
  $region6: #{discriminator_forward.1} parent=0 // loop_footer
    %s27 = sadd.s32 1, %s23
  $region7: #{discriminator_forward.1} parent=0 // loop_footer_branch
    %22 = sbr.rel target = $region3
  $region8: #{discriminator_forward.1} parent=0 // loop_exit
    _

</llo_original>
